<compile_context>
chip_gen: v5e
topology: v5e:2x2
jax: 0.10.0
libtpu: 0.0.40
codegen_flags: <defaults>
</compile_context>

<pallas_src>
import functools

import jax
import jax.numpy as jnp
from jax.experimental import pallas as pl
from jax.experimental.pallas import tpu as pltpu  # noqa: F401

EPS = 1e-5    # PyTorch BatchNorm2d default eps
LANE = 128    # TPU lane width
SUBLANE = 8


def _round_up(n, m):
    return ((n + m - 1) // m) * m


# ----------------------------- Pallas kernels -----------------------------

def _batch_stats(y, m_valid):
    """Per-channel batch mean / biased variance over the first m_valid rows."""
    mp = y.shape[0]
    if m_valid == mp:
        mean = jnp.mean(y, axis=0, keepdims=True)
        var = jnp.mean((y - mean) ** 2, axis=0, keepdims=True)
    else:
        # Only used if M ever needs padding to a sublane multiple.
        rows = jax.lax.broadcasted_iota(jnp.int32, y.shape, 0)
        mask = (rows < m_valid).astype(jnp.float32)
        inv = 1.0 / float(m_valid)
        mean = jnp.sum(y * mask, axis=0, keepdims=True) * inv
        var = jnp.sum(((y - mean) ** 2) * mask, axis=0, keepdims=True) * inv
    return mean, var


def _conv_bn_kernel(x_ref, w_ref, b_ref, g_ref, be_ref, o_ref, *, relu, m_valid):
    """out = [ReLU] BatchNorm(x @ w + b).  x:[Mp,Kp] w:[Kp,Np] b/g/be:[1,Np]."""
    y = jnp.dot(x_ref[...], w_ref[...], preferred_element_type=jnp.float32)
    y = y + b_ref[...]
    mean, var = _batch_stats(y, m_valid)
    y = (y - mean) * jax.lax.rsqrt(var + EPS) * g_ref[...] + be_ref[...]
    if relu:
        y = jnp.maximum(y, 0.0)
    o_ref[...] = y.astype(o_ref.dtype)


def _conv_bn_res_kernel(x_ref, w_ref, b_ref, g_ref, be_ref, res_ref, o_ref, *, m_valid):
    """out = residual + BatchNorm(x @ w + b)   (tail of a NeuralnetBLock)."""
    y = jnp.dot(x_ref[...], w_ref[...], preferred_element_type=jnp.float32)
    y = y + b_ref[...]
    mean, var = _batch_stats(y, m_valid)
    y = (y - mean) * jax.lax.rsqrt(var + EPS) * g_ref[...] + be_ref[...]
    o_ref[...] = (res_ref[...] + y).astype(o_ref.dtype)


def _conv_act_kernel(x_ref, w_ref, b_ref, o_ref, *, act):
    """out = act(x @ w + b)  (no BN; final 7x7 conv with fused tanh)."""
    y = jnp.dot(x_ref[...], w_ref[...], preferred_element_type=jnp.float32)
    y = y + b_ref[...]
    if act == "tanh":
        y = jnp.tanh(y)
    o_ref[...] = y.astype(o_ref.dtype)


# ----------------------------- fused layer wrappers -----------------------------

def fused_conv2d(x_nhwc, w_oihw, bias, *, stride=1, padding=0,
                 gamma=None, beta=None, relu=False, residual=None, act=None):
    """nn.Conv2d (cross-correlation) fused with bias + (BatchNorm [+ReLU] |
    BatchNorm + residual | activation), as a single, single-block pallas_call.

    Layout: im2col patches [M, Kp] @ weight [Kp, Np] with Kp, Np padded to
    multiples of 128 so both the MXU contraction and the output stores are
    lane-dense.  M = N*Ho*Wo fits in one VMEM block at these sizes, which is
    also required for correct full-batch BN statistics.
    """
    N, H, W, Cin = x_nhwc.shape
    Cout, _, KH, KW = w_oihw.shape
    Ho = (H + 2 * padding - KH) // stride + 1
    Wo = (W + 2 * padding - KW) // stride + 1
    M = N * Ho * Wo
    Mp = _round_up(M, SUBLANE)
    K = KH * KW * Cin
    Kp = _round_up(K, LANE)
    Np = _round_up(Cout, LANE)

    # --- XLA glue: patch extraction (K padded via an extra zero "tap") ---
    xp = jnp.pad(x_nhwc, ((0, 0), (padding, padding), (padding, padding), (0, 0)))
    cols = []
    for kh in range(KH):
        for kw in range(KW):
            cols.append(
                xp[:, kh:kh + stride * (Ho - 1) + 1:stride,
                      kw:kw + stride * (Wo - 1) + 1:stride, :]
            )
    if Kp > K:
        cols.append(jnp.zeros((N, Ho, Wo, Kp - K), x_nhwc.dtype))
    patches = jnp.concatenate(cols, axis=-1).reshape(M, Kp)
    if Mp > M:
        patches = jnp.pad(patches, ((0, Mp - M), (0, 0)))

    # --- weights / affine params padded to the lane-dense shapes ---
    wm = jnp.transpose(w_oihw, (2, 3, 1, 0)).reshape(K, Cout)
    wm = jnp.pad(wm, ((0, Kp - K), (0, Np - Cout))).astype(jnp.float32)
    bp = jnp.pad(bias, (0, Np - Cout)).reshape(1, Np).astype(jnp.float32)

    out_shape = jax.ShapeDtypeStruct((Mp, Np), jnp.float32)

    if gamma is None:
        out = pl.pallas_call(
            functools.partial(_conv_act_kernel, act=act),
            out_shape=out_shape,
        )(patches, wm, bp)
    else:
        gp = jnp.pad(gamma, (0, Np - Cout)).reshape(1, Np).astype(jnp.float32)
        bep = jnp.pad(beta, (0, Np - Cout)).reshape(1, Np).astype(jnp.float32)
        if residual is None:
            out = pl.pallas_call(
                functools.partial(_conv_bn_kernel, relu=relu, m_valid=M),
                out_shape=out_shape,
            )(patches, wm, bp, gp, bep)
        else:
            res = residual.reshape(M, Cout).astype(jnp.float32)
            res = jnp.pad(res, ((0, Mp - M), (0, Np - Cout)))
            out = pl.pallas_call(
                functools.partial(_conv_bn_res_kernel, m_valid=M),
                out_shape=out_shape,
            )(patches, wm, bp, gp, bep, res)

    return out[:M, :Cout].reshape(N, Ho, Wo, Cout)


def fused_conv_transpose2d(x_nhwc, w_iohw, bias, gamma, beta, *,
                           stride=2, padding=1, output_padding=1, relu=True):
    """nn.ConvTranspose2d(k=3, s=2, p=1, op=1) + BatchNorm + ReLU, implemented
    as zero-dilation + pad + fused stride-1 conv with the flipped kernel."""
    N, H, W, Cin = x_nhwc.shape
    _, Cout, KH, KW = w_iohw.shape
    xd = jnp.zeros((N, (H - 1) * stride + 1, (W - 1) * stride + 1, Cin), x_nhwc.dtype)
    xd = xd.at[:, ::stride, ::stride, :].set(x_nhwc)
    plo = KH - 1 - padding
    phi = KH - 1 - padding + output_padding
    xpad = jnp.pad(xd, ((0, 0), (plo, phi), (plo, phi), (0, 0)))
    # flip spatially and swap in/out channel axes -> regular conv weight
    w_conv = jnp.transpose(w_iohw[:, :, ::-1, ::-1], (1, 0, 2, 3))  # [Cout, Cin, KH, KW]
    return fused_conv2d(xpad, w_conv, bias, stride=1, padding=0,
                        gamma=gamma, beta=beta, relu=relu)


# ----------------------------- model definition -----------------------------

def _conv_params(key, cout, cin, k):
    kw_, kb_ = jax.random.split(key)
    return (0.05 * jax.random.normal(kw_, (cout, cin, k, k), jnp.float32),
            0.01 * jax.random.normal(kb_, (cout,), jnp.float32))


def _convT_params(key, cin, cout, k):
    kw_, kb_ = jax.random.split(key)
    return (0.05 * jax.random.normal(kw_, (cin, cout, k, k), jnp.float32),
            0.01 * jax.random.normal(kb_, (cout,), jnp.float32))


def _bn_params(key, c):
    kg, kb = jax.random.split(key)
    return (1.0 + 0.05 * jax.random.normal(kg, (c,), jnp.float32),
            0.01 * jax.random.normal(kb, (c,), jnp.float32))


def init_params(key, input_rgb=3, output_rgb=3, gen_filters=8, n_blocks=2):
    keys = iter(jax.random.split(key, 64))
    p = {}
    F = gen_filters
    p["c1_w"], p["c1_b"] = _conv_params(next(keys), F, input_rgb, 7)
    p["c1_g"], p["c1_be"] = _bn_params(next(keys), F)
    p["d1_w"], p["d1_b"] = _conv_params(next(keys), 2 * F, F, 3)
    p["d1_g"], p["d1_be"] = _bn_params(next(keys), 2 * F)
    p["d2_w"], p["d2_b"] = _conv_params(next(keys), 4 * F, 2 * F, 3)
    p["d2_g"], p["d2_be"] = _bn_params(next(keys), 4 * F)
    blocks = []
    for _ in range(n_blocks):
        blk = {}
        blk["w1"], blk["b1"] = _conv_params(next(keys), 4 * F, 4 * F, 3)
        blk["g1"], blk["be1"] = _bn_params(next(keys), 4 * F)
        blk["w2"], blk["b2"] = _conv_params(next(keys), 4 * F, 4 * F, 3)
        blk["g2"], blk["be2"] = _bn_params(next(keys), 4 * F)
        blocks.append(blk)
    p["blocks"] = blocks
    p["u1_w"], p["u1_b"] = _convT_params(next(keys), 4 * F, 2 * F, 3)
    p["u1_g"], p["u1_be"] = _bn_params(next(keys), 2 * F)
    p["u2_w"], p["u2_b"] = _convT_params(next(keys), 2 * F, F, 3)
    p["u2_g"], p["u2_be"] = _bn_params(next(keys), F)
    p["co_w"], p["co_b"] = _conv_params(next(keys), output_rgb, F, 7)
    return p


def resblock(x, blk):
    # conv -> BN -> ReLU  (one fused pallas_call)
    h = fused_conv2d(x, blk["w1"], blk["b1"], stride=1, padding=1,
                     gamma=blk["g1"], beta=blk["be1"], relu=True)
    # conv -> BN, residual add fused into the same kernel:  out = x + conv_block(x)
    return fused_conv2d(h, blk["w2"], blk["b2"], stride=1, padding=1,
                        gamma=blk["g2"], beta=blk["be2"], residual=x)


def generator_forward(params, x_nchw):
    # NCHW (PyTorch convention) -> NHWC for the kernels
    x = jnp.transpose(x_nchw, (0, 2, 3, 1)).astype(jnp.float32)
    p = params
    h = fused_conv2d(x, p["c1_w"], p["c1_b"], stride=1, padding=3,
                     gamma=p["c1_g"], beta=p["c1_be"], relu=True)
    h = fused_conv2d(h, p["d1_w"], p["d1_b"], stride=2, padding=1,
                     gamma=p["d1_g"], beta=p["d1_be"], relu=True)
    h = fused_conv2d(h, p["d2_w"], p["d2_b"], stride=2, padding=1,
                     gamma=p["d2_g"], beta=p["d2_be"], relu=True)
    for blk in p["blocks"]:
        h = resblock(h, blk)
    h = fused_conv_transpose2d(h, p["u1_w"], p["u1_b"], p["u1_g"], p["u1_be"])
    h = fused_conv_transpose2d(h, p["u2_w"], p["u2_b"], p["u2_g"], p["u2_be"])
    h = fused_conv2d(h, p["co_w"], p["co_b"], stride=1, padding=3, act="tanh")
    return jnp.transpose(h, (0, 3, 1, 2))  # back to NCHW


# ----------------------------- main -----------------------------

if __name__ == "__main__":
    key = jax.random.PRNGKey(0)
    k_param, k_x = jax.random.split(key)

    # small configuration consistent with the module constructor
    input_rgb, output_rgb, gen_filters, n_blocks = 3, 3, 8, 2
    params = init_params(k_param, input_rgb, output_rgb, gen_filters, n_blocks)

    x = jax.random.normal(k_x, (2, input_rgb, 16, 16), jnp.float32)  # NCHW

    fwd = jax.jit(generator_forward)
    y = fwd(params, x)
    jax.block_until_ready(y)

    assert y.shape == (2, output_rgb, 16, 16), y.shape
    assert bool(jnp.all(jnp.isfinite(y)))
    assert bool(jnp.all(jnp.abs(y) <= 1.0 + 1e-6))  # tanh output range
    print("KERNEL_OK")
</pallas_src>

<mosaic_0001>
module attributes {stable_mosaic.version = 11 : i64} {
  func.func @_conv_bn_kernel(%arg0: memref<512x256xf32, #tpu.memory_space<vmem>>, %arg1: memref<256x128xf32, #tpu.memory_space<vmem>>, %arg2: memref<1x128xf32, #tpu.memory_space<vmem>>, %arg3: memref<1x128xf32, #tpu.memory_space<vmem>>, %arg4: memref<1x128xf32, #tpu.memory_space<vmem>>, %arg5: memref<512x128xf32, #tpu.memory_space<vmem>>) attributes {dimension_semantics = [], scalar_prefetch = 0 : i64, scratch_operands = 0 : i64, tpu.core_type = #tpu.core_type<tc>} {
    %c0 = arith.constant 0 : index
    %c0_0 = arith.constant 0 : index
    %0 = vector.load %arg0[%c0, %c0_0] : memref<512x256xf32, #tpu.memory_space<vmem>>, vector<512x256xf32>
    %c0_1 = arith.constant 0 : index
    %c0_2 = arith.constant 0 : index
    %1 = vector.load %arg1[%c0_1, %c0_2] : memref<256x128xf32, #tpu.memory_space<vmem>>, vector<256x128xf32>
    %cst = arith.constant dense<0.000000e+00> : vector<512x128xf32>
    %2 = tpu.matmul %0, %1, %cst {dimension_numbers = #tpu.dot_dimension_numbers<[1], [0], [0], [1], [0, 0, 1, 1], [], []>} : vector<512x256xf32>, vector<256x128xf32>, vector<512x128xf32> -> vector<512x128xf32>
    %c0_3 = arith.constant 0 : index
    %c0_4 = arith.constant 0 : index
    %3 = vector.load %arg2[%c0_3, %c0_4] : memref<1x128xf32, #tpu.memory_space<vmem>>, vector<1x128xf32>
    %4 = vector.broadcast %3 : vector<1x128xf32> to vector<512x128xf32>
    %5 = arith.addf %2, %4 : vector<512x128xf32>
    %cst_5 = arith.constant dense<0.000000e+00> : vector<128xf32>
    %6 = vector.multi_reduction <add>, %5, %cst_5 [0] : vector<512x128xf32> to vector<128xf32>
    %7 = vector.shape_cast %6 : vector<128xf32> to vector<1x128xf32>
    %cst_6 = arith.constant 5.120000e+02 : f32
    %8 = vector.broadcast %cst_6 : f32 to vector<1x128xf32>
    %9 = arith.divf %7, %8 : vector<1x128xf32>
    %10 = vector.broadcast %9 : vector<1x128xf32> to vector<512x128xf32>
    %11 = arith.subf %5, %10 : vector<512x128xf32>
    %12 = arith.mulf %11, %11 : vector<512x128xf32>
    %cst_7 = arith.constant dense<0.000000e+00> : vector<128xf32>
    %13 = vector.multi_reduction <add>, %12, %cst_7 [0] : vector<512x128xf32> to vector<128xf32>
    %14 = vector.shape_cast %13 : vector<128xf32> to vector<1x128xf32>
    %cst_8 = arith.constant 5.120000e+02 : f32
    %15 = vector.broadcast %cst_8 : f32 to vector<1x128xf32>
    %16 = arith.divf %14, %15 : vector<1x128xf32>
    %17 = vector.broadcast %9 : vector<1x128xf32> to vector<512x128xf32>
    %18 = arith.subf %5, %17 : vector<512x128xf32>
    %cst_9 = arith.constant 9.99999974E-6 : f32
    %19 = vector.broadcast %cst_9 : f32 to vector<1x128xf32>
    %20 = arith.addf %16, %19 : vector<1x128xf32>
    %21 = math.rsqrt %20 : vector<1x128xf32>
    %22 = vector.broadcast %21 : vector<1x128xf32> to vector<512x128xf32>
    %23 = arith.mulf %18, %22 : vector<512x128xf32>
    %c0_10 = arith.constant 0 : index
    %c0_11 = arith.constant 0 : index
    %24 = vector.load %arg3[%c0_10, %c0_11] : memref<1x128xf32, #tpu.memory_space<vmem>>, vector<1x128xf32>
    %25 = vector.broadcast %24 : vector<1x128xf32> to vector<512x128xf32>
    %26 = arith.mulf %23, %25 : vector<512x128xf32>
    %c0_12 = arith.constant 0 : index
    %c0_13 = arith.constant 0 : index
    %27 = vector.load %arg4[%c0_12, %c0_13] : memref<1x128xf32, #tpu.memory_space<vmem>>, vector<1x128xf32>
    %28 = vector.broadcast %27 : vector<1x128xf32> to vector<512x128xf32>
    %29 = arith.addf %26, %28 : vector<512x128xf32>
    %cst_14 = arith.constant 0.000000e+00 : f32
    %30 = vector.broadcast %cst_14 : f32 to vector<512x128xf32>
    %31 = arith.maximumf %29, %30 : vector<512x128xf32>
    %c0_15 = arith.constant 0 : index
    %c0_16 = arith.constant 0 : index
    %32 = vector.load %arg5[%c0_15, %c0_16] : memref<512x128xf32, #tpu.memory_space<vmem>>, vector<512x128xf32>
    tpu.vector_store %arg5[%c0_15, %c0_16], %31 {strides = array<i32>} : memref<512x128xf32, #tpu.memory_space<vmem>>, vector<512x128xf32>,
    return
  }
}

module attributes {stable_mosaic.version = 11 : i64} {
  func.func @_conv_bn_kernel(%arg0: memref<128x128xf32, #tpu.memory_space<vmem>>, %arg1: memref<128x128xf32, #tpu.memory_space<vmem>>, %arg2: memref<1x128xf32, #tpu.memory_space<vmem>>, %arg3: memref<1x128xf32, #tpu.memory_space<vmem>>, %arg4: memref<1x128xf32, #tpu.memory_space<vmem>>, %arg5: memref<128x128xf32, #tpu.memory_space<vmem>>) attributes {dimension_semantics = [], scalar_prefetch = 0 : i64, scratch_operands = 0 : i64, tpu.core_type = #tpu.core_type<tc>} {
    %c0 = arith.constant 0 : index
    %c0_0 = arith.constant 0 : index
    %0 = vector.load %arg0[%c0, %c0_0] : memref<128x128xf32, #tpu.memory_space<vmem>>, vector<128x128xf32>
    %c0_1 = arith.constant 0 : index
    %c0_2 = arith.constant 0 : index
    %1 = vector.load %arg1[%c0_1, %c0_2] : memref<128x128xf32, #tpu.memory_space<vmem>>, vector<128x128xf32>
    %cst = arith.constant dense<0.000000e+00> : vector<128x128xf32>
    %2 = tpu.matmul %0, %1, %cst {dimension_numbers = #tpu.dot_dimension_numbers<[1], [0], [0], [1], [0, 0, 1, 1], [], []>} : vector<128x128xf32>, vector<128x128xf32>, vector<128x128xf32> -> vector<128x128xf32>
    %c0_3 = arith.constant 0 : index
    %c0_4 = arith.constant 0 : index
    %3 = vector.load %arg2[%c0_3, %c0_4] : memref<1x128xf32, #tpu.memory_space<vmem>>, vector<1x128xf32>
    %4 = vector.broadcast %3 : vector<1x128xf32> to vector<128x128xf32>
    %5 = arith.addf %2, %4 : vector<128x128xf32>
    %cst_5 = arith.constant dense<0.000000e+00> : vector<128xf32>
    %6 = vector.multi_reduction <add>, %5, %cst_5 [0] : vector<128x128xf32> to vector<128xf32>
    %7 = vector.shape_cast %6 : vector<128xf32> to vector<1x128xf32>
    %cst_6 = arith.constant 1.280000e+02 : f32
    %8 = vector.broadcast %cst_6 : f32 to vector<1x128xf32>
    %9 = arith.divf %7, %8 : vector<1x128xf32>
    %10 = vector.broadcast %9 : vector<1x128xf32> to vector<128x128xf32>
    %11 = arith.subf %5, %10 : vector<128x128xf32>
    %12 = arith.mulf %11, %11 : vector<128x128xf32>
    %cst_7 = arith.constant dense<0.000000e+00> : vector<128xf32>
    %13 = vector.multi_reduction <add>, %12, %cst_7 [0] : vector<128x128xf32> to vector<128xf32>
    %14 = vector.shape_cast %13 : vector<128xf32> to vector<1x128xf32>
    %cst_8 = arith.constant 1.280000e+02 : f32
    %15 = vector.broadcast %cst_8 : f32 to vector<1x128xf32>
    %16 = arith.divf %14, %15 : vector<1x128xf32>
    %17 = vector.broadcast %9 : vector<1x128xf32> to vector<128x128xf32>
    %18 = arith.subf %5, %17 : vector<128x128xf32>
    %cst_9 = arith.constant 9.99999974E-6 : f32
    %19 = vector.broadcast %cst_9 : f32 to vector<1x128xf32>
    %20 = arith.addf %16, %19 : vector<1x128xf32>
    %21 = math.rsqrt %20 : vector<1x128xf32>
    %22 = vector.broadcast %21 : vector<1x128xf32> to vector<128x128xf32>
    %23 = arith.mulf %18, %22 : vector<128x128xf32>
    %c0_10 = arith.constant 0 : index
    %c0_11 = arith.constant 0 : index
    %24 = vector.load %arg3[%c0_10, %c0_11] : memref<1x128xf32, #tpu.memory_space<vmem>>, vector<1x128xf32>
    %25 = vector.broadcast %24 : vector<1x128xf32> to vector<128x128xf32>
    %26 = arith.mulf %23, %25 : vector<128x128xf32>
    %c0_12 = arith.constant 0 : index
    %c0_13 = arith.constant 0 : index
    %27 = vector.load %arg4[%c0_12, %c0_13] : memref<1x128xf32, #tpu.memory_space<vmem>>, vector<1x128xf32>
    %28 = vector.broadcast %27 : vector<1x128xf32> to vector<128x128xf32>
    %29 = arith.addf %26, %28 : vector<128x128xf32>
    %cst_14 = arith.constant 0.000000e+00 : f32
    %30 = vector.broadcast %cst_14 : f32 to vector<128x128xf32>
    %31 = arith.maximumf %29, %30 : vector<128x128xf32>
    %c0_15 = arith.constant 0 : index
    %c0_16 = arith.constant 0 : index
    %32 = vector.load %arg5[%c0_15, %c0_16] : memref<128x128xf32, #tpu.memory_space<vmem>>, vector<128x128xf32>
    tpu.vector_store %arg5[%c0_15, %c0_16], %31 {strides = array<i32>} : memref<128x128xf32, #tpu.memory_space<vmem>>, vector<128x128xf32>,
    return
  }
}

module attributes {stable_mosaic.version = 11 : i64} {
  func.func @_conv_bn_kernel(%arg0: memref<32x256xf32, #tpu.memory_space<vmem>>, %arg1: memref<256x128xf32, #tpu.memory_space<vmem>>, %arg2: memref<1x128xf32, #tpu.memory_space<vmem>>, %arg3: memref<1x128xf32, #tpu.memory_space<vmem>>, %arg4: memref<1x128xf32, #tpu.memory_space<vmem>>, %arg5: memref<32x128xf32, #tpu.memory_space<vmem>>) attributes {dimension_semantics = [], scalar_prefetch = 0 : i64, scratch_operands = 0 : i64, tpu.core_type = #tpu.core_type<tc>} {
    %c0 = arith.constant 0 : index
    %c0_0 = arith.constant 0 : index
    %0 = vector.load %arg0[%c0, %c0_0] : memref<32x256xf32, #tpu.memory_space<vmem>>, vector<32x256xf32>
    %c0_1 = arith.constant 0 : index
    %c0_2 = arith.constant 0 : index
    %1 = vector.load %arg1[%c0_1, %c0_2] : memref<256x128xf32, #tpu.memory_space<vmem>>, vector<256x128xf32>
    %cst = arith.constant dense<0.000000e+00> : vector<32x128xf32>
    %2 = tpu.matmul %0, %1, %cst {dimension_numbers = #tpu.dot_dimension_numbers<[1], [0], [0], [1], [0, 0, 1, 1], [], []>} : vector<32x256xf32>, vector<256x128xf32>, vector<32x128xf32> -> vector<32x128xf32>
    %c0_3 = arith.constant 0 : index
    %c0_4 = arith.constant 0 : index
    %3 = vector.load %arg2[%c0_3, %c0_4] : memref<1x128xf32, #tpu.memory_space<vmem>>, vector<1x128xf32>
    %4 = vector.broadcast %3 : vector<1x128xf32> to vector<32x128xf32>
    %5 = arith.addf %2, %4 : vector<32x128xf32>
    %cst_5 = arith.constant dense<0.000000e+00> : vector<128xf32>
    %6 = vector.multi_reduction <add>, %5, %cst_5 [0] : vector<32x128xf32> to vector<128xf32>
    %7 = vector.shape_cast %6 : vector<128xf32> to vector<1x128xf32>
    %cst_6 = arith.constant 3.200000e+01 : f32
    %8 = vector.broadcast %cst_6 : f32 to vector<1x128xf32>
    %9 = arith.divf %7, %8 : vector<1x128xf32>
    %10 = vector.broadcast %9 : vector<1x128xf32> to vector<32x128xf32>
    %11 = arith.subf %5, %10 : vector<32x128xf32>
    %12 = arith.mulf %11, %11 : vector<32x128xf32>
    %cst_7 = arith.constant dense<0.000000e+00> : vector<128xf32>
    %13 = vector.multi_reduction <add>, %12, %cst_7 [0] : vector<32x128xf32> to vector<128xf32>
    %14 = vector.shape_cast %13 : vector<128xf32> to vector<1x128xf32>
    %cst_8 = arith.constant 3.200000e+01 : f32
    %15 = vector.broadcast %cst_8 : f32 to vector<1x128xf32>
    %16 = arith.divf %14, %15 : vector<1x128xf32>
    %17 = vector.broadcast %9 : vector<1x128xf32> to vector<32x128xf32>
    %18 = arith.subf %5, %17 : vector<32x128xf32>
    %cst_9 = arith.constant 9.99999974E-6 : f32
    %19 = vector.broadcast %cst_9 : f32 to vector<1x128xf32>
    %20 = arith.addf %16, %19 : vector<1x128xf32>
    %21 = math.rsqrt %20 : vector<1x128xf32>
    %22 = vector.broadcast %21 : vector<1x128xf32> to vector<32x128xf32>
    %23 = arith.mulf %18, %22 : vector<32x128xf32>
    %c0_10 = arith.constant 0 : index
    %c0_11 = arith.constant 0 : index
    %24 = vector.load %arg3[%c0_10, %c0_11] : memref<1x128xf32, #tpu.memory_space<vmem>>, vector<1x128xf32>
    %25 = vector.broadcast %24 : vector<1x128xf32> to vector<32x128xf32>
    %26 = arith.mulf %23, %25 : vector<32x128xf32>
    %c0_12 = arith.constant 0 : index
    %c0_13 = arith.constant 0 : index
    %27 = vector.load %arg4[%c0_12, %c0_13] : memref<1x128xf32, #tpu.memory_space<vmem>>, vector<1x128xf32>
    %28 = vector.broadcast %27 : vector<1x128xf32> to vector<32x128xf32>
    %29 = arith.addf %26, %28 : vector<32x128xf32>
    %cst_14 = arith.constant 0.000000e+00 : f32
    %30 = vector.broadcast %cst_14 : f32 to vector<32x128xf32>
    %31 = arith.maximumf %29, %30 : vector<32x128xf32>
    %c0_15 = arith.constant 0 : index
    %c0_16 = arith.constant 0 : index
    %32 = vector.load %arg5[%c0_15, %c0_16] : memref<32x128xf32, #tpu.memory_space<vmem>>, vector<32x128xf32>
    tpu.vector_store %arg5[%c0_15, %c0_16], %31 {strides = array<i32>} : memref<32x128xf32, #tpu.memory_space<vmem>>, vector<32x128xf32>,
    return
  }
}

module attributes {stable_mosaic.version = 11 : i64} {
  func.func @_conv_bn_kernel(%arg0: memref<32x384xf32, #tpu.memory_space<vmem>>, %arg1: memref<384x128xf32, #tpu.memory_space<vmem>>, %arg2: memref<1x128xf32, #tpu.memory_space<vmem>>, %arg3: memref<1x128xf32, #tpu.memory_space<vmem>>, %arg4: memref<1x128xf32, #tpu.memory_space<vmem>>, %arg5: memref<32x128xf32, #tpu.memory_space<vmem>>) attributes {dimension_semantics = [], scalar_prefetch = 0 : i64, scratch_operands = 0 : i64, tpu.core_type = #tpu.core_type<tc>} {
    %c0 = arith.constant 0 : index
    %c0_0 = arith.constant 0 : index
    %0 = vector.load %arg0[%c0, %c0_0] : memref<32x384xf32, #tpu.memory_space<vmem>>, vector<32x384xf32>
    %c0_1 = arith.constant 0 : index
    %c0_2 = arith.constant 0 : index
    %1 = vector.load %arg1[%c0_1, %c0_2] : memref<384x128xf32, #tpu.memory_space<vmem>>, vector<384x128xf32>
    %cst = arith.constant dense<0.000000e+00> : vector<32x128xf32>
    %2 = tpu.matmul %0, %1, %cst {dimension_numbers = #tpu.dot_dimension_numbers<[1], [0], [0], [1], [0, 0, 1, 1], [], []>} : vector<32x384xf32>, vector<384x128xf32>, vector<32x128xf32> -> vector<32x128xf32>
    %c0_3 = arith.constant 0 : index
    %c0_4 = arith.constant 0 : index
    %3 = vector.load %arg2[%c0_3, %c0_4] : memref<1x128xf32, #tpu.memory_space<vmem>>, vector<1x128xf32>
    %4 = vector.broadcast %3 : vector<1x128xf32> to vector<32x128xf32>
    %5 = arith.addf %2, %4 : vector<32x128xf32>
    %cst_5 = arith.constant dense<0.000000e+00> : vector<128xf32>
    %6 = vector.multi_reduction <add>, %5, %cst_5 [0] : vector<32x128xf32> to vector<128xf32>
    %7 = vector.shape_cast %6 : vector<128xf32> to vector<1x128xf32>
    %cst_6 = arith.constant 3.200000e+01 : f32
    %8 = vector.broadcast %cst_6 : f32 to vector<1x128xf32>
    %9 = arith.divf %7, %8 : vector<1x128xf32>
    %10 = vector.broadcast %9 : vector<1x128xf32> to vector<32x128xf32>
    %11 = arith.subf %5, %10 : vector<32x128xf32>
    %12 = arith.mulf %11, %11 : vector<32x128xf32>
    %cst_7 = arith.constant dense<0.000000e+00> : vector<128xf32>
    %13 = vector.multi_reduction <add>, %12, %cst_7 [0] : vector<32x128xf32> to vector<128xf32>
    %14 = vector.shape_cast %13 : vector<128xf32> to vector<1x128xf32>
    %cst_8 = arith.constant 3.200000e+01 : f32
    %15 = vector.broadcast %cst_8 : f32 to vector<1x128xf32>
    %16 = arith.divf %14, %15 : vector<1x128xf32>
    %17 = vector.broadcast %9 : vector<1x128xf32> to vector<32x128xf32>
    %18 = arith.subf %5, %17 : vector<32x128xf32>
    %cst_9 = arith.constant 9.99999974E-6 : f32
    %19 = vector.broadcast %cst_9 : f32 to vector<1x128xf32>
    %20 = arith.addf %16, %19 : vector<1x128xf32>
    %21 = math.rsqrt %20 : vector<1x128xf32>
    %22 = vector.broadcast %21 : vector<1x128xf32> to vector<32x128xf32>
    %23 = arith.mulf %18, %22 : vector<32x128xf32>
    %c0_10 = arith.constant 0 : index
    %c0_11 = arith.constant 0 : index
    %24 = vector.load %arg3[%c0_10, %c0_11] : memref<1x128xf32, #tpu.memory_space<vmem>>, vector<1x128xf32>
    %25 = vector.broadcast %24 : vector<1x128xf32> to vector<32x128xf32>
    %26 = arith.mulf %23, %25 : vector<32x128xf32>
    %c0_12 = arith.constant 0 : index
    %c0_13 = arith.constant 0 : index
    %27 = vector.load %arg4[%c0_12, %c0_13] : memref<1x128xf32, #tpu.memory_space<vmem>>, vector<1x128xf32>
    %28 = vector.broadcast %27 : vector<1x128xf32> to vector<32x128xf32>
    %29 = arith.addf %26, %28 : vector<32x128xf32>
    %cst_14 = arith.constant 0.000000e+00 : f32
    %30 = vector.broadcast %cst_14 : f32 to vector<32x128xf32>
    %31 = arith.maximumf %29, %30 : vector<32x128xf32>
    %c0_15 = arith.constant 0 : index
    %c0_16 = arith.constant 0 : index
    %32 = vector.load %arg5[%c0_15, %c0_16] : memref<32x128xf32, #tpu.memory_space<vmem>>, vector<32x128xf32>
    tpu.vector_store %arg5[%c0_15, %c0_16], %31 {strides = array<i32>} : memref<32x128xf32, #tpu.memory_space<vmem>>, vector<32x128xf32>,
    return
  }
}

module attributes {stable_mosaic.version = 11 : i64} {
  func.func @_conv_bn_res_kernel(%arg0: memref<32x384xf32, #tpu.memory_space<vmem>>, %arg1: memref<384x128xf32, #tpu.memory_space<vmem>>, %arg2: memref<1x128xf32, #tpu.memory_space<vmem>>, %arg3: memref<1x128xf32, #tpu.memory_space<vmem>>, %arg4: memref<1x128xf32, #tpu.memory_space<vmem>>, %arg5: memref<32x128xf32, #tpu.memory_space<vmem>>, %arg6: memref<32x128xf32, #tpu.memory_space<vmem>>) attributes {dimension_semantics = [], scalar_prefetch = 0 : i64, scratch_operands = 0 : i64, tpu.core_type = #tpu.core_type<tc>} {
    %c0 = arith.constant 0 : index
    %c0_0 = arith.constant 0 : index
    %0 = vector.load %arg0[%c0, %c0_0] : memref<32x384xf32, #tpu.memory_space<vmem>>, vector<32x384xf32>
    %c0_1 = arith.constant 0 : index
    %c0_2 = arith.constant 0 : index
    %1 = vector.load %arg1[%c0_1, %c0_2] : memref<384x128xf32, #tpu.memory_space<vmem>>, vector<384x128xf32>
    %cst = arith.constant dense<0.000000e+00> : vector<32x128xf32>
    %2 = tpu.matmul %0, %1, %cst {dimension_numbers = #tpu.dot_dimension_numbers<[1], [0], [0], [1], [0, 0, 1, 1], [], []>} : vector<32x384xf32>, vector<384x128xf32>, vector<32x128xf32> -> vector<32x128xf32>
    %c0_3 = arith.constant 0 : index
    %c0_4 = arith.constant 0 : index
    %3 = vector.load %arg2[%c0_3, %c0_4] : memref<1x128xf32, #tpu.memory_space<vmem>>, vector<1x128xf32>
    %4 = vector.broadcast %3 : vector<1x128xf32> to vector<32x128xf32>
    %5 = arith.addf %2, %4 : vector<32x128xf32>
    %cst_5 = arith.constant dense<0.000000e+00> : vector<128xf32>
    %6 = vector.multi_reduction <add>, %5, %cst_5 [0] : vector<32x128xf32> to vector<128xf32>
    %7 = vector.shape_cast %6 : vector<128xf32> to vector<1x128xf32>
    %cst_6 = arith.constant 3.200000e+01 : f32
    %8 = vector.broadcast %cst_6 : f32 to vector<1x128xf32>
    %9 = arith.divf %7, %8 : vector<1x128xf32>
    %10 = vector.broadcast %9 : vector<1x128xf32> to vector<32x128xf32>
    %11 = arith.subf %5, %10 : vector<32x128xf32>
    %12 = arith.mulf %11, %11 : vector<32x128xf32>
    %cst_7 = arith.constant dense<0.000000e+00> : vector<128xf32>
    %13 = vector.multi_reduction <add>, %12, %cst_7 [0] : vector<32x128xf32> to vector<128xf32>
    %14 = vector.shape_cast %13 : vector<128xf32> to vector<1x128xf32>
    %cst_8 = arith.constant 3.200000e+01 : f32
    %15 = vector.broadcast %cst_8 : f32 to vector<1x128xf32>
    %16 = arith.divf %14, %15 : vector<1x128xf32>
    %17 = vector.broadcast %9 : vector<1x128xf32> to vector<32x128xf32>
    %18 = arith.subf %5, %17 : vector<32x128xf32>
    %cst_9 = arith.constant 9.99999974E-6 : f32
    %19 = vector.broadcast %cst_9 : f32 to vector<1x128xf32>
    %20 = arith.addf %16, %19 : vector<1x128xf32>
    %21 = math.rsqrt %20 : vector<1x128xf32>
    %22 = vector.broadcast %21 : vector<1x128xf32> to vector<32x128xf32>
    %23 = arith.mulf %18, %22 : vector<32x128xf32>
    %c0_10 = arith.constant 0 : index
    %c0_11 = arith.constant 0 : index
    %24 = vector.load %arg3[%c0_10, %c0_11] : memref<1x128xf32, #tpu.memory_space<vmem>>, vector<1x128xf32>
    %25 = vector.broadcast %24 : vector<1x128xf32> to vector<32x128xf32>
    %26 = arith.mulf %23, %25 : vector<32x128xf32>
    %c0_12 = arith.constant 0 : index
    %c0_13 = arith.constant 0 : index
    %27 = vector.load %arg4[%c0_12, %c0_13] : memref<1x128xf32, #tpu.memory_space<vmem>>, vector<1x128xf32>
    %28 = vector.broadcast %27 : vector<1x128xf32> to vector<32x128xf32>
    %29 = arith.addf %26, %28 : vector<32x128xf32>
    %c0_14 = arith.constant 0 : index
    %c0_15 = arith.constant 0 : index
    %30 = vector.load %arg5[%c0_14, %c0_15] : memref<32x128xf32, #tpu.memory_space<vmem>>, vector<32x128xf32>
    %31 = arith.addf %30, %29 : vector<32x128xf32>
    %c0_16 = arith.constant 0 : index
    %c0_17 = arith.constant 0 : index
    %32 = vector.load %arg6[%c0_16, %c0_17] : memref<32x128xf32, #tpu.memory_space<vmem>>, vector<32x128xf32>
    tpu.vector_store %arg6[%c0_16, %c0_17], %31 {strides = array<i32>} : memref<32x128xf32, #tpu.memory_space<vmem>>, vector<32x128xf32>,
    return
  }
}

module attributes {stable_mosaic.version = 11 : i64} {
  func.func @_conv_bn_kernel(%arg0: memref<128x384xf32, #tpu.memory_space<vmem>>, %arg1: memref<384x128xf32, #tpu.memory_space<vmem>>, %arg2: memref<1x128xf32, #tpu.memory_space<vmem>>, %arg3: memref<1x128xf32, #tpu.memory_space<vmem>>, %arg4: memref<1x128xf32, #tpu.memory_space<vmem>>, %arg5: memref<128x128xf32, #tpu.memory_space<vmem>>) attributes {dimension_semantics = [], scalar_prefetch = 0 : i64, scratch_operands = 0 : i64, tpu.core_type = #tpu.core_type<tc>} {
    %c0 = arith.constant 0 : index
    %c0_0 = arith.constant 0 : index
    %0 = vector.load %arg0[%c0, %c0_0] : memref<128x384xf32, #tpu.memory_space<vmem>>, vector<128x384xf32>
    %c0_1 = arith.constant 0 : index
    %c0_2 = arith.constant 0 : index
    %1 = vector.load %arg1[%c0_1, %c0_2] : memref<384x128xf32, #tpu.memory_space<vmem>>, vector<384x128xf32>
    %cst = arith.constant dense<0.000000e+00> : vector<128x128xf32>
    %2 = tpu.matmul %0, %1, %cst {dimension_numbers = #tpu.dot_dimension_numbers<[1], [0], [0], [1], [0, 0, 1, 1], [], []>} : vector<128x384xf32>, vector<384x128xf32>, vector<128x128xf32> -> vector<128x128xf32>
    %c0_3 = arith.constant 0 : index
    %c0_4 = arith.constant 0 : index
    %3 = vector.load %arg2[%c0_3, %c0_4] : memref<1x128xf32, #tpu.memory_space<vmem>>, vector<1x128xf32>
    %4 = vector.broadcast %3 : vector<1x128xf32> to vector<128x128xf32>
    %5 = arith.addf %2, %4 : vector<128x128xf32>
    %cst_5 = arith.constant dense<0.000000e+00> : vector<128xf32>
    %6 = vector.multi_reduction <add>, %5, %cst_5 [0] : vector<128x128xf32> to vector<128xf32>
    %7 = vector.shape_cast %6 : vector<128xf32> to vector<1x128xf32>
    %cst_6 = arith.constant 1.280000e+02 : f32
    %8 = vector.broadcast %cst_6 : f32 to vector<1x128xf32>
    %9 = arith.divf %7, %8 : vector<1x128xf32>
    %10 = vector.broadcast %9 : vector<1x128xf32> to vector<128x128xf32>
    %11 = arith.subf %5, %10 : vector<128x128xf32>
    %12 = arith.mulf %11, %11 : vector<128x128xf32>
    %cst_7 = arith.constant dense<0.000000e+00> : vector<128xf32>
    %13 = vector.multi_reduction <add>, %12, %cst_7 [0] : vector<128x128xf32> to vector<128xf32>
    %14 = vector.shape_cast %13 : vector<128xf32> to vector<1x128xf32>
    %cst_8 = arith.constant 1.280000e+02 : f32
    %15 = vector.broadcast %cst_8 : f32 to vector<1x128xf32>
    %16 = arith.divf %14, %15 : vector<1x128xf32>
    %17 = vector.broadcast %9 : vector<1x128xf32> to vector<128x128xf32>
    %18 = arith.subf %5, %17 : vector<128x128xf32>
    %cst_9 = arith.constant 9.99999974E-6 : f32
    %19 = vector.broadcast %cst_9 : f32 to vector<1x128xf32>
    %20 = arith.addf %16, %19 : vector<1x128xf32>
    %21 = math.rsqrt %20 : vector<1x128xf32>
    %22 = vector.broadcast %21 : vector<1x128xf32> to vector<128x128xf32>
    %23 = arith.mulf %18, %22 : vector<128x128xf32>
    %c0_10 = arith.constant 0 : index
    %c0_11 = arith.constant 0 : index
    %24 = vector.load %arg3[%c0_10, %c0_11] : memref<1x128xf32, #tpu.memory_space<vmem>>, vector<1x128xf32>
    %25 = vector.broadcast %24 : vector<1x128xf32> to vector<128x128xf32>
    %26 = arith.mulf %23, %25 : vector<128x128xf32>
    %c0_12 = arith.constant 0 : index
    %c0_13 = arith.constant 0 : index
    %27 = vector.load %arg4[%c0_12, %c0_13] : memref<1x128xf32, #tpu.memory_space<vmem>>, vector<1x128xf32>
    %28 = vector.broadcast %27 : vector<1x128xf32> to vector<128x128xf32>
    %29 = arith.addf %26, %28 : vector<128x128xf32>
    %cst_14 = arith.constant 0.000000e+00 : f32
    %30 = vector.broadcast %cst_14 : f32 to vector<128x128xf32>
    %31 = arith.maximumf %29, %30 : vector<128x128xf32>
    %c0_15 = arith.constant 0 : index
    %c0_16 = arith.constant 0 : index
    %32 = vector.load %arg5[%c0_15, %c0_16] : memref<128x128xf32, #tpu.memory_space<vmem>>, vector<128x128xf32>
    tpu.vector_store %arg5[%c0_15, %c0_16], %31 {strides = array<i32>} : memref<128x128xf32, #tpu.memory_space<vmem>>, vector<128x128xf32>,
    return
  }
}

module attributes {stable_mosaic.version = 11 : i64} {
  func.func @_conv_act_kernel(%arg0: memref<512x512xf32, #tpu.memory_space<vmem>>, %arg1: memref<512x128xf32, #tpu.memory_space<vmem>>, %arg2: memref<1x128xf32, #tpu.memory_space<vmem>>, %arg3: memref<512x128xf32, #tpu.memory_space<vmem>>) attributes {dimension_semantics = [], scalar_prefetch = 0 : i64, scratch_operands = 0 : i64, tpu.core_type = #tpu.core_type<tc>} {
    %c0 = arith.constant 0 : index
    %c0_0 = arith.constant 0 : index
    %0 = vector.load %arg0[%c0, %c0_0] : memref<512x512xf32, #tpu.memory_space<vmem>>, vector<512x512xf32>
    %c0_1 = arith.constant 0 : index
    %c0_2 = arith.constant 0 : index
    %1 = vector.load %arg1[%c0_1, %c0_2] : memref<512x128xf32, #tpu.memory_space<vmem>>, vector<512x128xf32>
    %cst = arith.constant dense<0.000000e+00> : vector<512x128xf32>
    %2 = tpu.matmul %0, %1, %cst {dimension_numbers = #tpu.dot_dimension_numbers<[1], [0], [0], [1], [0, 0, 1, 1], [], []>} : vector<512x512xf32>, vector<512x128xf32>, vector<512x128xf32> -> vector<512x128xf32>
    %c0_3 = arith.constant 0 : index
    %c0_4 = arith.constant 0 : index
    %3 = vector.load %arg2[%c0_3, %c0_4] : memref<1x128xf32, #tpu.memory_space<vmem>>, vector<1x128xf32>
    %4 = vector.broadcast %3 : vector<1x128xf32> to vector<512x128xf32>
    %5 = arith.addf %2, %4 : vector<512x128xf32>
    %6 = math.tanh %5 : vector<512x128xf32>
    %c0_5 = arith.constant 0 : index
    %c0_6 = arith.constant 0 : index
    %7 = vector.load %arg3[%c0_5, %c0_6] : memref<512x128xf32, #tpu.memory_space<vmem>>, vector<512x128xf32>
    tpu.vector_store %arg3[%c0_5, %c0_6], %6 {strides = array<i32>} : memref<512x128xf32, #tpu.memory_space<vmem>>, vector<512x128xf32>,
    return
  }
}

</mosaic_0001>

<llo_original>
// kernel: generator_forward.11
$region0: #{generator_forward.11}
  #allocation0 [shape = 'u32[]', space=smem, size = 0x4, offset = 0x4, fixed_abs, tag = 'smem constant byte address 0x4 - core index']
  #allocation1 [shape = 'u32[72,128]{1,0:T(1,128)}', space=vmem, size = 0x9000, scoped, tag = 'internal scratch']
  %s0 = inlined_call_operand.vmem [shape: f32[128,128], index: 0, kind: input, shape index: {}]
  %s1 = inlined_call_operand.vmem [shape: f32[128,128], index: 1, kind: input, shape index: {}]
  %s2 = inlined_call_operand.vmem [shape: f32[1,128], index: 2, kind: input, shape index: {}]
  %s3 = inlined_call_operand.vmem [shape: f32[1,128], index: 3, kind: input, shape index: {}]
  %s4 = inlined_call_operand.vmem [shape: f32[1,128], index: 4, kind: input, shape index: {}]
  %s5 = inlined_call_operand.vmem [shape: f32[128,128], index: 5, kind: output, shape index: {}]
  %s6 = sld [smem:[#allocation0]]
  $region30: #{generator_forward.11} parent=0
    _
  %s8 = ssub.s32 1, %s6
  %s9 = scalar_select 0, %s8, %s6
  // Predicated region
  $region2: #{generator_forward.11} parent=0 // pred_check
    _
  $region3: #{generator_forward.11} parent=0 // pred_check_branch
    %11 = sbr.rel (0) target = $region5
  $region4: #{generator_forward.11} parent=0 // pred_region
    _
  $region5: #{generator_forward.11} parent=0 // pred_fallthru
    _
  // Predicated region
  $region6: #{generator_forward.11} parent=0 // pred_check
    _
  $region7: #{generator_forward.11} parent=0 // pred_check_branch
    %13 = sbr.rel (0) target = $region9
  $region8: #{generator_forward.11} parent=0 // pred_region
    _
  $region9: #{generator_forward.11} parent=0 // pred_fallthru
    _
  // Predicated region
  $region10: #{generator_forward.11} parent=0 // pred_check
    _
  $region11: #{generator_forward.11} parent=0 // pred_check_branch
    %15 = sbr.rel (0) target = $region13
  $region12: #{generator_forward.11} parent=0 // pred_region
    _
  $region13: #{generator_forward.11} parent=0 // pred_fallthru
    _
  // Predicated region
  $region14: #{generator_forward.11} parent=0 // pred_check
    _
  $region15: #{generator_forward.11} parent=0 // pred_check_branch
    %17 = sbr.rel (0) target = $region17
  $region16: #{generator_forward.11} parent=0 // pred_region
    _
  $region17: #{generator_forward.11} parent=0 // pred_fallthru
    _
  // Predicated region
  $region18: #{generator_forward.11} parent=0 // pred_check
    _
  $region19: #{generator_forward.11} parent=0 // pred_check_branch
    %19 = sbr.rel (0) target = $region21
  $region20: #{generator_forward.11} parent=0 // pred_region
    _
  $region21: #{generator_forward.11} parent=0 // pred_fallthru
    _
  %v20 = vld [vmem:[%s0] sm:$0xff]
  %v21 = vld [vmem:[%s0 + $0x8] sm:$0xff]
  %v22 = vld [vmem:[%s0 + $0x10] sm:$0xff]
  %v23 = vld [vmem:[%s0 + $0x18] sm:$0xff]
  %v24 = vld [vmem:[%s0 + $0x20] sm:$0xff]
  %v25 = vld [vmem:[%s0 + $0x28] sm:$0xff]
  %v26 = vld [vmem:[%s0 + $0x30] sm:$0xff]
  %v27 = vld [vmem:[%s0 + $0x38] sm:$0xff]
  %v28 = vld [vmem:[%s0 + $0x40] sm:$0xff]
  %v29 = vld [vmem:[%s0 + $0x48] sm:$0xff]
  %v30 = vld [vmem:[%s0 + $0x50] sm:$0xff]
  %v31 = vld [vmem:[%s0 + $0x58] sm:$0xff]
  %v32 = vld [vmem:[%s0 + $0x60] sm:$0xff]
  %v33 = vld [vmem:[%s0 + $0x68] sm:$0xff]
  %v34 = vld [vmem:[%s0 + $0x70] sm:$0xff]
  %v35 = vld [vmem:[%s0 + $0x78] sm:$0xff]
  %v36 = vld [vmem:[%s1] sm:$0xff]
  %v37 = vld [vmem:[%s1 + $0x8] sm:$0xff]
  %v38 = vld [vmem:[%s1 + $0x10] sm:$0xff]
  %v39 = vld [vmem:[%s1 + $0x18] sm:$0xff]
  %v40 = vld [vmem:[%s1 + $0x20] sm:$0xff]
  %v41 = vld [vmem:[%s1 + $0x28] sm:$0xff]
  %v42 = vld [vmem:[%s1 + $0x30] sm:$0xff]
  %v43 = vld [vmem:[%s1 + $0x38] sm:$0xff]
  %v44 = vld [vmem:[%s1 + $0x40] sm:$0xff]
  %v45 = vld [vmem:[%s1 + $0x48] sm:$0xff]
  %v46 = vld [vmem:[%s1 + $0x50] sm:$0xff]
  %v47 = vld [vmem:[%s1 + $0x58] sm:$0xff]
  %v48 = vld [vmem:[%s1 + $0x60] sm:$0xff]
  %v49 = vld [vmem:[%s1 + $0x68] sm:$0xff]
  %v50 = vld [vmem:[%s1 + $0x70] sm:$0xff]
  %v51 = vld [vmem:[%s1 + $0x78] sm:$0xff]
  %v52 = vld [vmem:[%s2] sm:$0x1]
  %v54 = vperm.slane %v52, 0
  %56 = vmatpush.msra.mxu0 %v51
  %57 = vmatpush.msra.mxu0 %v50
  %58 = vmatpush.msra.mxu0 %v49
  %59 = vmatpush.msra.mxu0 %v48
  %60 = vmatpush.msra.mxu0 %v47
  %61 = vmatpush.msra.mxu0 %v46
  %62 = vmatpush.msra.mxu0 %v45
  %63 = vmatpush.msra.mxu0 %v44
  %64 = vmatpush.msra.mxu0 %v43
  %65 = vmatpush.msra.mxu0 %v42
  %66 = vmatpush.msra.mxu0 %v41
  %67 = vmatpush.msra.mxu0 %v40
  %68 = vmatpush.msra.mxu0 %v39
  %69 = vmatpush.msra.mxu0 %v38
  %70 = vmatpush.msra.mxu0 %v37
  %71 = vmatpush.msra.mxu0 %v36
  %72 = vmatmul.f32.gmra.mxu0 %v20
  %v73 = vpop.f32.mrf.mxu0
  %v74 = vadd.f32 %v54, %v73
  %75 = vmatmul.f32.gmra.mxu0 %v21
  %v76 = vpop.f32.mrf.mxu0
  %v77 = vadd.f32 %v54, %v76
  %78 = vmatmul.f32.gmra.mxu0 %v22
  %v79 = vpop.f32.mrf.mxu0
  %v80 = vadd.f32 %v54, %v79
  %81 = vmatmul.f32.gmra.mxu0 %v23
  %v82 = vpop.f32.mrf.mxu0
  %v83 = vadd.f32 %v54, %v82
  %84 = vmatmul.f32.gmra.mxu0 %v24
  %v85 = vpop.f32.mrf.mxu0
  %v86 = vadd.f32 %v54, %v85
  %87 = vmatmul.f32.gmra.mxu0 %v25
  %v88 = vpop.f32.mrf.mxu0
  %v89 = vadd.f32 %v54, %v88
  %90 = vmatmul.f32.gmra.mxu0 %v26
  %v91 = vpop.f32.mrf.mxu0
  %v92 = vadd.f32 %v54, %v91
  %93 = vmatmul.f32.gmra.mxu0 %v27
  %v94 = vpop.f32.mrf.mxu0
  %v95 = vadd.f32 %v54, %v94
  %96 = vmatmul.f32.gmra.mxu0 %v28
  %v97 = vpop.f32.mrf.mxu0
  %v98 = vadd.f32 %v54, %v97
  %99 = vmatmul.f32.gmra.mxu0 %v29
  %v100 = vpop.f32.mrf.mxu0
  %v101 = vadd.f32 %v54, %v100
  %102 = vmatmul.f32.gmra.mxu0 %v30
  %v103 = vpop.f32.mrf.mxu0
  %v104 = vadd.f32 %v54, %v103
  %105 = vmatmul.f32.gmra.mxu0 %v31
  %v106 = vpop.f32.mrf.mxu0
  %v107 = vadd.f32 %v54, %v106
  %108 = vmatmul.f32.gmra.mxu0 %v32
  %v109 = vpop.f32.mrf.mxu0
  %v110 = vadd.f32 %v54, %v109
  %111 = vmatmul.f32.gmra.mxu0 %v33
  %v112 = vpop.f32.mrf.mxu0
  %v113 = vadd.f32 %v54, %v112
  %114 = vmatmul.f32.gmra.mxu0 %v34
  %v115 = vpop.f32.mrf.mxu0
  %v116 = vadd.f32 %v54, %v115
  %117 = vmatmul.f32.gmra.mxu0 %v35
  %v118 = vpop.f32.mrf.mxu0
  %v119 = vadd.f32 %v54, %v118
  %120 = vdwg.mxu0
  %v121 = vadd.f32 %v74, %v77
  %v122 = vadd.f32 %v121, %v80
  %v123 = vadd.f32 %v122, %v83
  %v124 = vadd.f32 %v123, %v86
  %v125 = vadd.f32 %v124, %v89
  %v126 = vadd.f32 %v125, %v92
  %v127 = vadd.f32 %v126, %v95
  %v128 = vadd.f32 %v127, %v98
  %v129 = vadd.f32 %v128, %v101
  %v130 = vadd.f32 %v129, %v104
  %v131 = vadd.f32 %v130, %v107
  %v132 = vadd.f32 %v131, %v110
  %v133 = vadd.f32 %v132, %v113
  %v134 = vadd.f32 %v133, %v116
  %v135 = vadd.f32 %v134, %v119
  %v136 = vrot.slane %v135, 4
  %v137 = vadd.f32 %v135, %v136
  %v138 = vrot.slane %v137, 2
  %v139 = vadd.f32 %v137, %v138
  %v140 = vrot.slane %v139, 1
  %v141 = vadd.f32 %v139, %v140
  %v142 = vrcp.pop 128.0
  %v143 = vmul.f32 128.0, %v142
  %v144 = vsub.f32 1.0, %v143
  %v145 = vmul.f32 %v142, %v144
  %v146 = vadd.f32 %v142, %v145
  %vm147 = vweird.f32 %v142
  %v148 = vsel %vm147, %v142, %v146
  %v149 = vmul.f32 %v141, %v148
  %v150 = vsub.f32 %v74, %v149
  %v151 = vsub.f32 %v77, %v149
  %v152 = vsub.f32 %v80, %v149
  %v153 = vsub.f32 %v83, %v149
  %v154 = vsub.f32 %v86, %v149
  %v155 = vsub.f32 %v89, %v149
  %v156 = vsub.f32 %v92, %v149
  %v157 = vsub.f32 %v95, %v149
  %v158 = vsub.f32 %v98, %v149
  %v159 = vsub.f32 %v101, %v149
  %v160 = vsub.f32 %v104, %v149
  %v161 = vsub.f32 %v107, %v149
  %v162 = vsub.f32 %v110, %v149
  %v163 = vsub.f32 %v113, %v149
  %v164 = vsub.f32 %v116, %v149
  %v165 = vsub.f32 %v119, %v149
  %v166 = vmul.f32 %v150, %v150
  %v167 = vmul.f32 %v151, %v151
  %v168 = vmul.f32 %v152, %v152
  %v169 = vmul.f32 %v153, %v153
  %v170 = vmul.f32 %v154, %v154
  %v171 = vmul.f32 %v155, %v155
  %v172 = vmul.f32 %v156, %v156
  %v173 = vmul.f32 %v157, %v157
  %v174 = vmul.f32 %v158, %v158
  %v175 = vmul.f32 %v159, %v159
  %v176 = vmul.f32 %v160, %v160
  %v177 = vmul.f32 %v161, %v161
  %v178 = vmul.f32 %v162, %v162
  %v179 = vmul.f32 %v163, %v163
  %v180 = vmul.f32 %v164, %v164
  %v181 = vmul.f32 %v165, %v165
  %v182 = vadd.f32 %v166, %v167
  %v183 = vadd.f32 %v182, %v168
  %v184 = vadd.f32 %v183, %v169
  %v185 = vadd.f32 %v184, %v170
  %v186 = vadd.f32 %v185, %v171
  %v187 = vadd.f32 %v186, %v172
  %v188 = vadd.f32 %v187, %v173
  %v189 = vadd.f32 %v188, %v174
  %v190 = vadd.f32 %v189, %v175
  %v191 = vadd.f32 %v190, %v176
  %v192 = vadd.f32 %v191, %v177
  %v193 = vadd.f32 %v192, %v178
  %v194 = vadd.f32 %v193, %v179
  %v195 = vadd.f32 %v194, %v180
  %v196 = vadd.f32 %v195, %v181
  %v197 = vrot.slane %v196, 4
  %v198 = vadd.f32 %v196, %v197
  %v199 = vrot.slane %v198, 2
  %v200 = vadd.f32 %v198, %v199
  %v201 = vrot.slane %v200, 1
  %v202 = vadd.f32 %v200, %v201
  %v203 = vmul.f32 %v202, %v148
  %v204 = vadd.f32 %v203, 1e-05
  %v205 = vrsqrt.pop %v204
  %v206 = vmul.f32 %v205, %v204
  %v207 = vmul.f32 %v206, %v205
  %v208 = vmul.f32 0.5, %v207
  %v209 = vsub.f32 1.5, %v208
  %v210 = vmul.f32 %v205, %v209
  %vm211 = vweird.f32 %v204
  %vm212 = vweird.f32 %v205
  %vm213 = vmor %vm211, %vm212
  %v214 = vsel %vm213, %v205, %v210
  %v215 = vmul.f32 %v150, %v214
  %v216 = vmul.f32 %v151, %v214
  %v217 = vmul.f32 %v152, %v214
  %v218 = vmul.f32 %v153, %v214
  %v219 = vmul.f32 %v154, %v214
  %v220 = vmul.f32 %v155, %v214
  %v221 = vmul.f32 %v156, %v214
  %v222 = vmul.f32 %v157, %v214
  %v223 = vmul.f32 %v158, %v214
  %v224 = vmul.f32 %v159, %v214
  %v225 = vmul.f32 %v160, %v214
  %v226 = vmul.f32 %v161, %v214
  %v227 = vmul.f32 %v162, %v214
  %v228 = vmul.f32 %v163, %v214
  %v229 = vmul.f32 %v164, %v214
  %v230 = vmul.f32 %v165, %v214
  %v231 = vld [vmem:[%s3] sm:$0x1]
  %v233 = vperm.slane %v231, 0
  %v235 = vmul.f32 %v215, %v233
  %v236 = vmul.f32 %v216, %v233
  %v237 = vmul.f32 %v217, %v233
  %v238 = vmul.f32 %v218, %v233
  %v239 = vmul.f32 %v219, %v233
  %v240 = vmul.f32 %v220, %v233
  %v241 = vmul.f32 %v221, %v233
  %v242 = vmul.f32 %v222, %v233
  %v243 = vmul.f32 %v223, %v233
  %v244 = vmul.f32 %v224, %v233
  %v245 = vmul.f32 %v225, %v233
  %v246 = vmul.f32 %v226, %v233
  %v247 = vmul.f32 %v227, %v233
  %v248 = vmul.f32 %v228, %v233
  %v249 = vmul.f32 %v229, %v233
  %v250 = vmul.f32 %v230, %v233
  %v251 = vld [vmem:[%s4] sm:$0x1]
  %v253 = vperm.slane %v251, 0
  %v255 = vadd.f32 %v235, %v253
  %v256 = vadd.f32 %v236, %v253
  %v257 = vadd.f32 %v237, %v253
  %v258 = vadd.f32 %v238, %v253
  %v259 = vadd.f32 %v239, %v253
  %v260 = vadd.f32 %v240, %v253
  %v261 = vadd.f32 %v241, %v253
  %v262 = vadd.f32 %v242, %v253
  %v263 = vadd.f32 %v243, %v253
  %v264 = vadd.f32 %v244, %v253
  %v265 = vadd.f32 %v245, %v253
  %v266 = vadd.f32 %v246, %v253
  %v267 = vadd.f32 %v247, %v253
  %v268 = vadd.f32 %v248, %v253
  %v269 = vadd.f32 %v249, %v253
  %v270 = vadd.f32 %v250, %v253
  %v271 = vmax.f32 %v255, 0.0
  %v272 = vmax.f32 %v256, 0.0
  %v273 = vmax.f32 %v257, 0.0
  %v274 = vmax.f32 %v258, 0.0
  %v275 = vmax.f32 %v259, 0.0
  %v276 = vmax.f32 %v260, 0.0
  %v277 = vmax.f32 %v261, 0.0
  %v278 = vmax.f32 %v262, 0.0
  %v279 = vmax.f32 %v263, 0.0
  %v280 = vmax.f32 %v264, 0.0
  %v281 = vmax.f32 %v265, 0.0
  %v282 = vmax.f32 %v266, 0.0
  %v283 = vmax.f32 %v267, 0.0
  %v284 = vmax.f32 %v268, 0.0
  %v285 = vmax.f32 %v269, 0.0
  %v286 = vmax.f32 %v270, 0.0
  %287 = vst [vmem:[%s5] sm:$0xff] %v271
  %288 = vst [vmem:[%s5 + $0x8] sm:$0xff] %v272
  %289 = vst [vmem:[%s5 + $0x10] sm:$0xff] %v273
  %290 = vst [vmem:[%s5 + $0x18] sm:$0xff] %v274
  %291 = vst [vmem:[%s5 + $0x20] sm:$0xff] %v275
  %292 = vst [vmem:[%s5 + $0x28] sm:$0xff] %v276
  %293 = vst [vmem:[%s5 + $0x30] sm:$0xff] %v277
  %294 = vst [vmem:[%s5 + $0x38] sm:$0xff] %v278
  %295 = vst [vmem:[%s5 + $0x40] sm:$0xff] %v279
  %296 = vst [vmem:[%s5 + $0x48] sm:$0xff] %v280
  %297 = vst [vmem:[%s5 + $0x50] sm:$0xff] %v281
  %298 = vst [vmem:[%s5 + $0x58] sm:$0xff] %v282
  %299 = vst [vmem:[%s5 + $0x60] sm:$0xff] %v283
  %300 = vst [vmem:[%s5 + $0x68] sm:$0xff] %v284
  %301 = vst [vmem:[%s5 + $0x70] sm:$0xff] %v285
  %302 = vst [vmem:[%s5 + $0x78] sm:$0xff] %v286
  // Predicated region
  $region22: #{generator_forward.11} parent=0 // pred_check
    _
  $region23: #{generator_forward.11} parent=0 // pred_check_branch
    %304 = sbr.rel (0) target = $region25
  $region24: #{generator_forward.11} parent=0 // pred_region
    _
  $region25: #{generator_forward.11} parent=0 // pred_fallthru
    _
  // Predicated region
  $region26: #{generator_forward.11} parent=0 // pred_check
    _
  $region27: #{generator_forward.11} parent=0 // pred_check_branch
    %306 = sbr.rel (0) target = $region29
  $region28: #{generator_forward.11} parent=0 // pred_region
    _
  $region29: #{generator_forward.11} parent=0 // pred_fallthru
    _

// kernel: generator_forward.10
$region0: #{generator_forward.10}
  #allocation0 [shape = 'u32[]', space=smem, size = 0x4, offset = 0x4, fixed_abs, tag = 'smem constant byte address 0x4 - core index']
  #allocation1 [shape = 'u32[72,128]{1,0:T(1,128)}', space=vmem, size = 0x9000, scoped, tag = 'internal scratch']
  %s0 = inlined_call_operand.vmem [shape: f32[512,256], index: 0, kind: input, shape index: {}]
  %s1 = inlined_call_operand.vmem [shape: f32[256,128], index: 1, kind: input, shape index: {}]
  %s2 = inlined_call_operand.vmem [shape: f32[1,128], index: 2, kind: input, shape index: {}]
  %s3 = inlined_call_operand.vmem [shape: f32[1,128], index: 3, kind: input, shape index: {}]
  %s4 = inlined_call_operand.vmem [shape: f32[1,128], index: 4, kind: input, shape index: {}]
  %s5 = inlined_call_operand.vmem [shape: f32[512,128], index: 5, kind: output, shape index: {}]
  %s6 = sld [smem:[#allocation0]]
  $region30: #{generator_forward.10} parent=0
    _
  %s8 = ssub.s32 1, %s6
  %s9 = scalar_select 0, %s8, %s6
  // Predicated region
  $region2: #{generator_forward.10} parent=0 // pred_check
    _
  $region3: #{generator_forward.10} parent=0 // pred_check_branch
    %11 = sbr.rel (0) target = $region5
  $region4: #{generator_forward.10} parent=0 // pred_region
    _
  $region5: #{generator_forward.10} parent=0 // pred_fallthru
    _
  // Predicated region
  $region6: #{generator_forward.10} parent=0 // pred_check
    _
  $region7: #{generator_forward.10} parent=0 // pred_check_branch
    %13 = sbr.rel (0) target = $region9
  $region8: #{generator_forward.10} parent=0 // pred_region
    _
  $region9: #{generator_forward.10} parent=0 // pred_fallthru
    _
  // Predicated region
  $region10: #{generator_forward.10} parent=0 // pred_check
    _
  $region11: #{generator_forward.10} parent=0 // pred_check_branch
    %15 = sbr.rel (0) target = $region13
  $region12: #{generator_forward.10} parent=0 // pred_region
    _
  $region13: #{generator_forward.10} parent=0 // pred_fallthru
    _
  // Predicated region
  $region14: #{generator_forward.10} parent=0 // pred_check
    _
  $region15: #{generator_forward.10} parent=0 // pred_check_branch
    %17 = sbr.rel (0) target = $region17
  $region16: #{generator_forward.10} parent=0 // pred_region
    _
  $region17: #{generator_forward.10} parent=0 // pred_fallthru
    _
  // Predicated region
  $region18: #{generator_forward.10} parent=0 // pred_check
    _
  $region19: #{generator_forward.10} parent=0 // pred_check_branch
    %19 = sbr.rel (0) target = $region21
  $region20: #{generator_forward.10} parent=0 // pred_region
    _
  $region21: #{generator_forward.10} parent=0 // pred_fallthru
    _
  %v20 = vld [vmem:[%s0] sm:$0xff]
  %v21 = vld [vmem:[%s0 + $0x8] sm:$0xff]
  %v22 = vld [vmem:[%s0 + $0x10] sm:$0xff]
  %v23 = vld [vmem:[%s0 + $0x18] sm:$0xff]
  %v24 = vld [vmem:[%s0 + $0x20] sm:$0xff]
  %v25 = vld [vmem:[%s0 + $0x28] sm:$0xff]
  %v26 = vld [vmem:[%s0 + $0x30] sm:$0xff]
  %v27 = vld [vmem:[%s0 + $0x38] sm:$0xff]
  %v28 = vld [vmem:[%s0 + $0x40] sm:$0xff]
  %v29 = vld [vmem:[%s0 + $0x48] sm:$0xff]
  %v30 = vld [vmem:[%s0 + $0x50] sm:$0xff]
  %v31 = vld [vmem:[%s0 + $0x58] sm:$0xff]
  %v32 = vld [vmem:[%s0 + $0x60] sm:$0xff]
  %v33 = vld [vmem:[%s0 + $0x68] sm:$0xff]
  %v34 = vld [vmem:[%s0 + $0x70] sm:$0xff]
  %v35 = vld [vmem:[%s0 + $0x78] sm:$0xff]
  %v36 = vld [vmem:[%s0 + $0x80] sm:$0xff]
  %v37 = vld [vmem:[%s0 + $0x88] sm:$0xff]
  %v38 = vld [vmem:[%s0 + $0x90] sm:$0xff]
  %v39 = vld [vmem:[%s0 + $0x98] sm:$0xff]
  %v40 = vld [vmem:[%s0 + $0xa0] sm:$0xff]
  %v41 = vld [vmem:[%s0 + $0xa8] sm:$0xff]
  %v42 = vld [vmem:[%s0 + $0xb0] sm:$0xff]
  %v43 = vld [vmem:[%s0 + $0xb8] sm:$0xff]
  %v44 = vld [vmem:[%s0 + $0xc0] sm:$0xff]
  %v45 = vld [vmem:[%s0 + $0xc8] sm:$0xff]
  %v46 = vld [vmem:[%s0 + $0xd0] sm:$0xff]
  %v47 = vld [vmem:[%s0 + $0xd8] sm:$0xff]
  %v48 = vld [vmem:[%s0 + $0xe0] sm:$0xff]
  %v49 = vld [vmem:[%s0 + $0xe8] sm:$0xff]
  %v50 = vld [vmem:[%s0 + $0xf0] sm:$0xff]
  %v51 = vld [vmem:[%s0 + $0xf8] sm:$0xff]
  %v52 = vld [vmem:[%s0 + $0x100] sm:$0xff]
  %v53 = vld [vmem:[%s0 + $0x108] sm:$0xff]
  %v54 = vld [vmem:[%s0 + $0x110] sm:$0xff]
  %v55 = vld [vmem:[%s0 + $0x118] sm:$0xff]
  %v56 = vld [vmem:[%s0 + $0x120] sm:$0xff]
  %v57 = vld [vmem:[%s0 + $0x128] sm:$0xff]
  %v58 = vld [vmem:[%s0 + $0x130] sm:$0xff]
  %v59 = vld [vmem:[%s0 + $0x138] sm:$0xff]
  %v60 = vld [vmem:[%s0 + $0x140] sm:$0xff]
  %v61 = vld [vmem:[%s0 + $0x148] sm:$0xff]
  %v62 = vld [vmem:[%s0 + $0x150] sm:$0xff]
  %v63 = vld [vmem:[%s0 + $0x158] sm:$0xff]
  %v64 = vld [vmem:[%s0 + $0x160] sm:$0xff]
  %v65 = vld [vmem:[%s0 + $0x168] sm:$0xff]
  %v66 = vld [vmem:[%s0 + $0x170] sm:$0xff]
  %v67 = vld [vmem:[%s0 + $0x178] sm:$0xff]
  %v68 = vld [vmem:[%s0 + $0x180] sm:$0xff]
  %v69 = vld [vmem:[%s0 + $0x188] sm:$0xff]
  %v70 = vld [vmem:[%s0 + $0x190] sm:$0xff]
  %v71 = vld [vmem:[%s0 + $0x198] sm:$0xff]
  %v72 = vld [vmem:[%s0 + $0x1a0] sm:$0xff]
  %v73 = vld [vmem:[%s0 + $0x1a8] sm:$0xff]
  %v74 = vld [vmem:[%s0 + $0x1b0] sm:$0xff]
  %v75 = vld [vmem:[%s0 + $0x1b8] sm:$0xff]
  %v76 = vld [vmem:[%s0 + $0x1c0] sm:$0xff]
  %v77 = vld [vmem:[%s0 + $0x1c8] sm:$0xff]
  %v78 = vld [vmem:[%s0 + $0x1d0] sm:$0xff]
  %v79 = vld [vmem:[%s0 + $0x1d8] sm:$0xff]
  %v80 = vld [vmem:[%s0 + $0x1e0] sm:$0xff]
  %v81 = vld [vmem:[%s0 + $0x1e8] sm:$0xff]
  %v82 = vld [vmem:[%s0 + $0x1f0] sm:$0xff]
  %v83 = vld [vmem:[%s0 + $0x1f8] sm:$0xff]
  %v84 = vld [vmem:[%s0 + $0x200] sm:$0xff]
  %v85 = vld [vmem:[%s0 + $0x208] sm:$0xff]
  %v86 = vld [vmem:[%s0 + $0x210] sm:$0xff]
  %v87 = vld [vmem:[%s0 + $0x218] sm:$0xff]
  %v88 = vld [vmem:[%s0 + $0x220] sm:$0xff]
  %v89 = vld [vmem:[%s0 + $0x228] sm:$0xff]
  %v90 = vld [vmem:[%s0 + $0x230] sm:$0xff]
  %v91 = vld [vmem:[%s0 + $0x238] sm:$0xff]
  %v92 = vld [vmem:[%s0 + $0x240] sm:$0xff]
  %v93 = vld [vmem:[%s0 + $0x248] sm:$0xff]
  %v94 = vld [vmem:[%s0 + $0x250] sm:$0xff]
  %v95 = vld [vmem:[%s0 + $0x258] sm:$0xff]
  %v96 = vld [vmem:[%s0 + $0x260] sm:$0xff]
  %v97 = vld [vmem:[%s0 + $0x268] sm:$0xff]
  %v98 = vld [vmem:[%s0 + $0x270] sm:$0xff]
  %v99 = vld [vmem:[%s0 + $0x278] sm:$0xff]
  %v100 = vld [vmem:[%s0 + $0x280] sm:$0xff]
  %v101 = vld [vmem:[%s0 + $0x288] sm:$0xff]
  %v102 = vld [vmem:[%s0 + $0x290] sm:$0xff]
  %v103 = vld [vmem:[%s0 + $0x298] sm:$0xff]
  %v104 = vld [vmem:[%s0 + $0x2a0] sm:$0xff]
  %v105 = vld [vmem:[%s0 + $0x2a8] sm:$0xff]
  %v106 = vld [vmem:[%s0 + $0x2b0] sm:$0xff]
  %v107 = vld [vmem:[%s0 + $0x2b8] sm:$0xff]
  %v108 = vld [vmem:[%s0 + $0x2c0] sm:$0xff]
  %v109 = vld [vmem:[%s0 + $0x2c8] sm:$0xff]
  %v110 = vld [vmem:[%s0 + $0x2d0] sm:$0xff]
  %v111 = vld [vmem:[%s0 + $0x2d8] sm:$0xff]
  %v112 = vld [vmem:[%s0 + $0x2e0] sm:$0xff]
  %v113 = vld [vmem:[%s0 + $0x2e8] sm:$0xff]
  %v114 = vld [vmem:[%s0 + $0x2f0] sm:$0xff]
  %v115 = vld [vmem:[%s0 + $0x2f8] sm:$0xff]
  %v116 = vld [vmem:[%s0 + $0x300] sm:$0xff]
  %v117 = vld [vmem:[%s0 + $0x308] sm:$0xff]
  %v118 = vld [vmem:[%s0 + $0x310] sm:$0xff]
  %v119 = vld [vmem:[%s0 + $0x318] sm:$0xff]
  %v120 = vld [vmem:[%s0 + $0x320] sm:$0xff]
  %v121 = vld [vmem:[%s0 + $0x328] sm:$0xff]
  %v122 = vld [vmem:[%s0 + $0x330] sm:$0xff]
  %v123 = vld [vmem:[%s0 + $0x338] sm:$0xff]
  %v124 = vld [vmem:[%s0 + $0x340] sm:$0xff]
  %v125 = vld [vmem:[%s0 + $0x348] sm:$0xff]
  %v126 = vld [vmem:[%s0 + $0x350] sm:$0xff]
  %v127 = vld [vmem:[%s0 + $0x358] sm:$0xff]
  %v128 = vld [vmem:[%s0 + $0x360] sm:$0xff]
  %v129 = vld [vmem:[%s0 + $0x368] sm:$0xff]
  %v130 = vld [vmem:[%s0 + $0x370] sm:$0xff]
  %v131 = vld [vmem:[%s0 + $0x378] sm:$0xff]
  %v132 = vld [vmem:[%s0 + $0x380] sm:$0xff]
  %v133 = vld [vmem:[%s0 + $0x388] sm:$0xff]
  %v134 = vld [vmem:[%s0 + $0x390] sm:$0xff]
  %v135 = vld [vmem:[%s0 + $0x398] sm:$0xff]
  %v136 = vld [vmem:[%s0 + $0x3a0] sm:$0xff]
  %v137 = vld [vmem:[%s0 + $0x3a8] sm:$0xff]
  %v138 = vld [vmem:[%s0 + $0x3b0] sm:$0xff]
  %v139 = vld [vmem:[%s0 + $0x3b8] sm:$0xff]
  %v140 = vld [vmem:[%s0 + $0x3c0] sm:$0xff]
  %v141 = vld [vmem:[%s0 + $0x3c8] sm:$0xff]
  %v142 = vld [vmem:[%s0 + $0x3d0] sm:$0xff]
  %v143 = vld [vmem:[%s0 + $0x3d8] sm:$0xff]
  %v144 = vld [vmem:[%s0 + $0x3e0] sm:$0xff]
  %v145 = vld [vmem:[%s0 + $0x3e8] sm:$0xff]
  %v146 = vld [vmem:[%s0 + $0x3f0] sm:$0xff]
  %v147 = vld [vmem:[%s0 + $0x3f8] sm:$0xff]
  %v148 = vld [vmem:[%s1] sm:$0xff]
  %v149 = vld [vmem:[%s1 + $0x8] sm:$0xff]
  %v150 = vld [vmem:[%s1 + $0x10] sm:$0xff]
  %v151 = vld [vmem:[%s1 + $0x18] sm:$0xff]
  %v152 = vld [vmem:[%s1 + $0x20] sm:$0xff]
  %v153 = vld [vmem:[%s1 + $0x28] sm:$0xff]
  %v154 = vld [vmem:[%s1 + $0x30] sm:$0xff]
  %v155 = vld [vmem:[%s1 + $0x38] sm:$0xff]
  %v156 = vld [vmem:[%s1 + $0x40] sm:$0xff]
  %v157 = vld [vmem:[%s1 + $0x48] sm:$0xff]
  %v158 = vld [vmem:[%s1 + $0x50] sm:$0xff]
  %v159 = vld [vmem:[%s1 + $0x58] sm:$0xff]
  %v160 = vld [vmem:[%s1 + $0x60] sm:$0xff]
  %v161 = vld [vmem:[%s1 + $0x68] sm:$0xff]
  %v162 = vld [vmem:[%s1 + $0x70] sm:$0xff]
  %v163 = vld [vmem:[%s1 + $0x78] sm:$0xff]
  %v164 = vld [vmem:[%s1 + $0x80] sm:$0xff]
  %v165 = vld [vmem:[%s1 + $0x88] sm:$0xff]
  %v166 = vld [vmem:[%s1 + $0x90] sm:$0xff]
  %v167 = vld [vmem:[%s1 + $0x98] sm:$0xff]
  %v168 = vld [vmem:[%s1 + $0xa0] sm:$0xff]
  %v169 = vld [vmem:[%s1 + $0xa8] sm:$0xff]
  %v170 = vld [vmem:[%s1 + $0xb0] sm:$0xff]
  %v171 = vld [vmem:[%s1 + $0xb8] sm:$0xff]
  %v172 = vld [vmem:[%s1 + $0xc0] sm:$0xff]
  %v173 = vld [vmem:[%s1 + $0xc8] sm:$0xff]
  %v174 = vld [vmem:[%s1 + $0xd0] sm:$0xff]
  %v175 = vld [vmem:[%s1 + $0xd8] sm:$0xff]
  %v176 = vld [vmem:[%s1 + $0xe0] sm:$0xff]
  %v177 = vld [vmem:[%s1 + $0xe8] sm:$0xff]
  %v178 = vld [vmem:[%s1 + $0xf0] sm:$0xff]
  %v179 = vld [vmem:[%s1 + $0xf8] sm:$0xff]
  %v180 = vld [vmem:[%s2] sm:$0x1]
  %v182 = vperm.slane %v180, 0
  %184 = vmatpush.msra.mxu0 %v163
  %185 = vmatpush.msra.mxu0 %v162
  %186 = vmatpush.msra.mxu0 %v161
  %187 = vmatpush.msra.mxu0 %v160
  %188 = vmatpush.msra.mxu0 %v159
  %189 = vmatpush.msra.mxu0 %v158
  %190 = vmatpush.msra.mxu0 %v157
  %191 = vmatpush.msra.mxu0 %v156
  %192 = vmatpush.msra.mxu0 %v155
  %193 = vmatpush.msra.mxu0 %v154
  %194 = vmatpush.msra.mxu0 %v153
  %195 = vmatpush.msra.mxu0 %v152
  %196 = vmatpush.msra.mxu0 %v151
  %197 = vmatpush.msra.mxu0 %v150
  %198 = vmatpush.msra.mxu0 %v149
  %199 = vmatpush.msra.mxu0 %v148
  %200 = vmatmul.f32.gmra.mxu0 %v20
  %v201 = vpop.f32.mrf.mxu0
  %v202 = vadd.f32 %v182, %v201
  %203 = vmatmul.f32.gmra.mxu0 %v22
  %v204 = vpop.f32.mrf.mxu0
  %v205 = vadd.f32 %v182, %v204
  %206 = vmatmul.f32.gmra.mxu0 %v24
  %v207 = vpop.f32.mrf.mxu0
  %v208 = vadd.f32 %v182, %v207
  %209 = vmatmul.f32.gmra.mxu0 %v26
  %v210 = vpop.f32.mrf.mxu0
  %v211 = vadd.f32 %v182, %v210
  %212 = vmatmul.f32.gmra.mxu0 %v28
  %v213 = vpop.f32.mrf.mxu0
  %v214 = vadd.f32 %v182, %v213
  %215 = vmatmul.f32.gmra.mxu0 %v30
  %v216 = vpop.f32.mrf.mxu0
  %v217 = vadd.f32 %v182, %v216
  %218 = vmatmul.f32.gmra.mxu0 %v32
  %v219 = vpop.f32.mrf.mxu0
  %v220 = vadd.f32 %v182, %v219
  %221 = vmatmul.f32.gmra.mxu0 %v34
  %v222 = vpop.f32.mrf.mxu0
  %v223 = vadd.f32 %v182, %v222
  %224 = vmatmul.f32.gmra.mxu0 %v36
  %v225 = vpop.f32.mrf.mxu0
  %v226 = vadd.f32 %v182, %v225
  %227 = vmatmul.f32.gmra.mxu0 %v38
  %v228 = vpop.f32.mrf.mxu0
  %v229 = vadd.f32 %v182, %v228
  %230 = vmatmul.f32.gmra.mxu0 %v40
  %v231 = vpop.f32.mrf.mxu0
  %v232 = vadd.f32 %v182, %v231
  %233 = vmatmul.f32.gmra.mxu0 %v42
  %v234 = vpop.f32.mrf.mxu0
  %v235 = vadd.f32 %v182, %v234
  %236 = vmatmul.f32.gmra.mxu0 %v44
  %v237 = vpop.f32.mrf.mxu0
  %v238 = vadd.f32 %v182, %v237
  %239 = vmatmul.f32.gmra.mxu0 %v46
  %v240 = vpop.f32.mrf.mxu0
  %v241 = vadd.f32 %v182, %v240
  %242 = vmatmul.f32.gmra.mxu0 %v48
  %v243 = vpop.f32.mrf.mxu0
  %v244 = vadd.f32 %v182, %v243
  %245 = vmatmul.f32.gmra.mxu0 %v50
  %v246 = vpop.f32.mrf.mxu0
  %v247 = vadd.f32 %v182, %v246
  %248 = vmatmul.f32.gmra.mxu0 %v52
  %v249 = vpop.f32.mrf.mxu0
  %v250 = vadd.f32 %v182, %v249
  %251 = vmatmul.f32.gmra.mxu0 %v54
  %v252 = vpop.f32.mrf.mxu0
  %v253 = vadd.f32 %v182, %v252
  %254 = vmatmul.f32.gmra.mxu0 %v56
  %v255 = vpop.f32.mrf.mxu0
  %v256 = vadd.f32 %v182, %v255
  %257 = vmatmul.f32.gmra.mxu0 %v58
  %v258 = vpop.f32.mrf.mxu0
  %v259 = vadd.f32 %v182, %v258
  %260 = vmatmul.f32.gmra.mxu0 %v60
  %v261 = vpop.f32.mrf.mxu0
  %v262 = vadd.f32 %v182, %v261
  %263 = vmatmul.f32.gmra.mxu0 %v62
  %v264 = vpop.f32.mrf.mxu0
  %v265 = vadd.f32 %v182, %v264
  %266 = vmatmul.f32.gmra.mxu0 %v64
  %v267 = vpop.f32.mrf.mxu0
  %v268 = vadd.f32 %v182, %v267
  %269 = vmatmul.f32.gmra.mxu0 %v66
  %v270 = vpop.f32.mrf.mxu0
  %v271 = vadd.f32 %v182, %v270
  %272 = vmatmul.f32.gmra.mxu0 %v68
  %v273 = vpop.f32.mrf.mxu0
  %v274 = vadd.f32 %v182, %v273
  %275 = vmatmul.f32.gmra.mxu0 %v70
  %v276 = vpop.f32.mrf.mxu0
  %v277 = vadd.f32 %v182, %v276
  %278 = vmatmul.f32.gmra.mxu0 %v72
  %v279 = vpop.f32.mrf.mxu0
  %v280 = vadd.f32 %v182, %v279
  %281 = vmatmul.f32.gmra.mxu0 %v74
  %v282 = vpop.f32.mrf.mxu0
  %v283 = vadd.f32 %v182, %v282
  %284 = vmatmul.f32.gmra.mxu0 %v76
  %v285 = vpop.f32.mrf.mxu0
  %v286 = vadd.f32 %v182, %v285
  %287 = vmatmul.f32.gmra.mxu0 %v78
  %v288 = vpop.f32.mrf.mxu0
  %v289 = vadd.f32 %v182, %v288
  %290 = vmatmul.f32.gmra.mxu0 %v80
  %v291 = vpop.f32.mrf.mxu0
  %v292 = vadd.f32 %v182, %v291
  %293 = vmatmul.f32.gmra.mxu0 %v82
  %v294 = vpop.f32.mrf.mxu0
  %v295 = vadd.f32 %v182, %v294
  %296 = vmatmul.f32.gmra.mxu0 %v84
  %v297 = vpop.f32.mrf.mxu0
  %v298 = vadd.f32 %v182, %v297
  %299 = vmatmul.f32.gmra.mxu0 %v86
  %v300 = vpop.f32.mrf.mxu0
  %v301 = vadd.f32 %v182, %v300
  %302 = vmatmul.f32.gmra.mxu0 %v88
  %v303 = vpop.f32.mrf.mxu0
  %v304 = vadd.f32 %v182, %v303
  %305 = vmatmul.f32.gmra.mxu0 %v90
  %v306 = vpop.f32.mrf.mxu0
  %v307 = vadd.f32 %v182, %v306
  %308 = vmatmul.f32.gmra.mxu0 %v92
  %v309 = vpop.f32.mrf.mxu0
  %v310 = vadd.f32 %v182, %v309
  %311 = vmatmul.f32.gmra.mxu0 %v94
  %v312 = vpop.f32.mrf.mxu0
  %v313 = vadd.f32 %v182, %v312
  %314 = vmatmul.f32.gmra.mxu0 %v96
  %v315 = vpop.f32.mrf.mxu0
  %v316 = vadd.f32 %v182, %v315
  %317 = vmatmul.f32.gmra.mxu0 %v98
  %v318 = vpop.f32.mrf.mxu0
  %v319 = vadd.f32 %v182, %v318
  %320 = vmatmul.f32.gmra.mxu0 %v100
  %v321 = vpop.f32.mrf.mxu0
  %v322 = vadd.f32 %v182, %v321
  %323 = vmatmul.f32.gmra.mxu0 %v102
  %v324 = vpop.f32.mrf.mxu0
  %v325 = vadd.f32 %v182, %v324
  %326 = vmatmul.f32.gmra.mxu0 %v104
  %v327 = vpop.f32.mrf.mxu0
  %v328 = vadd.f32 %v182, %v327
  %329 = vmatmul.f32.gmra.mxu0 %v106
  %v330 = vpop.f32.mrf.mxu0
  %v331 = vadd.f32 %v182, %v330
  %332 = vmatmul.f32.gmra.mxu0 %v108
  %v333 = vpop.f32.mrf.mxu0
  %v334 = vadd.f32 %v182, %v333
  %335 = vmatmul.f32.gmra.mxu0 %v110
  %v336 = vpop.f32.mrf.mxu0
  %v337 = vadd.f32 %v182, %v336
  %338 = vmatmul.f32.gmra.mxu0 %v112
  %v339 = vpop.f32.mrf.mxu0
  %v340 = vadd.f32 %v182, %v339
  %341 = vmatmul.f32.gmra.mxu0 %v114
  %v342 = vpop.f32.mrf.mxu0
  %v343 = vadd.f32 %v182, %v342
  %344 = vmatmul.f32.gmra.mxu0 %v116
  %v345 = vpop.f32.mrf.mxu0
  %v346 = vadd.f32 %v182, %v345
  %347 = vmatmul.f32.gmra.mxu0 %v118
  %v348 = vpop.f32.mrf.mxu0
  %v349 = vadd.f32 %v182, %v348
  %350 = vmatmul.f32.gmra.mxu0 %v120
  %v351 = vpop.f32.mrf.mxu0
  %v352 = vadd.f32 %v182, %v351
  %353 = vmatmul.f32.gmra.mxu0 %v122
  %v354 = vpop.f32.mrf.mxu0
  %v355 = vadd.f32 %v182, %v354
  %356 = vmatmul.f32.gmra.mxu0 %v124
  %v357 = vpop.f32.mrf.mxu0
  %v358 = vadd.f32 %v182, %v357
  %359 = vmatmul.f32.gmra.mxu0 %v126
  %v360 = vpop.f32.mrf.mxu0
  %v361 = vadd.f32 %v182, %v360
  %362 = vmatmul.f32.gmra.mxu0 %v128
  %v363 = vpop.f32.mrf.mxu0
  %v364 = vadd.f32 %v182, %v363
  %365 = vmatmul.f32.gmra.mxu0 %v130
  %v366 = vpop.f32.mrf.mxu0
  %v367 = vadd.f32 %v182, %v366
  %368 = vmatmul.f32.gmra.mxu0 %v132
  %v369 = vpop.f32.mrf.mxu0
  %v370 = vadd.f32 %v182, %v369
  %371 = vmatmul.f32.gmra.mxu0 %v134
  %v372 = vpop.f32.mrf.mxu0
  %v373 = vadd.f32 %v182, %v372
  %374 = vmatmul.f32.gmra.mxu0 %v136
  %v375 = vpop.f32.mrf.mxu0
  %v376 = vadd.f32 %v182, %v375
  %377 = vmatmul.f32.gmra.mxu0 %v138
  %v378 = vpop.f32.mrf.mxu0
  %v379 = vadd.f32 %v182, %v378
  %380 = vmatmul.f32.gmra.mxu0 %v140
  %v381 = vpop.f32.mrf.mxu0
  %v382 = vadd.f32 %v182, %v381
  %383 = vmatmul.f32.gmra.mxu0 %v142
  %v384 = vpop.f32.mrf.mxu0
  %v385 = vadd.f32 %v182, %v384
  %386 = vmatmul.f32.gmra.mxu0 %v144
  %v387 = vpop.f32.mrf.mxu0
  %v388 = vadd.f32 %v182, %v387
  %389 = vmatmul.f32.gmra.mxu0 %v146
  %v390 = vpop.f32.mrf.mxu0
  %v391 = vadd.f32 %v182, %v390
  %392 = vdwg.mxu0
  %393 = vmatpush.msra.mxu0 %v179
  %394 = vmatpush.msra.mxu0 %v178
  %395 = vmatpush.msra.mxu0 %v177
  %396 = vmatpush.msra.mxu0 %v176
  %397 = vmatpush.msra.mxu0 %v175
  %398 = vmatpush.msra.mxu0 %v174
  %399 = vmatpush.msra.mxu0 %v173
  %400 = vmatpush.msra.mxu0 %v172
  %401 = vmatpush.msra.mxu0 %v171
  %402 = vmatpush.msra.mxu0 %v170
  %403 = vmatpush.msra.mxu0 %v169
  %404 = vmatpush.msra.mxu0 %v168
  %405 = vmatpush.msra.mxu0 %v167
  %406 = vmatpush.msra.mxu0 %v166
  %407 = vmatpush.msra.mxu0 %v165
  %408 = vmatpush.msra.mxu0 %v164
  %409 = vmatmul.f32.gmra.mxu0 %v21
  %v410 = vpop.f32.mrf.mxu0
  %v411 = vadd.f32 %v202, %v410
  %412 = vmatmul.f32.gmra.mxu0 %v23
  %v413 = vpop.f32.mrf.mxu0
  %v414 = vadd.f32 %v205, %v413
  %415 = vmatmul.f32.gmra.mxu0 %v25
  %v416 = vpop.f32.mrf.mxu0
  %v417 = vadd.f32 %v208, %v416
  %418 = vmatmul.f32.gmra.mxu0 %v27
  %v419 = vpop.f32.mrf.mxu0
  %v420 = vadd.f32 %v211, %v419
  %421 = vmatmul.f32.gmra.mxu0 %v29
  %v422 = vpop.f32.mrf.mxu0
  %v423 = vadd.f32 %v214, %v422
  %424 = vmatmul.f32.gmra.mxu0 %v31
  %v425 = vpop.f32.mrf.mxu0
  %v426 = vadd.f32 %v217, %v425
  %427 = vmatmul.f32.gmra.mxu0 %v33
  %v428 = vpop.f32.mrf.mxu0
  %v429 = vadd.f32 %v220, %v428
  %430 = vmatmul.f32.gmra.mxu0 %v35
  %v431 = vpop.f32.mrf.mxu0
  %v432 = vadd.f32 %v223, %v431
  %433 = vmatmul.f32.gmra.mxu0 %v37
  %v434 = vpop.f32.mrf.mxu0
  %v435 = vadd.f32 %v226, %v434
  %436 = vmatmul.f32.gmra.mxu0 %v39
  %v437 = vpop.f32.mrf.mxu0
  %v438 = vadd.f32 %v229, %v437
  %439 = vmatmul.f32.gmra.mxu0 %v41
  %v440 = vpop.f32.mrf.mxu0
  %v441 = vadd.f32 %v232, %v440
  %442 = vmatmul.f32.gmra.mxu0 %v43
  %v443 = vpop.f32.mrf.mxu0
  %v444 = vadd.f32 %v235, %v443
  %445 = vmatmul.f32.gmra.mxu0 %v45
  %v446 = vpop.f32.mrf.mxu0
  %v447 = vadd.f32 %v238, %v446
  %448 = vmatmul.f32.gmra.mxu0 %v47
  %v449 = vpop.f32.mrf.mxu0
  %v450 = vadd.f32 %v241, %v449
  %451 = vmatmul.f32.gmra.mxu0 %v49
  %v452 = vpop.f32.mrf.mxu0
  %v453 = vadd.f32 %v244, %v452
  %454 = vmatmul.f32.gmra.mxu0 %v51
  %v455 = vpop.f32.mrf.mxu0
  %v456 = vadd.f32 %v247, %v455
  %457 = vmatmul.f32.gmra.mxu0 %v53
  %v458 = vpop.f32.mrf.mxu0
  %v459 = vadd.f32 %v250, %v458
  %460 = vmatmul.f32.gmra.mxu0 %v55
  %v461 = vpop.f32.mrf.mxu0
  %v462 = vadd.f32 %v253, %v461
  %463 = vmatmul.f32.gmra.mxu0 %v57
  %v464 = vpop.f32.mrf.mxu0
  %v465 = vadd.f32 %v256, %v464
  %466 = vmatmul.f32.gmra.mxu0 %v59
  %v467 = vpop.f32.mrf.mxu0
  %v468 = vadd.f32 %v259, %v467
  %469 = vmatmul.f32.gmra.mxu0 %v61
  %v470 = vpop.f32.mrf.mxu0
  %v471 = vadd.f32 %v262, %v470
  %472 = vmatmul.f32.gmra.mxu0 %v63
  %v473 = vpop.f32.mrf.mxu0
  %v474 = vadd.f32 %v265, %v473
  %475 = vmatmul.f32.gmra.mxu0 %v65
  %v476 = vpop.f32.mrf.mxu0
  %v477 = vadd.f32 %v268, %v476
  %478 = vmatmul.f32.gmra.mxu0 %v67
  %v479 = vpop.f32.mrf.mxu0
  %v480 = vadd.f32 %v271, %v479
  %481 = vmatmul.f32.gmra.mxu0 %v69
  %v482 = vpop.f32.mrf.mxu0
  %v483 = vadd.f32 %v274, %v482
  %484 = vmatmul.f32.gmra.mxu0 %v71
  %v485 = vpop.f32.mrf.mxu0
  %v486 = vadd.f32 %v277, %v485
  %487 = vmatmul.f32.gmra.mxu0 %v73
  %v488 = vpop.f32.mrf.mxu0
  %v489 = vadd.f32 %v280, %v488
  %490 = vmatmul.f32.gmra.mxu0 %v75
  %v491 = vpop.f32.mrf.mxu0
  %v492 = vadd.f32 %v283, %v491
  %493 = vmatmul.f32.gmra.mxu0 %v77
  %v494 = vpop.f32.mrf.mxu0
  %v495 = vadd.f32 %v286, %v494
  %496 = vmatmul.f32.gmra.mxu0 %v79
  %v497 = vpop.f32.mrf.mxu0
  %v498 = vadd.f32 %v289, %v497
  %499 = vmatmul.f32.gmra.mxu0 %v81
  %v500 = vpop.f32.mrf.mxu0
  %v501 = vadd.f32 %v292, %v500
  %502 = vmatmul.f32.gmra.mxu0 %v83
  %v503 = vpop.f32.mrf.mxu0
  %v504 = vadd.f32 %v295, %v503
  %505 = vmatmul.f32.gmra.mxu0 %v85
  %v506 = vpop.f32.mrf.mxu0
  %v507 = vadd.f32 %v298, %v506
  %508 = vmatmul.f32.gmra.mxu0 %v87
  %v509 = vpop.f32.mrf.mxu0
  %v510 = vadd.f32 %v301, %v509
  %511 = vmatmul.f32.gmra.mxu0 %v89
  %v512 = vpop.f32.mrf.mxu0
  %v513 = vadd.f32 %v304, %v512
  %514 = vmatmul.f32.gmra.mxu0 %v91
  %v515 = vpop.f32.mrf.mxu0
  %v516 = vadd.f32 %v307, %v515
  %517 = vmatmul.f32.gmra.mxu0 %v93
  %v518 = vpop.f32.mrf.mxu0
  %v519 = vadd.f32 %v310, %v518
  %520 = vmatmul.f32.gmra.mxu0 %v95
  %v521 = vpop.f32.mrf.mxu0
  %v522 = vadd.f32 %v313, %v521
  %523 = vmatmul.f32.gmra.mxu0 %v97
  %v524 = vpop.f32.mrf.mxu0
  %v525 = vadd.f32 %v316, %v524
  %526 = vmatmul.f32.gmra.mxu0 %v99
  %v527 = vpop.f32.mrf.mxu0
  %v528 = vadd.f32 %v319, %v527
  %529 = vmatmul.f32.gmra.mxu0 %v101
  %v530 = vpop.f32.mrf.mxu0
  %v531 = vadd.f32 %v322, %v530
  %532 = vmatmul.f32.gmra.mxu0 %v103
  %v533 = vpop.f32.mrf.mxu0
  %v534 = vadd.f32 %v325, %v533
  %535 = vmatmul.f32.gmra.mxu0 %v105
  %v536 = vpop.f32.mrf.mxu0
  %v537 = vadd.f32 %v328, %v536
  %538 = vmatmul.f32.gmra.mxu0 %v107
  %v539 = vpop.f32.mrf.mxu0
  %v540 = vadd.f32 %v331, %v539
  %541 = vmatmul.f32.gmra.mxu0 %v109
  %v542 = vpop.f32.mrf.mxu0
  %v543 = vadd.f32 %v334, %v542
  %544 = vmatmul.f32.gmra.mxu0 %v111
  %v545 = vpop.f32.mrf.mxu0
  %v546 = vadd.f32 %v337, %v545
  %547 = vmatmul.f32.gmra.mxu0 %v113
  %v548 = vpop.f32.mrf.mxu0
  %v549 = vadd.f32 %v340, %v548
  %550 = vmatmul.f32.gmra.mxu0 %v115
  %v551 = vpop.f32.mrf.mxu0
  %v552 = vadd.f32 %v343, %v551
  %553 = vmatmul.f32.gmra.mxu0 %v117
  %v554 = vpop.f32.mrf.mxu0
  %v555 = vadd.f32 %v346, %v554
  %556 = vmatmul.f32.gmra.mxu0 %v119
  %v557 = vpop.f32.mrf.mxu0
  %v558 = vadd.f32 %v349, %v557
  %559 = vmatmul.f32.gmra.mxu0 %v121
  %v560 = vpop.f32.mrf.mxu0
  %v561 = vadd.f32 %v352, %v560
  %562 = vmatmul.f32.gmra.mxu0 %v123
  %v563 = vpop.f32.mrf.mxu0
  %v564 = vadd.f32 %v355, %v563
  %565 = vmatmul.f32.gmra.mxu0 %v125
  %v566 = vpop.f32.mrf.mxu0
  %v567 = vadd.f32 %v358, %v566
  %568 = vmatmul.f32.gmra.mxu0 %v127
  %v569 = vpop.f32.mrf.mxu0
  %v570 = vadd.f32 %v361, %v569
  %571 = vmatmul.f32.gmra.mxu0 %v129
  %v572 = vpop.f32.mrf.mxu0
  %v573 = vadd.f32 %v364, %v572
  %574 = vmatmul.f32.gmra.mxu0 %v131
  %v575 = vpop.f32.mrf.mxu0
  %v576 = vadd.f32 %v367, %v575
  %577 = vmatmul.f32.gmra.mxu0 %v133
  %v578 = vpop.f32.mrf.mxu0
  %v579 = vadd.f32 %v370, %v578
  %580 = vmatmul.f32.gmra.mxu0 %v135
  %v581 = vpop.f32.mrf.mxu0
  %v582 = vadd.f32 %v373, %v581
  %583 = vmatmul.f32.gmra.mxu0 %v137
  %v584 = vpop.f32.mrf.mxu0
  %v585 = vadd.f32 %v376, %v584
  %586 = vmatmul.f32.gmra.mxu0 %v139
  %v587 = vpop.f32.mrf.mxu0
  %v588 = vadd.f32 %v379, %v587
  %589 = vmatmul.f32.gmra.mxu0 %v141
  %v590 = vpop.f32.mrf.mxu0
  %v591 = vadd.f32 %v382, %v590
  %592 = vmatmul.f32.gmra.mxu0 %v143
  %v593 = vpop.f32.mrf.mxu0
  %v594 = vadd.f32 %v385, %v593
  %595 = vmatmul.f32.gmra.mxu0 %v145
  %v596 = vpop.f32.mrf.mxu0
  %v597 = vadd.f32 %v388, %v596
  %598 = vmatmul.f32.gmra.mxu0 %v147
  %v599 = vpop.f32.mrf.mxu0
  %v600 = vadd.f32 %v391, %v599
  %601 = vdwg.mxu0
  %v602 = vadd.f32 %v411, %v414
  %v603 = vadd.f32 %v602, %v417
  %v604 = vadd.f32 %v603, %v420
  %v605 = vadd.f32 %v604, %v423
  %v606 = vadd.f32 %v605, %v426
  %v607 = vadd.f32 %v606, %v429
  %v608 = vadd.f32 %v607, %v432
  %v609 = vadd.f32 %v608, %v435
  %v610 = vadd.f32 %v609, %v438
  %v611 = vadd.f32 %v610, %v441
  %v612 = vadd.f32 %v611, %v444
  %v613 = vadd.f32 %v612, %v447
  %v614 = vadd.f32 %v613, %v450
  %v615 = vadd.f32 %v614, %v453
  %v616 = vadd.f32 %v615, %v456
  %v617 = vadd.f32 %v616, %v459
  %v618 = vadd.f32 %v617, %v462
  %v619 = vadd.f32 %v618, %v465
  %v620 = vadd.f32 %v619, %v468
  %v621 = vadd.f32 %v620, %v471
  %v622 = vadd.f32 %v621, %v474
  %v623 = vadd.f32 %v622, %v477
  %v624 = vadd.f32 %v623, %v480
  %v625 = vadd.f32 %v624, %v483
  %v626 = vadd.f32 %v625, %v486
  %v627 = vadd.f32 %v626, %v489
  %v628 = vadd.f32 %v627, %v492
  %v629 = vadd.f32 %v628, %v495
  %v630 = vadd.f32 %v629, %v498
  %v631 = vadd.f32 %v630, %v501
  %v632 = vadd.f32 %v631, %v504
  %v633 = vadd.f32 %v632, %v507
  %v634 = vadd.f32 %v633, %v510
  %v635 = vadd.f32 %v634, %v513
  %v636 = vadd.f32 %v635, %v516
  %v637 = vadd.f32 %v636, %v519
  %v638 = vadd.f32 %v637, %v522
  %v639 = vadd.f32 %v638, %v525
  %v640 = vadd.f32 %v639, %v528
  %v641 = vadd.f32 %v640, %v531
  %v642 = vadd.f32 %v641, %v534
  %v643 = vadd.f32 %v642, %v537
  %v644 = vadd.f32 %v643, %v540
  %v645 = vadd.f32 %v644, %v543
  %v646 = vadd.f32 %v645, %v546
  %v647 = vadd.f32 %v646, %v549
  %v648 = vadd.f32 %v647, %v552
  %v649 = vadd.f32 %v648, %v555
  %v650 = vadd.f32 %v649, %v558
  %v651 = vadd.f32 %v650, %v561
  %v652 = vadd.f32 %v651, %v564
  %v653 = vadd.f32 %v652, %v567
  %v654 = vadd.f32 %v653, %v570
  %v655 = vadd.f32 %v654, %v573
  %v656 = vadd.f32 %v655, %v576
  %v657 = vadd.f32 %v656, %v579
  %v658 = vadd.f32 %v657, %v582
  %v659 = vadd.f32 %v658, %v585
  %v660 = vadd.f32 %v659, %v588
  %v661 = vadd.f32 %v660, %v591
  %v662 = vadd.f32 %v661, %v594
  %v663 = vadd.f32 %v662, %v597
  %v664 = vadd.f32 %v663, %v600
  %v665 = vrot.slane %v664, 4
  %v666 = vadd.f32 %v664, %v665
  %v667 = vrot.slane %v666, 2
  %v668 = vadd.f32 %v666, %v667
  %v669 = vrot.slane %v668, 1
  %v670 = vadd.f32 %v668, %v669
  %v671 = vrcp.pop 512.0
  %v672 = vmul.f32 512.0, %v671
  %v673 = vsub.f32 1.0, %v672
  %v674 = vmul.f32 %v671, %v673
  %v675 = vadd.f32 %v671, %v674
  %vm676 = vweird.f32 %v671
  %v677 = vsel %vm676, %v671, %v675
  %v678 = vmul.f32 %v670, %v677
  %v679 = vsub.f32 %v411, %v678
  %v680 = vsub.f32 %v414, %v678
  %v681 = vsub.f32 %v417, %v678
  %v682 = vsub.f32 %v420, %v678
  %v683 = vsub.f32 %v423, %v678
  %v684 = vsub.f32 %v426, %v678
  %v685 = vsub.f32 %v429, %v678
  %v686 = vsub.f32 %v432, %v678
  %v687 = vsub.f32 %v435, %v678
  %v688 = vsub.f32 %v438, %v678
  %v689 = vsub.f32 %v441, %v678
  %v690 = vsub.f32 %v444, %v678
  %v691 = vsub.f32 %v447, %v678
  %v692 = vsub.f32 %v450, %v678
  %v693 = vsub.f32 %v453, %v678
  %v694 = vsub.f32 %v456, %v678
  %v695 = vsub.f32 %v459, %v678
  %v696 = vsub.f32 %v462, %v678
  %v697 = vsub.f32 %v465, %v678
  %v698 = vsub.f32 %v468, %v678
  %v699 = vsub.f32 %v471, %v678
  %v700 = vsub.f32 %v474, %v678
  %v701 = vsub.f32 %v477, %v678
  %v702 = vsub.f32 %v480, %v678
  %v703 = vsub.f32 %v483, %v678
  %v704 = vsub.f32 %v486, %v678
  %v705 = vsub.f32 %v489, %v678
  %v706 = vsub.f32 %v492, %v678
  %v707 = vsub.f32 %v495, %v678
  %v708 = vsub.f32 %v498, %v678
  %v709 = vsub.f32 %v501, %v678
  %v710 = vsub.f32 %v504, %v678
  %v711 = vsub.f32 %v507, %v678
  %v712 = vsub.f32 %v510, %v678
  %v713 = vsub.f32 %v513, %v678
  %v714 = vsub.f32 %v516, %v678
  %v715 = vsub.f32 %v519, %v678
  %v716 = vsub.f32 %v522, %v678
  %v717 = vsub.f32 %v525, %v678
  %v718 = vsub.f32 %v528, %v678
  %v719 = vsub.f32 %v531, %v678
  %v720 = vsub.f32 %v534, %v678
  %v721 = vsub.f32 %v537, %v678
  %v722 = vsub.f32 %v540, %v678
  %v723 = vsub.f32 %v543, %v678
  %v724 = vsub.f32 %v546, %v678
  %v725 = vsub.f32 %v549, %v678
  %v726 = vsub.f32 %v552, %v678
  %v727 = vsub.f32 %v555, %v678
  %v728 = vsub.f32 %v558, %v678
  %v729 = vsub.f32 %v561, %v678
  %v730 = vsub.f32 %v564, %v678
  %v731 = vsub.f32 %v567, %v678
  %v732 = vsub.f32 %v570, %v678
  %v733 = vsub.f32 %v573, %v678
  %v734 = vsub.f32 %v576, %v678
  %v735 = vsub.f32 %v579, %v678
  %v736 = vsub.f32 %v582, %v678
  %v737 = vsub.f32 %v585, %v678
  %v738 = vsub.f32 %v588, %v678
  %v739 = vsub.f32 %v591, %v678
  %v740 = vsub.f32 %v594, %v678
  %v741 = vsub.f32 %v597, %v678
  %v742 = vsub.f32 %v600, %v678
  %v743 = vmul.f32 %v679, %v679
  %v744 = vmul.f32 %v680, %v680
  %v745 = vmul.f32 %v681, %v681
  %v746 = vmul.f32 %v682, %v682
  %v747 = vmul.f32 %v683, %v683
  %v748 = vmul.f32 %v684, %v684
  %v749 = vmul.f32 %v685, %v685
  %v750 = vmul.f32 %v686, %v686
  %v751 = vmul.f32 %v687, %v687
  %v752 = vmul.f32 %v688, %v688
  %v753 = vmul.f32 %v689, %v689
  %v754 = vmul.f32 %v690, %v690
  %v755 = vmul.f32 %v691, %v691
  %v756 = vmul.f32 %v692, %v692
  %v757 = vmul.f32 %v693, %v693
  %v758 = vmul.f32 %v694, %v694
  %v759 = vmul.f32 %v695, %v695
  %v760 = vmul.f32 %v696, %v696
  %v761 = vmul.f32 %v697, %v697
  %v762 = vmul.f32 %v698, %v698
  %v763 = vmul.f32 %v699, %v699
  %v764 = vmul.f32 %v700, %v700
  %v765 = vmul.f32 %v701, %v701
  %v766 = vmul.f32 %v702, %v702
  %v767 = vmul.f32 %v703, %v703
  %v768 = vmul.f32 %v704, %v704
  %v769 = vmul.f32 %v705, %v705
  %v770 = vmul.f32 %v706, %v706
  %v771 = vmul.f32 %v707, %v707
  %v772 = vmul.f32 %v708, %v708
  %v773 = vmul.f32 %v709, %v709
  %v774 = vmul.f32 %v710, %v710
  %v775 = vmul.f32 %v711, %v711
  %v776 = vmul.f32 %v712, %v712
  %v777 = vmul.f32 %v713, %v713
  %v778 = vmul.f32 %v714, %v714
  %v779 = vmul.f32 %v715, %v715
  %v780 = vmul.f32 %v716, %v716
  %v781 = vmul.f32 %v717, %v717
  %v782 = vmul.f32 %v718, %v718
  %v783 = vmul.f32 %v719, %v719
  %v784 = vmul.f32 %v720, %v720
  %v785 = vmul.f32 %v721, %v721
  %v786 = vmul.f32 %v722, %v722
  %v787 = vmul.f32 %v723, %v723
  %v788 = vmul.f32 %v724, %v724
  %v789 = vmul.f32 %v725, %v725
  %v790 = vmul.f32 %v726, %v726
  %v791 = vmul.f32 %v727, %v727
  %v792 = vmul.f32 %v728, %v728
  %v793 = vmul.f32 %v729, %v729
  %v794 = vmul.f32 %v730, %v730
  %v795 = vmul.f32 %v731, %v731
  %v796 = vmul.f32 %v732, %v732
  %v797 = vmul.f32 %v733, %v733
  %v798 = vmul.f32 %v734, %v734
  %v799 = vmul.f32 %v735, %v735
  %v800 = vmul.f32 %v736, %v736
  %v801 = vmul.f32 %v737, %v737
  %v802 = vmul.f32 %v738, %v738
  %v803 = vmul.f32 %v739, %v739
  %v804 = vmul.f32 %v740, %v740
  %v805 = vmul.f32 %v741, %v741
  %v806 = vmul.f32 %v742, %v742
  %v807 = vadd.f32 %v743, %v744
  %v808 = vadd.f32 %v807, %v745
  %v809 = vadd.f32 %v808, %v746
  %v810 = vadd.f32 %v809, %v747
  %v811 = vadd.f32 %v810, %v748
  %v812 = vadd.f32 %v811, %v749
  %v813 = vadd.f32 %v812, %v750
  %v814 = vadd.f32 %v813, %v751
  %v815 = vadd.f32 %v814, %v752
  %v816 = vadd.f32 %v815, %v753
  %v817 = vadd.f32 %v816, %v754
  %v818 = vadd.f32 %v817, %v755
  %v819 = vadd.f32 %v818, %v756
  %v820 = vadd.f32 %v819, %v757
  %v821 = vadd.f32 %v820, %v758
  %v822 = vadd.f32 %v821, %v759
  %v823 = vadd.f32 %v822, %v760
  %v824 = vadd.f32 %v823, %v761
  %v825 = vadd.f32 %v824, %v762
  %v826 = vadd.f32 %v825, %v763
  %v827 = vadd.f32 %v826, %v764
  %v828 = vadd.f32 %v827, %v765
  %v829 = vadd.f32 %v828, %v766
  %v830 = vadd.f32 %v829, %v767
  %v831 = vadd.f32 %v830, %v768
  %v832 = vadd.f32 %v831, %v769
  %v833 = vadd.f32 %v832, %v770
  %v834 = vadd.f32 %v833, %v771
  %v835 = vadd.f32 %v834, %v772
  %v836 = vadd.f32 %v835, %v773
  %v837 = vadd.f32 %v836, %v774
  %v838 = vadd.f32 %v837, %v775
  %v839 = vadd.f32 %v838, %v776
  %v840 = vadd.f32 %v839, %v777
  %v841 = vadd.f32 %v840, %v778
  %v842 = vadd.f32 %v841, %v779
  %v843 = vadd.f32 %v842, %v780
  %v844 = vadd.f32 %v843, %v781
  %v845 = vadd.f32 %v844, %v782
  %v846 = vadd.f32 %v845, %v783
  %v847 = vadd.f32 %v846, %v784
  %v848 = vadd.f32 %v847, %v785
  %v849 = vadd.f32 %v848, %v786
  %v850 = vadd.f32 %v849, %v787
  %v851 = vadd.f32 %v850, %v788
  %v852 = vadd.f32 %v851, %v789
  %v853 = vadd.f32 %v852, %v790
  %v854 = vadd.f32 %v853, %v791
  %v855 = vadd.f32 %v854, %v792
  %v856 = vadd.f32 %v855, %v793
  %v857 = vadd.f32 %v856, %v794
  %v858 = vadd.f32 %v857, %v795
  %v859 = vadd.f32 %v858, %v796
  %v860 = vadd.f32 %v859, %v797
  %v861 = vadd.f32 %v860, %v798
  %v862 = vadd.f32 %v861, %v799
  %v863 = vadd.f32 %v862, %v800
  %v864 = vadd.f32 %v863, %v801
  %v865 = vadd.f32 %v864, %v802
  %v866 = vadd.f32 %v865, %v803
  %v867 = vadd.f32 %v866, %v804
  %v868 = vadd.f32 %v867, %v805
  %v869 = vadd.f32 %v868, %v806
  %v870 = vrot.slane %v869, 4
  %v871 = vadd.f32 %v869, %v870
  %v872 = vrot.slane %v871, 2
  %v873 = vadd.f32 %v871, %v872
  %v874 = vrot.slane %v873, 1
  %v875 = vadd.f32 %v873, %v874
  %v876 = vmul.f32 %v875, %v677
  %v877 = vadd.f32 %v876, 1e-05
  %v878 = vrsqrt.pop %v877
  %v879 = vmul.f32 %v878, %v877
  %v880 = vmul.f32 %v879, %v878
  %v881 = vmul.f32 0.5, %v880
  %v882 = vsub.f32 1.5, %v881
  %v883 = vmul.f32 %v878, %v882
  %vm884 = vweird.f32 %v877
  %vm885 = vweird.f32 %v878
  %vm886 = vmor %vm884, %vm885
  %v887 = vsel %vm886, %v878, %v883
  %v888 = vmul.f32 %v679, %v887
  %v889 = vmul.f32 %v680, %v887
  %v890 = vmul.f32 %v681, %v887
  %v891 = vmul.f32 %v682, %v887
  %v892 = vmul.f32 %v683, %v887
  %v893 = vmul.f32 %v684, %v887
  %v894 = vmul.f32 %v685, %v887
  %v895 = vmul.f32 %v686, %v887
  %v896 = vmul.f32 %v687, %v887
  %v897 = vmul.f32 %v688, %v887
  %v898 = vmul.f32 %v689, %v887
  %v899 = vmul.f32 %v690, %v887
  %v900 = vmul.f32 %v691, %v887
  %v901 = vmul.f32 %v692, %v887
  %v902 = vmul.f32 %v693, %v887
  %v903 = vmul.f32 %v694, %v887
  %v904 = vmul.f32 %v695, %v887
  %v905 = vmul.f32 %v696, %v887
  %v906 = vmul.f32 %v697, %v887
  %v907 = vmul.f32 %v698, %v887
  %v908 = vmul.f32 %v699, %v887
  %v909 = vmul.f32 %v700, %v887
  %v910 = vmul.f32 %v701, %v887
  %v911 = vmul.f32 %v702, %v887
  %v912 = vmul.f32 %v703, %v887
  %v913 = vmul.f32 %v704, %v887
  %v914 = vmul.f32 %v705, %v887
  %v915 = vmul.f32 %v706, %v887
  %v916 = vmul.f32 %v707, %v887
  %v917 = vmul.f32 %v708, %v887
  %v918 = vmul.f32 %v709, %v887
  %v919 = vmul.f32 %v710, %v887
  %v920 = vmul.f32 %v711, %v887
  %v921 = vmul.f32 %v712, %v887
  %v922 = vmul.f32 %v713, %v887
  %v923 = vmul.f32 %v714, %v887
  %v924 = vmul.f32 %v715, %v887
  %v925 = vmul.f32 %v716, %v887
  %v926 = vmul.f32 %v717, %v887
  %v927 = vmul.f32 %v718, %v887
  %v928 = vmul.f32 %v719, %v887
  %v929 = vmul.f32 %v720, %v887
  %v930 = vmul.f32 %v721, %v887
  %v931 = vmul.f32 %v722, %v887
  %v932 = vmul.f32 %v723, %v887
  %v933 = vmul.f32 %v724, %v887
  %v934 = vmul.f32 %v725, %v887
  %v935 = vmul.f32 %v726, %v887
  %v936 = vmul.f32 %v727, %v887
  %v937 = vmul.f32 %v728, %v887
  %v938 = vmul.f32 %v729, %v887
  %v939 = vmul.f32 %v730, %v887
  %v940 = vmul.f32 %v731, %v887
  %v941 = vmul.f32 %v732, %v887
  %v942 = vmul.f32 %v733, %v887
  %v943 = vmul.f32 %v734, %v887
  %v944 = vmul.f32 %v735, %v887
  %v945 = vmul.f32 %v736, %v887
  %v946 = vmul.f32 %v737, %v887
  %v947 = vmul.f32 %v738, %v887
  %v948 = vmul.f32 %v739, %v887
  %v949 = vmul.f32 %v740, %v887
  %v950 = vmul.f32 %v741, %v887
  %v951 = vmul.f32 %v742, %v887
  %v952 = vld [vmem:[%s3] sm:$0x1]
  %v954 = vperm.slane %v952, 0
  %v956 = vmul.f32 %v888, %v954
  %v957 = vmul.f32 %v889, %v954
  %v958 = vmul.f32 %v890, %v954
  %v959 = vmul.f32 %v891, %v954
  %v960 = vmul.f32 %v892, %v954
  %v961 = vmul.f32 %v893, %v954
  %v962 = vmul.f32 %v894, %v954
  %v963 = vmul.f32 %v895, %v954
  %v964 = vmul.f32 %v896, %v954
  %v965 = vmul.f32 %v897, %v954
  %v966 = vmul.f32 %v898, %v954
  %v967 = vmul.f32 %v899, %v954
  %v968 = vmul.f32 %v900, %v954
  %v969 = vmul.f32 %v901, %v954
  %v970 = vmul.f32 %v902, %v954
  %v971 = vmul.f32 %v903, %v954
  %v972 = vmul.f32 %v904, %v954
  %v973 = vmul.f32 %v905, %v954
  %v974 = vmul.f32 %v906, %v954
  %v975 = vmul.f32 %v907, %v954
  %v976 = vmul.f32 %v908, %v954
  %v977 = vmul.f32 %v909, %v954
  %v978 = vmul.f32 %v910, %v954
  %v979 = vmul.f32 %v911, %v954
  %v980 = vmul.f32 %v912, %v954
  %v981 = vmul.f32 %v913, %v954
  %v982 = vmul.f32 %v914, %v954
  %v983 = vmul.f32 %v915, %v954
  %v984 = vmul.f32 %v916, %v954
  %v985 = vmul.f32 %v917, %v954
  %v986 = vmul.f32 %v918, %v954
  %v987 = vmul.f32 %v919, %v954
  %v988 = vmul.f32 %v920, %v954
  %v989 = vmul.f32 %v921, %v954
  %v990 = vmul.f32 %v922, %v954
  %v991 = vmul.f32 %v923, %v954
  %v992 = vmul.f32 %v924, %v954
  %v993 = vmul.f32 %v925, %v954
  %v994 = vmul.f32 %v926, %v954
  %v995 = vmul.f32 %v927, %v954
  %v996 = vmul.f32 %v928, %v954
  %v997 = vmul.f32 %v929, %v954
  %v998 = vmul.f32 %v930, %v954
  %v999 = vmul.f32 %v931, %v954
  %v1000 = vmul.f32 %v932, %v954
  %v1001 = vmul.f32 %v933, %v954
  %v1002 = vmul.f32 %v934, %v954
  %v1003 = vmul.f32 %v935, %v954
  %v1004 = vmul.f32 %v936, %v954
  %v1005 = vmul.f32 %v937, %v954
  %v1006 = vmul.f32 %v938, %v954
  %v1007 = vmul.f32 %v939, %v954
  %v1008 = vmul.f32 %v940, %v954
  %v1009 = vmul.f32 %v941, %v954
  %v1010 = vmul.f32 %v942, %v954
  %v1011 = vmul.f32 %v943, %v954
  %v1012 = vmul.f32 %v944, %v954
  %v1013 = vmul.f32 %v945, %v954
  %v1014 = vmul.f32 %v946, %v954
  %v1015 = vmul.f32 %v947, %v954
  %v1016 = vmul.f32 %v948, %v954
  %v1017 = vmul.f32 %v949, %v954
  %v1018 = vmul.f32 %v950, %v954
  %v1019 = vmul.f32 %v951, %v954
  %v1020 = vld [vmem:[%s4] sm:$0x1]
  %v1022 = vperm.slane %v1020, 0
  %v1024 = vadd.f32 %v956, %v1022
  %v1025 = vadd.f32 %v957, %v1022
  %v1026 = vadd.f32 %v958, %v1022
  %v1027 = vadd.f32 %v959, %v1022
  %v1028 = vadd.f32 %v960, %v1022
  %v1029 = vadd.f32 %v961, %v1022
  %v1030 = vadd.f32 %v962, %v1022
  %v1031 = vadd.f32 %v963, %v1022
  %v1032 = vadd.f32 %v964, %v1022
  %v1033 = vadd.f32 %v965, %v1022
  %v1034 = vadd.f32 %v966, %v1022
  %v1035 = vadd.f32 %v967, %v1022
  %v1036 = vadd.f32 %v968, %v1022
  %v1037 = vadd.f32 %v969, %v1022
  %v1038 = vadd.f32 %v970, %v1022
  %v1039 = vadd.f32 %v971, %v1022
  %v1040 = vadd.f32 %v972, %v1022
  %v1041 = vadd.f32 %v973, %v1022
  %v1042 = vadd.f32 %v974, %v1022
  %v1043 = vadd.f32 %v975, %v1022
  %v1044 = vadd.f32 %v976, %v1022
  %v1045 = vadd.f32 %v977, %v1022
  %v1046 = vadd.f32 %v978, %v1022
  %v1047 = vadd.f32 %v979, %v1022
  %v1048 = vadd.f32 %v980, %v1022
  %v1049 = vadd.f32 %v981, %v1022
  %v1050 = vadd.f32 %v982, %v1022
  %v1051 = vadd.f32 %v983, %v1022
  %v1052 = vadd.f32 %v984, %v1022
  %v1053 = vadd.f32 %v985, %v1022
  %v1054 = vadd.f32 %v986, %v1022
  %v1055 = vadd.f32 %v987, %v1022
  %v1056 = vadd.f32 %v988, %v1022
  %v1057 = vadd.f32 %v989, %v1022
  %v1058 = vadd.f32 %v990, %v1022
  %v1059 = vadd.f32 %v991, %v1022
  %v1060 = vadd.f32 %v992, %v1022
  %v1061 = vadd.f32 %v993, %v1022
  %v1062 = vadd.f32 %v994, %v1022
  %v1063 = vadd.f32 %v995, %v1022
  %v1064 = vadd.f32 %v996, %v1022
  %v1065 = vadd.f32 %v997, %v1022
  %v1066 = vadd.f32 %v998, %v1022
  %v1067 = vadd.f32 %v999, %v1022
  %v1068 = vadd.f32 %v1000, %v1022
  %v1069 = vadd.f32 %v1001, %v1022
  %v1070 = vadd.f32 %v1002, %v1022
  %v1071 = vadd.f32 %v1003, %v1022
  %v1072 = vadd.f32 %v1004, %v1022
  %v1073 = vadd.f32 %v1005, %v1022
  %v1074 = vadd.f32 %v1006, %v1022
  %v1075 = vadd.f32 %v1007, %v1022
  %v1076 = vadd.f32 %v1008, %v1022
  %v1077 = vadd.f32 %v1009, %v1022
  %v1078 = vadd.f32 %v1010, %v1022
  %v1079 = vadd.f32 %v1011, %v1022
  %v1080 = vadd.f32 %v1012, %v1022
  %v1081 = vadd.f32 %v1013, %v1022
  %v1082 = vadd.f32 %v1014, %v1022
  %v1083 = vadd.f32 %v1015, %v1022
  %v1084 = vadd.f32 %v1016, %v1022
  %v1085 = vadd.f32 %v1017, %v1022
  %v1086 = vadd.f32 %v1018, %v1022
  %v1087 = vadd.f32 %v1019, %v1022
  %v1088 = vmax.f32 %v1024, 0.0
  %v1089 = vmax.f32 %v1025, 0.0
  %v1090 = vmax.f32 %v1026, 0.0
  %v1091 = vmax.f32 %v1027, 0.0
  %v1092 = vmax.f32 %v1028, 0.0
  %v1093 = vmax.f32 %v1029, 0.0
  %v1094 = vmax.f32 %v1030, 0.0
  %v1095 = vmax.f32 %v1031, 0.0
  %v1096 = vmax.f32 %v1032, 0.0
  %v1097 = vmax.f32 %v1033, 0.0
  %v1098 = vmax.f32 %v1034, 0.0
  %v1099 = vmax.f32 %v1035, 0.0
  %v1100 = vmax.f32 %v1036, 0.0
  %v1101 = vmax.f32 %v1037, 0.0
  %v1102 = vmax.f32 %v1038, 0.0
  %v1103 = vmax.f32 %v1039, 0.0
  %v1104 = vmax.f32 %v1040, 0.0
  %v1105 = vmax.f32 %v1041, 0.0
  %v1106 = vmax.f32 %v1042, 0.0
  %v1107 = vmax.f32 %v1043, 0.0
  %v1108 = vmax.f32 %v1044, 0.0
  %v1109 = vmax.f32 %v1045, 0.0
  %v1110 = vmax.f32 %v1046, 0.0
  %v1111 = vmax.f32 %v1047, 0.0
  %v1112 = vmax.f32 %v1048, 0.0
  %v1113 = vmax.f32 %v1049, 0.0
  %v1114 = vmax.f32 %v1050, 0.0
  %v1115 = vmax.f32 %v1051, 0.0
  %v1116 = vmax.f32 %v1052, 0.0
  %v1117 = vmax.f32 %v1053, 0.0
  %v1118 = vmax.f32 %v1054, 0.0
  %v1119 = vmax.f32 %v1055, 0.0
  %v1120 = vmax.f32 %v1056, 0.0
  %v1121 = vmax.f32 %v1057, 0.0
  %v1122 = vmax.f32 %v1058, 0.0
  %v1123 = vmax.f32 %v1059, 0.0
  %v1124 = vmax.f32 %v1060, 0.0
  %v1125 = vmax.f32 %v1061, 0.0
  %v1126 = vmax.f32 %v1062, 0.0
  %v1127 = vmax.f32 %v1063, 0.0
  %v1128 = vmax.f32 %v1064, 0.0
  %v1129 = vmax.f32 %v1065, 0.0
  %v1130 = vmax.f32 %v1066, 0.0
  %v1131 = vmax.f32 %v1067, 0.0
  %v1132 = vmax.f32 %v1068, 0.0
  %v1133 = vmax.f32 %v1069, 0.0
  %v1134 = vmax.f32 %v1070, 0.0
  %v1135 = vmax.f32 %v1071, 0.0
  %v1136 = vmax.f32 %v1072, 0.0
  %v1137 = vmax.f32 %v1073, 0.0
  %v1138 = vmax.f32 %v1074, 0.0
  %v1139 = vmax.f32 %v1075, 0.0
  %v1140 = vmax.f32 %v1076, 0.0
  %v1141 = vmax.f32 %v1077, 0.0
  %v1142 = vmax.f32 %v1078, 0.0
  %v1143 = vmax.f32 %v1079, 0.0
  %v1144 = vmax.f32 %v1080, 0.0
  %v1145 = vmax.f32 %v1081, 0.0
  %v1146 = vmax.f32 %v1082, 0.0
  %v1147 = vmax.f32 %v1083, 0.0
  %v1148 = vmax.f32 %v1084, 0.0
  %v1149 = vmax.f32 %v1085, 0.0
  %v1150 = vmax.f32 %v1086, 0.0
  %v1151 = vmax.f32 %v1087, 0.0
  %1152 = vst [vmem:[%s5] sm:$0xff] %v1088
  %1153 = vst [vmem:[%s5 + $0x8] sm:$0xff] %v1089
  %1154 = vst [vmem:[%s5 + $0x10] sm:$0xff] %v1090
  %1155 = vst [vmem:[%s5 + $0x18] sm:$0xff] %v1091
  %1156 = vst [vmem:[%s5 + $0x20] sm:$0xff] %v1092
  %1157 = vst [vmem:[%s5 + $0x28] sm:$0xff] %v1093
  %1158 = vst [vmem:[%s5 + $0x30] sm:$0xff] %v1094
  %1159 = vst [vmem:[%s5 + $0x38] sm:$0xff] %v1095
  %1160 = vst [vmem:[%s5 + $0x40] sm:$0xff] %v1096
  %1161 = vst [vmem:[%s5 + $0x48] sm:$0xff] %v1097
  %1162 = vst [vmem:[%s5 + $0x50] sm:$0xff] %v1098
  %1163 = vst [vmem:[%s5 + $0x58] sm:$0xff] %v1099
  %1164 = vst [vmem:[%s5 + $0x60] sm:$0xff] %v1100
  %1165 = vst [vmem:[%s5 + $0x68] sm:$0xff] %v1101
  %1166 = vst [vmem:[%s5 + $0x70] sm:$0xff] %v1102
  %1167 = vst [vmem:[%s5 + $0x78] sm:$0xff] %v1103
  %1168 = vst [vmem:[%s5 + $0x80] sm:$0xff] %v1104
  %1169 = vst [vmem:[%s5 + $0x88] sm:$0xff] %v1105
  %1170 = vst [vmem:[%s5 + $0x90] sm:$0xff] %v1106
  %1171 = vst [vmem:[%s5 + $0x98] sm:$0xff] %v1107
  %1172 = vst [vmem:[%s5 + $0xa0] sm:$0xff] %v1108
  %1173 = vst [vmem:[%s5 + $0xa8] sm:$0xff] %v1109
  %1174 = vst [vmem:[%s5 + $0xb0] sm:$0xff] %v1110
  %1175 = vst [vmem:[%s5 + $0xb8] sm:$0xff] %v1111
  %1176 = vst [vmem:[%s5 + $0xc0] sm:$0xff] %v1112
  %1177 = vst [vmem:[%s5 + $0xc8] sm:$0xff] %v1113
  %1178 = vst [vmem:[%s5 + $0xd0] sm:$0xff] %v1114
  %1179 = vst [vmem:[%s5 + $0xd8] sm:$0xff] %v1115
  %1180 = vst [vmem:[%s5 + $0xe0] sm:$0xff] %v1116
  %1181 = vst [vmem:[%s5 + $0xe8] sm:$0xff] %v1117
  %1182 = vst [vmem:[%s5 + $0xf0] sm:$0xff] %v1118
  %1183 = vst [vmem:[%s5 + $0xf8] sm:$0xff] %v1119
  %1184 = vst [vmem:[%s5 + $0x100] sm:$0xff] %v1120
  %1185 = vst [vmem:[%s5 + $0x108] sm:$0xff] %v1121
  %1186 = vst [vmem:[%s5 + $0x110] sm:$0xff] %v1122
  %1187 = vst [vmem:[%s5 + $0x118] sm:$0xff] %v1123
  %1188 = vst [vmem:[%s5 + $0x120] sm:$0xff] %v1124
  %1189 = vst [vmem:[%s5 + $0x128] sm:$0xff] %v1125
  %1190 = vst [vmem:[%s5 + $0x130] sm:$0xff] %v1126
  %1191 = vst [vmem:[%s5 + $0x138] sm:$0xff] %v1127
  %1192 = vst [vmem:[%s5 + $0x140] sm:$0xff] %v1128
  %1193 = vst [vmem:[%s5 + $0x148] sm:$0xff] %v1129
  %1194 = vst [vmem:[%s5 + $0x150] sm:$0xff] %v1130
  %1195 = vst [vmem:[%s5 + $0x158] sm:$0xff] %v1131
  %1196 = vst [vmem:[%s5 + $0x160] sm:$0xff] %v1132
  %1197 = vst [vmem:[%s5 + $0x168] sm:$0xff] %v1133
  %1198 = vst [vmem:[%s5 + $0x170] sm:$0xff] %v1134
  %1199 = vst [vmem:[%s5 + $0x178] sm:$0xff] %v1135
  %1200 = vst [vmem:[%s5 + $0x180] sm:$0xff] %v1136
  %1201 = vst [vmem:[%s5 + $0x188] sm:$0xff] %v1137
  %1202 = vst [vmem:[%s5 + $0x190] sm:$0xff] %v1138
  %1203 = vst [vmem:[%s5 + $0x198] sm:$0xff] %v1139
  %1204 = vst [vmem:[%s5 + $0x1a0] sm:$0xff] %v1140
  %1205 = vst [vmem:[%s5 + $0x1a8] sm:$0xff] %v1141
  %1206 = vst [vmem:[%s5 + $0x1b0] sm:$0xff] %v1142
  %1207 = vst [vmem:[%s5 + $0x1b8] sm:$0xff] %v1143
  %1208 = vst [vmem:[%s5 + $0x1c0] sm:$0xff] %v1144
  %1209 = vst [vmem:[%s5 + $0x1c8] sm:$0xff] %v1145
  %1210 = vst [vmem:[%s5 + $0x1d0] sm:$0xff] %v1146
  %1211 = vst [vmem:[%s5 + $0x1d8] sm:$0xff] %v1147
  %1212 = vst [vmem:[%s5 + $0x1e0] sm:$0xff] %v1148
  %1213 = vst [vmem:[%s5 + $0x1e8] sm:$0xff] %v1149
  %1214 = vst [vmem:[%s5 + $0x1f0] sm:$0xff] %v1150
  %1215 = vst [vmem:[%s5 + $0x1f8] sm:$0xff] %v1151
  // Predicated region
  $region22: #{generator_forward.10} parent=0 // pred_check
    _
  $region23: #{generator_forward.10} parent=0 // pred_check_branch
    %1217 = sbr.rel (0) target = $region25
  $region24: #{generator_forward.10} parent=0 // pred_region
    _
  $region25: #{generator_forward.10} parent=0 // pred_fallthru
    _
  // Predicated region
  $region26: #{generator_forward.10} parent=0 // pred_check
    _
  $region27: #{generator_forward.10} parent=0 // pred_check_branch
    %1219 = sbr.rel (0) target = $region29
  $region28: #{generator_forward.10} parent=0 // pred_region
    _
  $region29: #{generator_forward.10} parent=0 // pred_fallthru
    _

// kernel: generator_forward.12
$region0: #{generator_forward.12}
  #allocation0 [shape = 'u32[]', space=smem, size = 0x4, offset = 0x4, fixed_abs, tag = 'smem constant byte address 0x4 - core index']
  #allocation1 [shape = 'u32[72,128]{1,0:T(1,128)}', space=vmem, size = 0x9000, scoped, tag = 'internal scratch']
  %s0 = inlined_call_operand.vmem [shape: f32[32,256], index: 0, kind: input, shape index: {}]
  %s1 = inlined_call_operand.vmem [shape: f32[256,128], index: 1, kind: input, shape index: {}]
  %s2 = inlined_call_operand.vmem [shape: f32[1,128], index: 2, kind: input, shape index: {}]
  %s3 = inlined_call_operand.vmem [shape: f32[1,128], index: 3, kind: input, shape index: {}]
  %s4 = inlined_call_operand.vmem [shape: f32[1,128], index: 4, kind: input, shape index: {}]
  %s5 = inlined_call_operand.vmem [shape: f32[32,128], index: 5, kind: output, shape index: {}]
  %s6 = sld [smem:[#allocation0]]
  $region30: #{generator_forward.12} parent=0
    _
  %s8 = ssub.s32 1, %s6
  %s9 = scalar_select 0, %s8, %s6
  // Predicated region
  $region2: #{generator_forward.12} parent=0 // pred_check
    _
  $region3: #{generator_forward.12} parent=0 // pred_check_branch
    %11 = sbr.rel (0) target = $region5
  $region4: #{generator_forward.12} parent=0 // pred_region
    _
  $region5: #{generator_forward.12} parent=0 // pred_fallthru
    _
  // Predicated region
  $region6: #{generator_forward.12} parent=0 // pred_check
    _
  $region7: #{generator_forward.12} parent=0 // pred_check_branch
    %13 = sbr.rel (0) target = $region9
  $region8: #{generator_forward.12} parent=0 // pred_region
    _
  $region9: #{generator_forward.12} parent=0 // pred_fallthru
    _
  // Predicated region
  $region10: #{generator_forward.12} parent=0 // pred_check
    _
  $region11: #{generator_forward.12} parent=0 // pred_check_branch
    %15 = sbr.rel (0) target = $region13
  $region12: #{generator_forward.12} parent=0 // pred_region
    _
  $region13: #{generator_forward.12} parent=0 // pred_fallthru
    _
  // Predicated region
  $region14: #{generator_forward.12} parent=0 // pred_check
    _
  $region15: #{generator_forward.12} parent=0 // pred_check_branch
    %17 = sbr.rel (0) target = $region17
  $region16: #{generator_forward.12} parent=0 // pred_region
    _
  $region17: #{generator_forward.12} parent=0 // pred_fallthru
    _
  // Predicated region
  $region18: #{generator_forward.12} parent=0 // pred_check
    _
  $region19: #{generator_forward.12} parent=0 // pred_check_branch
    %19 = sbr.rel (0) target = $region21
  $region20: #{generator_forward.12} parent=0 // pred_region
    _
  $region21: #{generator_forward.12} parent=0 // pred_fallthru
    _
  %v20 = vld [vmem:[%s0] sm:$0xff]
  %v21 = vld [vmem:[%s0 + $0x8] sm:$0xff]
  %v22 = vld [vmem:[%s0 + $0x10] sm:$0xff]
  %v23 = vld [vmem:[%s0 + $0x18] sm:$0xff]
  %v24 = vld [vmem:[%s0 + $0x20] sm:$0xff]
  %v25 = vld [vmem:[%s0 + $0x28] sm:$0xff]
  %v26 = vld [vmem:[%s0 + $0x30] sm:$0xff]
  %v27 = vld [vmem:[%s0 + $0x38] sm:$0xff]
  %v28 = vld [vmem:[%s1] sm:$0xff]
  %v29 = vld [vmem:[%s1 + $0x8] sm:$0xff]
  %v30 = vld [vmem:[%s1 + $0x10] sm:$0xff]
  %v31 = vld [vmem:[%s1 + $0x18] sm:$0xff]
  %v32 = vld [vmem:[%s1 + $0x20] sm:$0xff]
  %v33 = vld [vmem:[%s1 + $0x28] sm:$0xff]
  %v34 = vld [vmem:[%s1 + $0x30] sm:$0xff]
  %v35 = vld [vmem:[%s1 + $0x38] sm:$0xff]
  %v36 = vld [vmem:[%s1 + $0x40] sm:$0xff]
  %v37 = vld [vmem:[%s1 + $0x48] sm:$0xff]
  %v38 = vld [vmem:[%s1 + $0x50] sm:$0xff]
  %v39 = vld [vmem:[%s1 + $0x58] sm:$0xff]
  %v40 = vld [vmem:[%s1 + $0x60] sm:$0xff]
  %v41 = vld [vmem:[%s1 + $0x68] sm:$0xff]
  %v42 = vld [vmem:[%s1 + $0x70] sm:$0xff]
  %v43 = vld [vmem:[%s1 + $0x78] sm:$0xff]
  %v44 = vld [vmem:[%s1 + $0x80] sm:$0xff]
  %v45 = vld [vmem:[%s1 + $0x88] sm:$0xff]
  %v46 = vld [vmem:[%s1 + $0x90] sm:$0xff]
  %v47 = vld [vmem:[%s1 + $0x98] sm:$0xff]
  %v48 = vld [vmem:[%s1 + $0xa0] sm:$0xff]
  %v49 = vld [vmem:[%s1 + $0xa8] sm:$0xff]
  %v50 = vld [vmem:[%s1 + $0xb0] sm:$0xff]
  %v51 = vld [vmem:[%s1 + $0xb8] sm:$0xff]
  %v52 = vld [vmem:[%s1 + $0xc0] sm:$0xff]
  %v53 = vld [vmem:[%s1 + $0xc8] sm:$0xff]
  %v54 = vld [vmem:[%s1 + $0xd0] sm:$0xff]
  %v55 = vld [vmem:[%s1 + $0xd8] sm:$0xff]
  %v56 = vld [vmem:[%s1 + $0xe0] sm:$0xff]
  %v57 = vld [vmem:[%s1 + $0xe8] sm:$0xff]
  %v58 = vld [vmem:[%s1 + $0xf0] sm:$0xff]
  %v59 = vld [vmem:[%s1 + $0xf8] sm:$0xff]
  %v60 = vld [vmem:[%s2] sm:$0x1]
  %v62 = vperm.slane %v60, 0
  %64 = vmatpush.msra.mxu0 %v43
  %65 = vmatpush.msra.mxu0 %v42
  %66 = vmatpush.msra.mxu0 %v41
  %67 = vmatpush.msra.mxu0 %v40
  %68 = vmatpush.msra.mxu0 %v39
  %69 = vmatpush.msra.mxu0 %v38
  %70 = vmatpush.msra.mxu0 %v37
  %71 = vmatpush.msra.mxu0 %v36
  %72 = vmatpush.msra.mxu0 %v35
  %73 = vmatpush.msra.mxu0 %v34
  %74 = vmatpush.msra.mxu0 %v33
  %75 = vmatpush.msra.mxu0 %v32
  %76 = vmatpush.msra.mxu0 %v31
  %77 = vmatpush.msra.mxu0 %v30
  %78 = vmatpush.msra.mxu0 %v29
  %79 = vmatpush.msra.mxu0 %v28
  %80 = vmatmul.f32.gmra.mxu0 %v20
  %v81 = vpop.f32.mrf.mxu0
  %v82 = vadd.f32 %v62, %v81
  %83 = vmatmul.f32.gmra.mxu0 %v22
  %v84 = vpop.f32.mrf.mxu0
  %v85 = vadd.f32 %v62, %v84
  %86 = vmatmul.f32.gmra.mxu0 %v24
  %v87 = vpop.f32.mrf.mxu0
  %v88 = vadd.f32 %v62, %v87
  %89 = vmatmul.f32.gmra.mxu0 %v26
  %v90 = vpop.f32.mrf.mxu0
  %v91 = vadd.f32 %v62, %v90
  %92 = vdwg.mxu0
  %93 = vmatpush.msra.mxu0 %v59
  %94 = vmatpush.msra.mxu0 %v58
  %95 = vmatpush.msra.mxu0 %v57
  %96 = vmatpush.msra.mxu0 %v56
  %97 = vmatpush.msra.mxu0 %v55
  %98 = vmatpush.msra.mxu0 %v54
  %99 = vmatpush.msra.mxu0 %v53
  %100 = vmatpush.msra.mxu0 %v52
  %101 = vmatpush.msra.mxu0 %v51
  %102 = vmatpush.msra.mxu0 %v50
  %103 = vmatpush.msra.mxu0 %v49
  %104 = vmatpush.msra.mxu0 %v48
  %105 = vmatpush.msra.mxu0 %v47
  %106 = vmatpush.msra.mxu0 %v46
  %107 = vmatpush.msra.mxu0 %v45
  %108 = vmatpush.msra.mxu0 %v44
  %109 = vmatmul.f32.gmra.mxu0 %v21
  %v110 = vpop.f32.mrf.mxu0
  %v111 = vadd.f32 %v82, %v110
  %112 = vmatmul.f32.gmra.mxu0 %v23
  %v113 = vpop.f32.mrf.mxu0
  %v114 = vadd.f32 %v85, %v113
  %115 = vmatmul.f32.gmra.mxu0 %v25
  %v116 = vpop.f32.mrf.mxu0
  %v117 = vadd.f32 %v88, %v116
  %118 = vmatmul.f32.gmra.mxu0 %v27
  %v119 = vpop.f32.mrf.mxu0
  %v120 = vadd.f32 %v91, %v119
  %121 = vdwg.mxu0
  %v122 = vadd.f32 %v111, %v114
  %v123 = vadd.f32 %v122, %v117
  %v124 = vadd.f32 %v123, %v120
  %v125 = vrot.slane %v124, 4
  %v126 = vadd.f32 %v124, %v125
  %v127 = vrot.slane %v126, 2
  %v128 = vadd.f32 %v126, %v127
  %v129 = vrot.slane %v128, 1
  %v130 = vadd.f32 %v128, %v129
  %v131 = vrcp.pop 32.0
  %v132 = vmul.f32 32.0, %v131
  %v133 = vsub.f32 1.0, %v132
  %v134 = vmul.f32 %v131, %v133
  %v135 = vadd.f32 %v131, %v134
  %vm136 = vweird.f32 %v131
  %v137 = vsel %vm136, %v131, %v135
  %v138 = vmul.f32 %v130, %v137
  %v139 = vsub.f32 %v111, %v138
  %v140 = vsub.f32 %v114, %v138
  %v141 = vsub.f32 %v117, %v138
  %v142 = vsub.f32 %v120, %v138
  %v143 = vmul.f32 %v139, %v139
  %v144 = vmul.f32 %v140, %v140
  %v145 = vmul.f32 %v141, %v141
  %v146 = vmul.f32 %v142, %v142
  %v147 = vadd.f32 %v143, %v144
  %v148 = vadd.f32 %v147, %v145
  %v149 = vadd.f32 %v148, %v146
  %v150 = vrot.slane %v149, 4
  %v151 = vadd.f32 %v149, %v150
  %v152 = vrot.slane %v151, 2
  %v153 = vadd.f32 %v151, %v152
  %v154 = vrot.slane %v153, 1
  %v155 = vadd.f32 %v153, %v154
  %v156 = vmul.f32 %v155, %v137
  %v157 = vadd.f32 %v156, 1e-05
  %v158 = vrsqrt.pop %v157
  %v159 = vmul.f32 %v158, %v157
  %v160 = vmul.f32 %v159, %v158
  %v161 = vmul.f32 0.5, %v160
  %v162 = vsub.f32 1.5, %v161
  %v163 = vmul.f32 %v158, %v162
  %vm164 = vweird.f32 %v157
  %vm165 = vweird.f32 %v158
  %vm166 = vmor %vm164, %vm165
  %v167 = vsel %vm166, %v158, %v163
  %v168 = vmul.f32 %v139, %v167
  %v169 = vmul.f32 %v140, %v167
  %v170 = vmul.f32 %v141, %v167
  %v171 = vmul.f32 %v142, %v167
  %v172 = vld [vmem:[%s3] sm:$0x1]
  %v174 = vperm.slane %v172, 0
  %v176 = vmul.f32 %v168, %v174
  %v177 = vmul.f32 %v169, %v174
  %v178 = vmul.f32 %v170, %v174
  %v179 = vmul.f32 %v171, %v174
  %v180 = vld [vmem:[%s4] sm:$0x1]
  %v182 = vperm.slane %v180, 0
  %v184 = vadd.f32 %v176, %v182
  %v185 = vadd.f32 %v177, %v182
  %v186 = vadd.f32 %v178, %v182
  %v187 = vadd.f32 %v179, %v182
  %v188 = vmax.f32 %v184, 0.0
  %v189 = vmax.f32 %v185, 0.0
  %v190 = vmax.f32 %v186, 0.0
  %v191 = vmax.f32 %v187, 0.0
  %192 = vst [vmem:[%s5] sm:$0xff] %v188
  %193 = vst [vmem:[%s5 + $0x8] sm:$0xff] %v189
  %194 = vst [vmem:[%s5 + $0x10] sm:$0xff] %v190
  %195 = vst [vmem:[%s5 + $0x18] sm:$0xff] %v191
  // Predicated region
  $region22: #{generator_forward.12} parent=0 // pred_check
    _
  $region23: #{generator_forward.12} parent=0 // pred_check_branch
    %197 = sbr.rel (0) target = $region25
  $region24: #{generator_forward.12} parent=0 // pred_region
    _
  $region25: #{generator_forward.12} parent=0 // pred_fallthru
    _
  // Predicated region
  $region26: #{generator_forward.12} parent=0 // pred_check
    _
  $region27: #{generator_forward.12} parent=0 // pred_check_branch
    %199 = sbr.rel (0) target = $region29
  $region28: #{generator_forward.12} parent=0 // pred_region
    _
  $region29: #{generator_forward.12} parent=0 // pred_fallthru
    _

// kernel: generator_forward.13
$region0: #{generator_forward.13}
  #allocation0 [shape = 'u32[]', space=smem, size = 0x4, offset = 0x4, fixed_abs, tag = 'smem constant byte address 0x4 - core index']
  #allocation1 [shape = 'u32[72,128]{1,0:T(1,128)}', space=vmem, size = 0x9000, scoped, tag = 'internal scratch']
  %s0 = inlined_call_operand.vmem [shape: f32[32,384], index: 0, kind: input, shape index: {}]
  %s1 = inlined_call_operand.vmem [shape: f32[384,128], index: 1, kind: input, shape index: {}]
  %s2 = inlined_call_operand.vmem [shape: f32[1,128], index: 2, kind: input, shape index: {}]
  %s3 = inlined_call_operand.vmem [shape: f32[1,128], index: 3, kind: input, shape index: {}]
  %s4 = inlined_call_operand.vmem [shape: f32[1,128], index: 4, kind: input, shape index: {}]
  %s5 = inlined_call_operand.vmem [shape: f32[32,128], index: 5, kind: output, shape index: {}]
  %s6 = sld [smem:[#allocation0]]
  $region30: #{generator_forward.13} parent=0
    _
  %s8 = ssub.s32 1, %s6
  %s9 = scalar_select 0, %s8, %s6
  // Predicated region
  $region2: #{generator_forward.13} parent=0 // pred_check
    _
  $region3: #{generator_forward.13} parent=0 // pred_check_branch
    %11 = sbr.rel (0) target = $region5
  $region4: #{generator_forward.13} parent=0 // pred_region
    _
  $region5: #{generator_forward.13} parent=0 // pred_fallthru
    _
  // Predicated region
  $region6: #{generator_forward.13} parent=0 // pred_check
    _
  $region7: #{generator_forward.13} parent=0 // pred_check_branch
    %13 = sbr.rel (0) target = $region9
  $region8: #{generator_forward.13} parent=0 // pred_region
    _
  $region9: #{generator_forward.13} parent=0 // pred_fallthru
    _
  // Predicated region
  $region10: #{generator_forward.13} parent=0 // pred_check
    _
  $region11: #{generator_forward.13} parent=0 // pred_check_branch
    %15 = sbr.rel (0) target = $region13
  $region12: #{generator_forward.13} parent=0 // pred_region
    _
  $region13: #{generator_forward.13} parent=0 // pred_fallthru
    _
  // Predicated region
  $region14: #{generator_forward.13} parent=0 // pred_check
    _
  $region15: #{generator_forward.13} parent=0 // pred_check_branch
    %17 = sbr.rel (0) target = $region17
  $region16: #{generator_forward.13} parent=0 // pred_region
    _
  $region17: #{generator_forward.13} parent=0 // pred_fallthru
    _
  // Predicated region
  $region18: #{generator_forward.13} parent=0 // pred_check
    _
  $region19: #{generator_forward.13} parent=0 // pred_check_branch
    %19 = sbr.rel (0) target = $region21
  $region20: #{generator_forward.13} parent=0 // pred_region
    _
  $region21: #{generator_forward.13} parent=0 // pred_fallthru
    _
  %v20 = vld [vmem:[%s0] sm:$0xff]
  %v21 = vld [vmem:[%s0 + $0x8] sm:$0xff]
  %v22 = vld [vmem:[%s0 + $0x10] sm:$0xff]
  %v23 = vld [vmem:[%s0 + $0x18] sm:$0xff]
  %v24 = vld [vmem:[%s0 + $0x20] sm:$0xff]
  %v25 = vld [vmem:[%s0 + $0x28] sm:$0xff]
  %v26 = vld [vmem:[%s0 + $0x30] sm:$0xff]
  %v27 = vld [vmem:[%s0 + $0x38] sm:$0xff]
  %v28 = vld [vmem:[%s0 + $0x40] sm:$0xff]
  %v29 = vld [vmem:[%s0 + $0x48] sm:$0xff]
  %v30 = vld [vmem:[%s0 + $0x50] sm:$0xff]
  %v31 = vld [vmem:[%s0 + $0x58] sm:$0xff]
  %v32 = vld [vmem:[%s1] sm:$0xff]
  %v33 = vld [vmem:[%s1 + $0x8] sm:$0xff]
  %v34 = vld [vmem:[%s1 + $0x10] sm:$0xff]
  %v35 = vld [vmem:[%s1 + $0x18] sm:$0xff]
  %v36 = vld [vmem:[%s1 + $0x20] sm:$0xff]
  %v37 = vld [vmem:[%s1 + $0x28] sm:$0xff]
  %v38 = vld [vmem:[%s1 + $0x30] sm:$0xff]
  %v39 = vld [vmem:[%s1 + $0x38] sm:$0xff]
  %v40 = vld [vmem:[%s1 + $0x40] sm:$0xff]
  %v41 = vld [vmem:[%s1 + $0x48] sm:$0xff]
  %v42 = vld [vmem:[%s1 + $0x50] sm:$0xff]
  %v43 = vld [vmem:[%s1 + $0x58] sm:$0xff]
  %v44 = vld [vmem:[%s1 + $0x60] sm:$0xff]
  %v45 = vld [vmem:[%s1 + $0x68] sm:$0xff]
  %v46 = vld [vmem:[%s1 + $0x70] sm:$0xff]
  %v47 = vld [vmem:[%s1 + $0x78] sm:$0xff]
  %v48 = vld [vmem:[%s1 + $0x80] sm:$0xff]
  %v49 = vld [vmem:[%s1 + $0x88] sm:$0xff]
  %v50 = vld [vmem:[%s1 + $0x90] sm:$0xff]
  %v51 = vld [vmem:[%s1 + $0x98] sm:$0xff]
  %v52 = vld [vmem:[%s1 + $0xa0] sm:$0xff]
  %v53 = vld [vmem:[%s1 + $0xa8] sm:$0xff]
  %v54 = vld [vmem:[%s1 + $0xb0] sm:$0xff]
  %v55 = vld [vmem:[%s1 + $0xb8] sm:$0xff]
  %v56 = vld [vmem:[%s1 + $0xc0] sm:$0xff]
  %v57 = vld [vmem:[%s1 + $0xc8] sm:$0xff]
  %v58 = vld [vmem:[%s1 + $0xd0] sm:$0xff]
  %v59 = vld [vmem:[%s1 + $0xd8] sm:$0xff]
  %v60 = vld [vmem:[%s1 + $0xe0] sm:$0xff]
  %v61 = vld [vmem:[%s1 + $0xe8] sm:$0xff]
  %v62 = vld [vmem:[%s1 + $0xf0] sm:$0xff]
  %v63 = vld [vmem:[%s1 + $0xf8] sm:$0xff]
  %v64 = vld [vmem:[%s1 + $0x100] sm:$0xff]
  %v65 = vld [vmem:[%s1 + $0x108] sm:$0xff]
  %v66 = vld [vmem:[%s1 + $0x110] sm:$0xff]
  %v67 = vld [vmem:[%s1 + $0x118] sm:$0xff]
  %v68 = vld [vmem:[%s1 + $0x120] sm:$0xff]
  %v69 = vld [vmem:[%s1 + $0x128] sm:$0xff]
  %v70 = vld [vmem:[%s1 + $0x130] sm:$0xff]
  %v71 = vld [vmem:[%s1 + $0x138] sm:$0xff]
  %v72 = vld [vmem:[%s1 + $0x140] sm:$0xff]
  %v73 = vld [vmem:[%s1 + $0x148] sm:$0xff]
  %v74 = vld [vmem:[%s1 + $0x150] sm:$0xff]
  %v75 = vld [vmem:[%s1 + $0x158] sm:$0xff]
  %v76 = vld [vmem:[%s1 + $0x160] sm:$0xff]
  %v77 = vld [vmem:[%s1 + $0x168] sm:$0xff]
  %v78 = vld [vmem:[%s1 + $0x170] sm:$0xff]
  %v79 = vld [vmem:[%s1 + $0x178] sm:$0xff]
  %v80 = vld [vmem:[%s2] sm:$0x1]
  %v82 = vperm.slane %v80, 0
  %84 = vmatpush.msra.mxu0 %v47
  %85 = vmatpush.msra.mxu0 %v46
  %86 = vmatpush.msra.mxu0 %v45
  %87 = vmatpush.msra.mxu0 %v44
  %88 = vmatpush.msra.mxu0 %v43
  %89 = vmatpush.msra.mxu0 %v42
  %90 = vmatpush.msra.mxu0 %v41
  %91 = vmatpush.msra.mxu0 %v40
  %92 = vmatpush.msra.mxu0 %v39
  %93 = vmatpush.msra.mxu0 %v38
  %94 = vmatpush.msra.mxu0 %v37
  %95 = vmatpush.msra.mxu0 %v36
  %96 = vmatpush.msra.mxu0 %v35
  %97 = vmatpush.msra.mxu0 %v34
  %98 = vmatpush.msra.mxu0 %v33
  %99 = vmatpush.msra.mxu0 %v32
  %100 = vmatmul.f32.gmra.mxu0 %v20
  %v101 = vpop.f32.mrf.mxu0
  %v102 = vadd.f32 %v82, %v101
  %103 = vmatmul.f32.gmra.mxu0 %v23
  %v104 = vpop.f32.mrf.mxu0
  %v105 = vadd.f32 %v82, %v104
  %106 = vmatmul.f32.gmra.mxu0 %v26
  %v107 = vpop.f32.mrf.mxu0
  %v108 = vadd.f32 %v82, %v107
  %109 = vmatmul.f32.gmra.mxu0 %v29
  %v110 = vpop.f32.mrf.mxu0
  %v111 = vadd.f32 %v82, %v110
  %112 = vdwg.mxu0
  %113 = vmatpush.msra.mxu0 %v63
  %114 = vmatpush.msra.mxu0 %v62
  %115 = vmatpush.msra.mxu0 %v61
  %116 = vmatpush.msra.mxu0 %v60
  %117 = vmatpush.msra.mxu0 %v59
  %118 = vmatpush.msra.mxu0 %v58
  %119 = vmatpush.msra.mxu0 %v57
  %120 = vmatpush.msra.mxu0 %v56
  %121 = vmatpush.msra.mxu0 %v55
  %122 = vmatpush.msra.mxu0 %v54
  %123 = vmatpush.msra.mxu0 %v53
  %124 = vmatpush.msra.mxu0 %v52
  %125 = vmatpush.msra.mxu0 %v51
  %126 = vmatpush.msra.mxu0 %v50
  %127 = vmatpush.msra.mxu0 %v49
  %128 = vmatpush.msra.mxu0 %v48
  %129 = vmatmul.f32.gmra.mxu0 %v21
  %v130 = vpop.f32.mrf.mxu0
  %v131 = vadd.f32 %v102, %v130
  %132 = vmatmul.f32.gmra.mxu0 %v24
  %v133 = vpop.f32.mrf.mxu0
  %v134 = vadd.f32 %v105, %v133
  %135 = vmatmul.f32.gmra.mxu0 %v27
  %v136 = vpop.f32.mrf.mxu0
  %v137 = vadd.f32 %v108, %v136
  %138 = vmatmul.f32.gmra.mxu0 %v30
  %v139 = vpop.f32.mrf.mxu0
  %v140 = vadd.f32 %v111, %v139
  %141 = vdwg.mxu0
  %142 = vmatpush.msra.mxu0 %v79
  %143 = vmatpush.msra.mxu0 %v78
  %144 = vmatpush.msra.mxu0 %v77
  %145 = vmatpush.msra.mxu0 %v76
  %146 = vmatpush.msra.mxu0 %v75
  %147 = vmatpush.msra.mxu0 %v74
  %148 = vmatpush.msra.mxu0 %v73
  %149 = vmatpush.msra.mxu0 %v72
  %150 = vmatpush.msra.mxu0 %v71
  %151 = vmatpush.msra.mxu0 %v70
  %152 = vmatpush.msra.mxu0 %v69
  %153 = vmatpush.msra.mxu0 %v68
  %154 = vmatpush.msra.mxu0 %v67
  %155 = vmatpush.msra.mxu0 %v66
  %156 = vmatpush.msra.mxu0 %v65
  %157 = vmatpush.msra.mxu0 %v64
  %158 = vmatmul.f32.gmra.mxu0 %v22
  %v159 = vpop.f32.mrf.mxu0
  %v160 = vadd.f32 %v131, %v159
  %161 = vmatmul.f32.gmra.mxu0 %v25
  %v162 = vpop.f32.mrf.mxu0
  %v163 = vadd.f32 %v134, %v162
  %164 = vmatmul.f32.gmra.mxu0 %v28
  %v165 = vpop.f32.mrf.mxu0
  %v166 = vadd.f32 %v137, %v165
  %167 = vmatmul.f32.gmra.mxu0 %v31
  %v168 = vpop.f32.mrf.mxu0
  %v169 = vadd.f32 %v140, %v168
  %170 = vdwg.mxu0
  %v171 = vadd.f32 %v160, %v163
  %v172 = vadd.f32 %v171, %v166
  %v173 = vadd.f32 %v172, %v169
  %v174 = vrot.slane %v173, 4
  %v175 = vadd.f32 %v173, %v174
  %v176 = vrot.slane %v175, 2
  %v177 = vadd.f32 %v175, %v176
  %v178 = vrot.slane %v177, 1
  %v179 = vadd.f32 %v177, %v178
  %v180 = vrcp.pop 32.0
  %v181 = vmul.f32 32.0, %v180
  %v182 = vsub.f32 1.0, %v181
  %v183 = vmul.f32 %v180, %v182
  %v184 = vadd.f32 %v180, %v183
  %vm185 = vweird.f32 %v180
  %v186 = vsel %vm185, %v180, %v184
  %v187 = vmul.f32 %v179, %v186
  %v188 = vsub.f32 %v160, %v187
  %v189 = vsub.f32 %v163, %v187
  %v190 = vsub.f32 %v166, %v187
  %v191 = vsub.f32 %v169, %v187
  %v192 = vmul.f32 %v188, %v188
  %v193 = vmul.f32 %v189, %v189
  %v194 = vmul.f32 %v190, %v190
  %v195 = vmul.f32 %v191, %v191
  %v196 = vadd.f32 %v192, %v193
  %v197 = vadd.f32 %v196, %v194
  %v198 = vadd.f32 %v197, %v195
  %v199 = vrot.slane %v198, 4
  %v200 = vadd.f32 %v198, %v199
  %v201 = vrot.slane %v200, 2
  %v202 = vadd.f32 %v200, %v201
  %v203 = vrot.slane %v202, 1
  %v204 = vadd.f32 %v202, %v203
  %v205 = vmul.f32 %v204, %v186
  %v206 = vadd.f32 %v205, 1e-05
  %v207 = vrsqrt.pop %v206
  %v208 = vmul.f32 %v207, %v206
  %v209 = vmul.f32 %v208, %v207
  %v210 = vmul.f32 0.5, %v209
  %v211 = vsub.f32 1.5, %v210
  %v212 = vmul.f32 %v207, %v211
  %vm213 = vweird.f32 %v206
  %vm214 = vweird.f32 %v207
  %vm215 = vmor %vm213, %vm214
  %v216 = vsel %vm215, %v207, %v212
  %v217 = vmul.f32 %v188, %v216
  %v218 = vmul.f32 %v189, %v216
  %v219 = vmul.f32 %v190, %v216
  %v220 = vmul.f32 %v191, %v216
  %v221 = vld [vmem:[%s3] sm:$0x1]
  %v223 = vperm.slane %v221, 0
  %v225 = vmul.f32 %v217, %v223
  %v226 = vmul.f32 %v218, %v223
  %v227 = vmul.f32 %v219, %v223
  %v228 = vmul.f32 %v220, %v223
  %v229 = vld [vmem:[%s4] sm:$0x1]
  %v231 = vperm.slane %v229, 0
  %v233 = vadd.f32 %v225, %v231
  %v234 = vadd.f32 %v226, %v231
  %v235 = vadd.f32 %v227, %v231
  %v236 = vadd.f32 %v228, %v231
  %v237 = vmax.f32 %v233, 0.0
  %v238 = vmax.f32 %v234, 0.0
  %v239 = vmax.f32 %v235, 0.0
  %v240 = vmax.f32 %v236, 0.0
  %241 = vst [vmem:[%s5] sm:$0xff] %v237
  %242 = vst [vmem:[%s5 + $0x8] sm:$0xff] %v238
  %243 = vst [vmem:[%s5 + $0x10] sm:$0xff] %v239
  %244 = vst [vmem:[%s5 + $0x18] sm:$0xff] %v240
  // Predicated region
  $region22: #{generator_forward.13} parent=0 // pred_check
    _
  $region23: #{generator_forward.13} parent=0 // pred_check_branch
    %246 = sbr.rel (0) target = $region25
  $region24: #{generator_forward.13} parent=0 // pred_region
    _
  $region25: #{generator_forward.13} parent=0 // pred_fallthru
    _
  // Predicated region
  $region26: #{generator_forward.13} parent=0 // pred_check
    _
  $region27: #{generator_forward.13} parent=0 // pred_check_branch
    %248 = sbr.rel (0) target = $region29
  $region28: #{generator_forward.13} parent=0 // pred_region
    _
  $region29: #{generator_forward.13} parent=0 // pred_fallthru
    _

// kernel: generator_forward.14
$region0: #{generator_forward.14}
  #allocation0 [shape = 'u32[]', space=smem, size = 0x4, offset = 0x4, fixed_abs, tag = 'smem constant byte address 0x4 - core index']
  #allocation1 [shape = 'u32[72,128]{1,0:T(1,128)}', space=vmem, size = 0x9000, scoped, tag = 'internal scratch']
  %s0 = inlined_call_operand.vmem [shape: f32[32,384], index: 0, kind: input, shape index: {}]
  %s1 = inlined_call_operand.vmem [shape: f32[384,128], index: 1, kind: input, shape index: {}]
  %s2 = inlined_call_operand.vmem [shape: f32[1,128], index: 2, kind: input, shape index: {}]
  %s3 = inlined_call_operand.vmem [shape: f32[1,128], index: 3, kind: input, shape index: {}]
  %s4 = inlined_call_operand.vmem [shape: f32[1,128], index: 4, kind: input, shape index: {}]
  %s5 = inlined_call_operand.vmem [shape: f32[32,128], index: 5, kind: input, shape index: {}]
  %s6 = inlined_call_operand.vmem [shape: f32[32,128], index: 6, kind: output, shape index: {}]
  %s7 = sld [smem:[#allocation0]]
  $region34: #{generator_forward.14} parent=0
    _
  %s9 = ssub.s32 1, %s7
  %s10 = scalar_select 0, %s9, %s7
  // Predicated region
  $region2: #{generator_forward.14} parent=0 // pred_check
    _
  $region3: #{generator_forward.14} parent=0 // pred_check_branch
    %12 = sbr.rel (0) target = $region5
  $region4: #{generator_forward.14} parent=0 // pred_region
    _
  $region5: #{generator_forward.14} parent=0 // pred_fallthru
    _
  // Predicated region
  $region6: #{generator_forward.14} parent=0 // pred_check
    _
  $region7: #{generator_forward.14} parent=0 // pred_check_branch
    %14 = sbr.rel (0) target = $region9
  $region8: #{generator_forward.14} parent=0 // pred_region
    _
  $region9: #{generator_forward.14} parent=0 // pred_fallthru
    _
  // Predicated region
  $region10: #{generator_forward.14} parent=0 // pred_check
    _
  $region11: #{generator_forward.14} parent=0 // pred_check_branch
    %16 = sbr.rel (0) target = $region13
  $region12: #{generator_forward.14} parent=0 // pred_region
    _
  $region13: #{generator_forward.14} parent=0 // pred_fallthru
    _
  // Predicated region
  $region14: #{generator_forward.14} parent=0 // pred_check
    _
  $region15: #{generator_forward.14} parent=0 // pred_check_branch
    %18 = sbr.rel (0) target = $region17
  $region16: #{generator_forward.14} parent=0 // pred_region
    _
  $region17: #{generator_forward.14} parent=0 // pred_fallthru
    _
  // Predicated region
  $region18: #{generator_forward.14} parent=0 // pred_check
    _
  $region19: #{generator_forward.14} parent=0 // pred_check_branch
    %20 = sbr.rel (0) target = $region21
  $region20: #{generator_forward.14} parent=0 // pred_region
    _
  $region21: #{generator_forward.14} parent=0 // pred_fallthru
    _
  // Predicated region
  $region22: #{generator_forward.14} parent=0 // pred_check
    _
  $region23: #{generator_forward.14} parent=0 // pred_check_branch
    %22 = sbr.rel (0) target = $region25
  $region24: #{generator_forward.14} parent=0 // pred_region
    _
  $region25: #{generator_forward.14} parent=0 // pred_fallthru
    _
  %v23 = vld [vmem:[%s0] sm:$0xff]
  %v24 = vld [vmem:[%s0 + $0x8] sm:$0xff]
  %v25 = vld [vmem:[%s0 + $0x10] sm:$0xff]
  %v26 = vld [vmem:[%s0 + $0x18] sm:$0xff]
  %v27 = vld [vmem:[%s0 + $0x20] sm:$0xff]
  %v28 = vld [vmem:[%s0 + $0x28] sm:$0xff]
  %v29 = vld [vmem:[%s0 + $0x30] sm:$0xff]
  %v30 = vld [vmem:[%s0 + $0x38] sm:$0xff]
  %v31 = vld [vmem:[%s0 + $0x40] sm:$0xff]
  %v32 = vld [vmem:[%s0 + $0x48] sm:$0xff]
  %v33 = vld [vmem:[%s0 + $0x50] sm:$0xff]
  %v34 = vld [vmem:[%s0 + $0x58] sm:$0xff]
  %v35 = vld [vmem:[%s1] sm:$0xff]
  %v36 = vld [vmem:[%s1 + $0x8] sm:$0xff]
  %v37 = vld [vmem:[%s1 + $0x10] sm:$0xff]
  %v38 = vld [vmem:[%s1 + $0x18] sm:$0xff]
  %v39 = vld [vmem:[%s1 + $0x20] sm:$0xff]
  %v40 = vld [vmem:[%s1 + $0x28] sm:$0xff]
  %v41 = vld [vmem:[%s1 + $0x30] sm:$0xff]
  %v42 = vld [vmem:[%s1 + $0x38] sm:$0xff]
  %v43 = vld [vmem:[%s1 + $0x40] sm:$0xff]
  %v44 = vld [vmem:[%s1 + $0x48] sm:$0xff]
  %v45 = vld [vmem:[%s1 + $0x50] sm:$0xff]
  %v46 = vld [vmem:[%s1 + $0x58] sm:$0xff]
  %v47 = vld [vmem:[%s1 + $0x60] sm:$0xff]
  %v48 = vld [vmem:[%s1 + $0x68] sm:$0xff]
  %v49 = vld [vmem:[%s1 + $0x70] sm:$0xff]
  %v50 = vld [vmem:[%s1 + $0x78] sm:$0xff]
  %v51 = vld [vmem:[%s1 + $0x80] sm:$0xff]
  %v52 = vld [vmem:[%s1 + $0x88] sm:$0xff]
  %v53 = vld [vmem:[%s1 + $0x90] sm:$0xff]
  %v54 = vld [vmem:[%s1 + $0x98] sm:$0xff]
  %v55 = vld [vmem:[%s1 + $0xa0] sm:$0xff]
  %v56 = vld [vmem:[%s1 + $0xa8] sm:$0xff]
  %v57 = vld [vmem:[%s1 + $0xb0] sm:$0xff]
  %v58 = vld [vmem:[%s1 + $0xb8] sm:$0xff]
  %v59 = vld [vmem:[%s1 + $0xc0] sm:$0xff]
  %v60 = vld [vmem:[%s1 + $0xc8] sm:$0xff]
  %v61 = vld [vmem:[%s1 + $0xd0] sm:$0xff]
  %v62 = vld [vmem:[%s1 + $0xd8] sm:$0xff]
  %v63 = vld [vmem:[%s1 + $0xe0] sm:$0xff]
  %v64 = vld [vmem:[%s1 + $0xe8] sm:$0xff]
  %v65 = vld [vmem:[%s1 + $0xf0] sm:$0xff]
  %v66 = vld [vmem:[%s1 + $0xf8] sm:$0xff]
  %v67 = vld [vmem:[%s1 + $0x100] sm:$0xff]
  %v68 = vld [vmem:[%s1 + $0x108] sm:$0xff]
  %v69 = vld [vmem:[%s1 + $0x110] sm:$0xff]
  %v70 = vld [vmem:[%s1 + $0x118] sm:$0xff]
  %v71 = vld [vmem:[%s1 + $0x120] sm:$0xff]
  %v72 = vld [vmem:[%s1 + $0x128] sm:$0xff]
  %v73 = vld [vmem:[%s1 + $0x130] sm:$0xff]
  %v74 = vld [vmem:[%s1 + $0x138] sm:$0xff]
  %v75 = vld [vmem:[%s1 + $0x140] sm:$0xff]
  %v76 = vld [vmem:[%s1 + $0x148] sm:$0xff]
  %v77 = vld [vmem:[%s1 + $0x150] sm:$0xff]
  %v78 = vld [vmem:[%s1 + $0x158] sm:$0xff]
  %v79 = vld [vmem:[%s1 + $0x160] sm:$0xff]
  %v80 = vld [vmem:[%s1 + $0x168] sm:$0xff]
  %v81 = vld [vmem:[%s1 + $0x170] sm:$0xff]
  %v82 = vld [vmem:[%s1 + $0x178] sm:$0xff]
  %v83 = vld [vmem:[%s2] sm:$0x1]
  %v85 = vperm.slane %v83, 0
  %87 = vmatpush.msra.mxu0 %v50
  %88 = vmatpush.msra.mxu0 %v49
  %89 = vmatpush.msra.mxu0 %v48
  %90 = vmatpush.msra.mxu0 %v47
  %91 = vmatpush.msra.mxu0 %v46
  %92 = vmatpush.msra.mxu0 %v45
  %93 = vmatpush.msra.mxu0 %v44
  %94 = vmatpush.msra.mxu0 %v43
  %95 = vmatpush.msra.mxu0 %v42
  %96 = vmatpush.msra.mxu0 %v41
  %97 = vmatpush.msra.mxu0 %v40
  %98 = vmatpush.msra.mxu0 %v39
  %99 = vmatpush.msra.mxu0 %v38
  %100 = vmatpush.msra.mxu0 %v37
  %101 = vmatpush.msra.mxu0 %v36
  %102 = vmatpush.msra.mxu0 %v35
  %103 = vmatmul.f32.gmra.mxu0 %v23
  %v104 = vpop.f32.mrf.mxu0
  %v105 = vadd.f32 %v85, %v104
  %106 = vmatmul.f32.gmra.mxu0 %v26
  %v107 = vpop.f32.mrf.mxu0
  %v108 = vadd.f32 %v85, %v107
  %109 = vmatmul.f32.gmra.mxu0 %v29
  %v110 = vpop.f32.mrf.mxu0
  %v111 = vadd.f32 %v85, %v110
  %112 = vmatmul.f32.gmra.mxu0 %v32
  %v113 = vpop.f32.mrf.mxu0
  %v114 = vadd.f32 %v85, %v113
  %115 = vdwg.mxu0
  %116 = vmatpush.msra.mxu0 %v66
  %117 = vmatpush.msra.mxu0 %v65
  %118 = vmatpush.msra.mxu0 %v64
  %119 = vmatpush.msra.mxu0 %v63
  %120 = vmatpush.msra.mxu0 %v62
  %121 = vmatpush.msra.mxu0 %v61
  %122 = vmatpush.msra.mxu0 %v60
  %123 = vmatpush.msra.mxu0 %v59
  %124 = vmatpush.msra.mxu0 %v58
  %125 = vmatpush.msra.mxu0 %v57
  %126 = vmatpush.msra.mxu0 %v56
  %127 = vmatpush.msra.mxu0 %v55
  %128 = vmatpush.msra.mxu0 %v54
  %129 = vmatpush.msra.mxu0 %v53
  %130 = vmatpush.msra.mxu0 %v52
  %131 = vmatpush.msra.mxu0 %v51
  %132 = vmatmul.f32.gmra.mxu0 %v24
  %v133 = vpop.f32.mrf.mxu0
  %v134 = vadd.f32 %v105, %v133
  %135 = vmatmul.f32.gmra.mxu0 %v27
  %v136 = vpop.f32.mrf.mxu0
  %v137 = vadd.f32 %v108, %v136
  %138 = vmatmul.f32.gmra.mxu0 %v30
  %v139 = vpop.f32.mrf.mxu0
  %v140 = vadd.f32 %v111, %v139
  %141 = vmatmul.f32.gmra.mxu0 %v33
  %v142 = vpop.f32.mrf.mxu0
  %v143 = vadd.f32 %v114, %v142
  %144 = vdwg.mxu0
  %145 = vmatpush.msra.mxu0 %v82
  %146 = vmatpush.msra.mxu0 %v81
  %147 = vmatpush.msra.mxu0 %v80
  %148 = vmatpush.msra.mxu0 %v79
  %149 = vmatpush.msra.mxu0 %v78
  %150 = vmatpush.msra.mxu0 %v77
  %151 = vmatpush.msra.mxu0 %v76
  %152 = vmatpush.msra.mxu0 %v75
  %153 = vmatpush.msra.mxu0 %v74
  %154 = vmatpush.msra.mxu0 %v73
  %155 = vmatpush.msra.mxu0 %v72
  %156 = vmatpush.msra.mxu0 %v71
  %157 = vmatpush.msra.mxu0 %v70
  %158 = vmatpush.msra.mxu0 %v69
  %159 = vmatpush.msra.mxu0 %v68
  %160 = vmatpush.msra.mxu0 %v67
  %161 = vmatmul.f32.gmra.mxu0 %v25
  %v162 = vpop.f32.mrf.mxu0
  %v163 = vadd.f32 %v134, %v162
  %164 = vmatmul.f32.gmra.mxu0 %v28
  %v165 = vpop.f32.mrf.mxu0
  %v166 = vadd.f32 %v137, %v165
  %167 = vmatmul.f32.gmra.mxu0 %v31
  %v168 = vpop.f32.mrf.mxu0
  %v169 = vadd.f32 %v140, %v168
  %170 = vmatmul.f32.gmra.mxu0 %v34
  %v171 = vpop.f32.mrf.mxu0
  %v172 = vadd.f32 %v143, %v171
  %173 = vdwg.mxu0
  %v174 = vadd.f32 %v163, %v166
  %v175 = vadd.f32 %v174, %v169
  %v176 = vadd.f32 %v175, %v172
  %v177 = vrot.slane %v176, 4
  %v178 = vadd.f32 %v176, %v177
  %v179 = vrot.slane %v178, 2
  %v180 = vadd.f32 %v178, %v179
  %v181 = vrot.slane %v180, 1
  %v182 = vadd.f32 %v180, %v181
  %v183 = vrcp.pop 32.0
  %v184 = vmul.f32 32.0, %v183
  %v185 = vsub.f32 1.0, %v184
  %v186 = vmul.f32 %v183, %v185
  %v187 = vadd.f32 %v183, %v186
  %vm188 = vweird.f32 %v183
  %v189 = vsel %vm188, %v183, %v187
  %v190 = vmul.f32 %v182, %v189
  %v191 = vsub.f32 %v163, %v190
  %v192 = vsub.f32 %v166, %v190
  %v193 = vsub.f32 %v169, %v190
  %v194 = vsub.f32 %v172, %v190
  %v195 = vmul.f32 %v191, %v191
  %v196 = vmul.f32 %v192, %v192
  %v197 = vmul.f32 %v193, %v193
  %v198 = vmul.f32 %v194, %v194
  %v199 = vadd.f32 %v195, %v196
  %v200 = vadd.f32 %v199, %v197
  %v201 = vadd.f32 %v200, %v198
  %v202 = vrot.slane %v201, 4
  %v203 = vadd.f32 %v201, %v202
  %v204 = vrot.slane %v203, 2
  %v205 = vadd.f32 %v203, %v204
  %v206 = vrot.slane %v205, 1
  %v207 = vadd.f32 %v205, %v206
  %v208 = vmul.f32 %v207, %v189
  %v209 = vadd.f32 %v208, 1e-05
  %v210 = vrsqrt.pop %v209
  %v211 = vmul.f32 %v210, %v209
  %v212 = vmul.f32 %v211, %v210
  %v213 = vmul.f32 0.5, %v212
  %v214 = vsub.f32 1.5, %v213
  %v215 = vmul.f32 %v210, %v214
  %vm216 = vweird.f32 %v209
  %vm217 = vweird.f32 %v210
  %vm218 = vmor %vm216, %vm217
  %v219 = vsel %vm218, %v210, %v215
  %v220 = vmul.f32 %v191, %v219
  %v221 = vmul.f32 %v192, %v219
  %v222 = vmul.f32 %v193, %v219
  %v223 = vmul.f32 %v194, %v219
  %v224 = vld [vmem:[%s3] sm:$0x1]
  %v226 = vperm.slane %v224, 0
  %v228 = vmul.f32 %v220, %v226
  %v229 = vmul.f32 %v221, %v226
  %v230 = vmul.f32 %v222, %v226
  %v231 = vmul.f32 %v223, %v226
  %v232 = vld [vmem:[%s4] sm:$0x1]
  %v234 = vperm.slane %v232, 0
  %v236 = vadd.f32 %v228, %v234
  %v237 = vadd.f32 %v229, %v234
  %v238 = vadd.f32 %v230, %v234
  %v239 = vadd.f32 %v231, %v234
  %v240 = vld [vmem:[%s5] sm:$0xff]
  %v241 = vld [vmem:[%s5 + $0x8] sm:$0xff]
  %v242 = vld [vmem:[%s5 + $0x10] sm:$0xff]
  %v243 = vld [vmem:[%s5 + $0x18] sm:$0xff]
  %v244 = vadd.f32 %v240, %v236
  %v245 = vadd.f32 %v241, %v237
  %v246 = vadd.f32 %v242, %v238
  %v247 = vadd.f32 %v243, %v239
  %248 = vst [vmem:[%s6] sm:$0xff] %v244
  %249 = vst [vmem:[%s6 + $0x8] sm:$0xff] %v245
  %250 = vst [vmem:[%s6 + $0x10] sm:$0xff] %v246
  %251 = vst [vmem:[%s6 + $0x18] sm:$0xff] %v247
  // Predicated region
  $region26: #{generator_forward.14} parent=0 // pred_check
    _
  $region27: #{generator_forward.14} parent=0 // pred_check_branch
    %253 = sbr.rel (0) target = $region29
  $region28: #{generator_forward.14} parent=0 // pred_region
    _
  $region29: #{generator_forward.14} parent=0 // pred_fallthru
    _
  // Predicated region
  $region30: #{generator_forward.14} parent=0 // pred_check
    _
  $region31: #{generator_forward.14} parent=0 // pred_check_branch
    %255 = sbr.rel (0) target = $region33
  $region32: #{generator_forward.14} parent=0 // pred_region
    _
  $region33: #{generator_forward.14} parent=0 // pred_fallthru
    _

// kernel: generator_forward.17
$region0: #{generator_forward.17}
  #allocation0 [shape = 'u32[]', space=smem, size = 0x4, offset = 0x4, fixed_abs, tag = 'smem constant byte address 0x4 - core index']
  #allocation1 [shape = 'u32[72,128]{1,0:T(1,128)}', space=vmem, size = 0x9000, scoped, tag = 'internal scratch']
  %s0 = inlined_call_operand.vmem [shape: f32[128,384], index: 0, kind: input, shape index: {}]
  %s1 = inlined_call_operand.vmem [shape: f32[384,128], index: 1, kind: input, shape index: {}]
  %s2 = inlined_call_operand.vmem [shape: f32[1,128], index: 2, kind: input, shape index: {}]
  %s3 = inlined_call_operand.vmem [shape: f32[1,128], index: 3, kind: input, shape index: {}]
  %s4 = inlined_call_operand.vmem [shape: f32[1,128], index: 4, kind: input, shape index: {}]
  %s5 = inlined_call_operand.vmem [shape: f32[128,128], index: 5, kind: output, shape index: {}]
  %s6 = sld [smem:[#allocation0]]
  $region30: #{generator_forward.17} parent=0
    _
  %s8 = ssub.s32 1, %s6
  %s9 = scalar_select 0, %s8, %s6
  // Predicated region
  $region2: #{generator_forward.17} parent=0 // pred_check
    _
  $region3: #{generator_forward.17} parent=0 // pred_check_branch
    %11 = sbr.rel (0) target = $region5
  $region4: #{generator_forward.17} parent=0 // pred_region
    _
  $region5: #{generator_forward.17} parent=0 // pred_fallthru
    _
  // Predicated region
  $region6: #{generator_forward.17} parent=0 // pred_check
    _
  $region7: #{generator_forward.17} parent=0 // pred_check_branch
    %13 = sbr.rel (0) target = $region9
  $region8: #{generator_forward.17} parent=0 // pred_region
    _
  $region9: #{generator_forward.17} parent=0 // pred_fallthru
    _
  // Predicated region
  $region10: #{generator_forward.17} parent=0 // pred_check
    _
  $region11: #{generator_forward.17} parent=0 // pred_check_branch
    %15 = sbr.rel (0) target = $region13
  $region12: #{generator_forward.17} parent=0 // pred_region
    _
  $region13: #{generator_forward.17} parent=0 // pred_fallthru
    _
  // Predicated region
  $region14: #{generator_forward.17} parent=0 // pred_check
    _
  $region15: #{generator_forward.17} parent=0 // pred_check_branch
    %17 = sbr.rel (0) target = $region17
  $region16: #{generator_forward.17} parent=0 // pred_region
    _
  $region17: #{generator_forward.17} parent=0 // pred_fallthru
    _
  // Predicated region
  $region18: #{generator_forward.17} parent=0 // pred_check
    _
  $region19: #{generator_forward.17} parent=0 // pred_check_branch
    %19 = sbr.rel (0) target = $region21
  $region20: #{generator_forward.17} parent=0 // pred_region
    _
  $region21: #{generator_forward.17} parent=0 // pred_fallthru
    _
  %v20 = vld [vmem:[%s0] sm:$0xff]
  %v21 = vld [vmem:[%s0 + $0x8] sm:$0xff]
  %v22 = vld [vmem:[%s0 + $0x10] sm:$0xff]
  %v23 = vld [vmem:[%s0 + $0x18] sm:$0xff]
  %v24 = vld [vmem:[%s0 + $0x20] sm:$0xff]
  %v25 = vld [vmem:[%s0 + $0x28] sm:$0xff]
  %v26 = vld [vmem:[%s0 + $0x30] sm:$0xff]
  %v27 = vld [vmem:[%s0 + $0x38] sm:$0xff]
  %v28 = vld [vmem:[%s0 + $0x40] sm:$0xff]
  %v29 = vld [vmem:[%s0 + $0x48] sm:$0xff]
  %v30 = vld [vmem:[%s0 + $0x50] sm:$0xff]
  %v31 = vld [vmem:[%s0 + $0x58] sm:$0xff]
  %v32 = vld [vmem:[%s0 + $0x60] sm:$0xff]
  %v33 = vld [vmem:[%s0 + $0x68] sm:$0xff]
  %v34 = vld [vmem:[%s0 + $0x70] sm:$0xff]
  %v35 = vld [vmem:[%s0 + $0x78] sm:$0xff]
  %v36 = vld [vmem:[%s0 + $0x80] sm:$0xff]
  %v37 = vld [vmem:[%s0 + $0x88] sm:$0xff]
  %v38 = vld [vmem:[%s0 + $0x90] sm:$0xff]
  %v39 = vld [vmem:[%s0 + $0x98] sm:$0xff]
  %v40 = vld [vmem:[%s0 + $0xa0] sm:$0xff]
  %v41 = vld [vmem:[%s0 + $0xa8] sm:$0xff]
  %v42 = vld [vmem:[%s0 + $0xb0] sm:$0xff]
  %v43 = vld [vmem:[%s0 + $0xb8] sm:$0xff]
  %v44 = vld [vmem:[%s0 + $0xc0] sm:$0xff]
  %v45 = vld [vmem:[%s0 + $0xc8] sm:$0xff]
  %v46 = vld [vmem:[%s0 + $0xd0] sm:$0xff]
  %v47 = vld [vmem:[%s0 + $0xd8] sm:$0xff]
  %v48 = vld [vmem:[%s0 + $0xe0] sm:$0xff]
  %v49 = vld [vmem:[%s0 + $0xe8] sm:$0xff]
  %v50 = vld [vmem:[%s0 + $0xf0] sm:$0xff]
  %v51 = vld [vmem:[%s0 + $0xf8] sm:$0xff]
  %v52 = vld [vmem:[%s0 + $0x100] sm:$0xff]
  %v53 = vld [vmem:[%s0 + $0x108] sm:$0xff]
  %v54 = vld [vmem:[%s0 + $0x110] sm:$0xff]
  %v55 = vld [vmem:[%s0 + $0x118] sm:$0xff]
  %v56 = vld [vmem:[%s0 + $0x120] sm:$0xff]
  %v57 = vld [vmem:[%s0 + $0x128] sm:$0xff]
  %v58 = vld [vmem:[%s0 + $0x130] sm:$0xff]
  %v59 = vld [vmem:[%s0 + $0x138] sm:$0xff]
  %v60 = vld [vmem:[%s0 + $0x140] sm:$0xff]
  %v61 = vld [vmem:[%s0 + $0x148] sm:$0xff]
  %v62 = vld [vmem:[%s0 + $0x150] sm:$0xff]
  %v63 = vld [vmem:[%s0 + $0x158] sm:$0xff]
  %v64 = vld [vmem:[%s0 + $0x160] sm:$0xff]
  %v65 = vld [vmem:[%s0 + $0x168] sm:$0xff]
  %v66 = vld [vmem:[%s0 + $0x170] sm:$0xff]
  %v67 = vld [vmem:[%s0 + $0x178] sm:$0xff]
  %v68 = vld [vmem:[%s1] sm:$0xff]
  %v69 = vld [vmem:[%s1 + $0x8] sm:$0xff]
  %v70 = vld [vmem:[%s1 + $0x10] sm:$0xff]
  %v71 = vld [vmem:[%s1 + $0x18] sm:$0xff]
  %v72 = vld [vmem:[%s1 + $0x20] sm:$0xff]
  %v73 = vld [vmem:[%s1 + $0x28] sm:$0xff]
  %v74 = vld [vmem:[%s1 + $0x30] sm:$0xff]
  %v75 = vld [vmem:[%s1 + $0x38] sm:$0xff]
  %v76 = vld [vmem:[%s1 + $0x40] sm:$0xff]
  %v77 = vld [vmem:[%s1 + $0x48] sm:$0xff]
  %v78 = vld [vmem:[%s1 + $0x50] sm:$0xff]
  %v79 = vld [vmem:[%s1 + $0x58] sm:$0xff]
  %v80 = vld [vmem:[%s1 + $0x60] sm:$0xff]
  %v81 = vld [vmem:[%s1 + $0x68] sm:$0xff]
  %v82 = vld [vmem:[%s1 + $0x70] sm:$0xff]
  %v83 = vld [vmem:[%s1 + $0x78] sm:$0xff]
  %v84 = vld [vmem:[%s1 + $0x80] sm:$0xff]
  %v85 = vld [vmem:[%s1 + $0x88] sm:$0xff]
  %v86 = vld [vmem:[%s1 + $0x90] sm:$0xff]
  %v87 = vld [vmem:[%s1 + $0x98] sm:$0xff]
  %v88 = vld [vmem:[%s1 + $0xa0] sm:$0xff]
  %v89 = vld [vmem:[%s1 + $0xa8] sm:$0xff]
  %v90 = vld [vmem:[%s1 + $0xb0] sm:$0xff]
  %v91 = vld [vmem:[%s1 + $0xb8] sm:$0xff]
  %v92 = vld [vmem:[%s1 + $0xc0] sm:$0xff]
  %v93 = vld [vmem:[%s1 + $0xc8] sm:$0xff]
  %v94 = vld [vmem:[%s1 + $0xd0] sm:$0xff]
  %v95 = vld [vmem:[%s1 + $0xd8] sm:$0xff]
  %v96 = vld [vmem:[%s1 + $0xe0] sm:$0xff]
  %v97 = vld [vmem:[%s1 + $0xe8] sm:$0xff]
  %v98 = vld [vmem:[%s1 + $0xf0] sm:$0xff]
  %v99 = vld [vmem:[%s1 + $0xf8] sm:$0xff]
  %v100 = vld [vmem:[%s1 + $0x100] sm:$0xff]
  %v101 = vld [vmem:[%s1 + $0x108] sm:$0xff]
  %v102 = vld [vmem:[%s1 + $0x110] sm:$0xff]
  %v103 = vld [vmem:[%s1 + $0x118] sm:$0xff]
  %v104 = vld [vmem:[%s1 + $0x120] sm:$0xff]
  %v105 = vld [vmem:[%s1 + $0x128] sm:$0xff]
  %v106 = vld [vmem:[%s1 + $0x130] sm:$0xff]
  %v107 = vld [vmem:[%s1 + $0x138] sm:$0xff]
  %v108 = vld [vmem:[%s1 + $0x140] sm:$0xff]
  %v109 = vld [vmem:[%s1 + $0x148] sm:$0xff]
  %v110 = vld [vmem:[%s1 + $0x150] sm:$0xff]
  %v111 = vld [vmem:[%s1 + $0x158] sm:$0xff]
  %v112 = vld [vmem:[%s1 + $0x160] sm:$0xff]
  %v113 = vld [vmem:[%s1 + $0x168] sm:$0xff]
  %v114 = vld [vmem:[%s1 + $0x170] sm:$0xff]
  %v115 = vld [vmem:[%s1 + $0x178] sm:$0xff]
  %v116 = vld [vmem:[%s2] sm:$0x1]
  %v118 = vperm.slane %v116, 0
  %120 = vmatpush.msra.mxu0 %v83
  %121 = vmatpush.msra.mxu0 %v82
  %122 = vmatpush.msra.mxu0 %v81
  %123 = vmatpush.msra.mxu0 %v80
  %124 = vmatpush.msra.mxu0 %v79
  %125 = vmatpush.msra.mxu0 %v78
  %126 = vmatpush.msra.mxu0 %v77
  %127 = vmatpush.msra.mxu0 %v76
  %128 = vmatpush.msra.mxu0 %v75
  %129 = vmatpush.msra.mxu0 %v74
  %130 = vmatpush.msra.mxu0 %v73
  %131 = vmatpush.msra.mxu0 %v72
  %132 = vmatpush.msra.mxu0 %v71
  %133 = vmatpush.msra.mxu0 %v70
  %134 = vmatpush.msra.mxu0 %v69
  %135 = vmatpush.msra.mxu0 %v68
  %136 = vmatmul.f32.gmra.mxu0 %v20
  %v137 = vpop.f32.mrf.mxu0
  %v138 = vadd.f32 %v118, %v137
  %139 = vmatmul.f32.gmra.mxu0 %v23
  %v140 = vpop.f32.mrf.mxu0
  %v141 = vadd.f32 %v118, %v140
  %142 = vmatmul.f32.gmra.mxu0 %v26
  %v143 = vpop.f32.mrf.mxu0
  %v144 = vadd.f32 %v118, %v143
  %145 = vmatmul.f32.gmra.mxu0 %v29
  %v146 = vpop.f32.mrf.mxu0
  %v147 = vadd.f32 %v118, %v146
  %148 = vmatmul.f32.gmra.mxu0 %v32
  %v149 = vpop.f32.mrf.mxu0
  %v150 = vadd.f32 %v118, %v149
  %151 = vmatmul.f32.gmra.mxu0 %v35
  %v152 = vpop.f32.mrf.mxu0
  %v153 = vadd.f32 %v118, %v152
  %154 = vmatmul.f32.gmra.mxu0 %v38
  %v155 = vpop.f32.mrf.mxu0
  %v156 = vadd.f32 %v118, %v155
  %157 = vmatmul.f32.gmra.mxu0 %v41
  %v158 = vpop.f32.mrf.mxu0
  %v159 = vadd.f32 %v118, %v158
  %160 = vmatmul.f32.gmra.mxu0 %v44
  %v161 = vpop.f32.mrf.mxu0
  %v162 = vadd.f32 %v118, %v161
  %163 = vmatmul.f32.gmra.mxu0 %v47
  %v164 = vpop.f32.mrf.mxu0
  %v165 = vadd.f32 %v118, %v164
  %166 = vmatmul.f32.gmra.mxu0 %v50
  %v167 = vpop.f32.mrf.mxu0
  %v168 = vadd.f32 %v118, %v167
  %169 = vmatmul.f32.gmra.mxu0 %v53
  %v170 = vpop.f32.mrf.mxu0
  %v171 = vadd.f32 %v118, %v170
  %172 = vmatmul.f32.gmra.mxu0 %v56
  %v173 = vpop.f32.mrf.mxu0
  %v174 = vadd.f32 %v118, %v173
  %175 = vmatmul.f32.gmra.mxu0 %v59
  %v176 = vpop.f32.mrf.mxu0
  %v177 = vadd.f32 %v118, %v176
  %178 = vmatmul.f32.gmra.mxu0 %v62
  %v179 = vpop.f32.mrf.mxu0
  %v180 = vadd.f32 %v118, %v179
  %181 = vmatmul.f32.gmra.mxu0 %v65
  %v182 = vpop.f32.mrf.mxu0
  %v183 = vadd.f32 %v118, %v182
  %184 = vdwg.mxu0
  %185 = vmatpush.msra.mxu0 %v99
  %186 = vmatpush.msra.mxu0 %v98
  %187 = vmatpush.msra.mxu0 %v97
  %188 = vmatpush.msra.mxu0 %v96
  %189 = vmatpush.msra.mxu0 %v95
  %190 = vmatpush.msra.mxu0 %v94
  %191 = vmatpush.msra.mxu0 %v93
  %192 = vmatpush.msra.mxu0 %v92
  %193 = vmatpush.msra.mxu0 %v91
  %194 = vmatpush.msra.mxu0 %v90
  %195 = vmatpush.msra.mxu0 %v89
  %196 = vmatpush.msra.mxu0 %v88
  %197 = vmatpush.msra.mxu0 %v87
  %198 = vmatpush.msra.mxu0 %v86
  %199 = vmatpush.msra.mxu0 %v85
  %200 = vmatpush.msra.mxu0 %v84
  %201 = vmatmul.f32.gmra.mxu0 %v21
  %v202 = vpop.f32.mrf.mxu0
  %v203 = vadd.f32 %v138, %v202
  %204 = vmatmul.f32.gmra.mxu0 %v24
  %v205 = vpop.f32.mrf.mxu0
  %v206 = vadd.f32 %v141, %v205
  %207 = vmatmul.f32.gmra.mxu0 %v27
  %v208 = vpop.f32.mrf.mxu0
  %v209 = vadd.f32 %v144, %v208
  %210 = vmatmul.f32.gmra.mxu0 %v30
  %v211 = vpop.f32.mrf.mxu0
  %v212 = vadd.f32 %v147, %v211
  %213 = vmatmul.f32.gmra.mxu0 %v33
  %v214 = vpop.f32.mrf.mxu0
  %v215 = vadd.f32 %v150, %v214
  %216 = vmatmul.f32.gmra.mxu0 %v36
  %v217 = vpop.f32.mrf.mxu0
  %v218 = vadd.f32 %v153, %v217
  %219 = vmatmul.f32.gmra.mxu0 %v39
  %v220 = vpop.f32.mrf.mxu0
  %v221 = vadd.f32 %v156, %v220
  %222 = vmatmul.f32.gmra.mxu0 %v42
  %v223 = vpop.f32.mrf.mxu0
  %v224 = vadd.f32 %v159, %v223
  %225 = vmatmul.f32.gmra.mxu0 %v45
  %v226 = vpop.f32.mrf.mxu0
  %v227 = vadd.f32 %v162, %v226
  %228 = vmatmul.f32.gmra.mxu0 %v48
  %v229 = vpop.f32.mrf.mxu0
  %v230 = vadd.f32 %v165, %v229
  %231 = vmatmul.f32.gmra.mxu0 %v51
  %v232 = vpop.f32.mrf.mxu0
  %v233 = vadd.f32 %v168, %v232
  %234 = vmatmul.f32.gmra.mxu0 %v54
  %v235 = vpop.f32.mrf.mxu0
  %v236 = vadd.f32 %v171, %v235
  %237 = vmatmul.f32.gmra.mxu0 %v57
  %v238 = vpop.f32.mrf.mxu0
  %v239 = vadd.f32 %v174, %v238
  %240 = vmatmul.f32.gmra.mxu0 %v60
  %v241 = vpop.f32.mrf.mxu0
  %v242 = vadd.f32 %v177, %v241
  %243 = vmatmul.f32.gmra.mxu0 %v63
  %v244 = vpop.f32.mrf.mxu0
  %v245 = vadd.f32 %v180, %v244
  %246 = vmatmul.f32.gmra.mxu0 %v66
  %v247 = vpop.f32.mrf.mxu0
  %v248 = vadd.f32 %v183, %v247
  %249 = vdwg.mxu0
  %250 = vmatpush.msra.mxu0 %v115
  %251 = vmatpush.msra.mxu0 %v114
  %252 = vmatpush.msra.mxu0 %v113
  %253 = vmatpush.msra.mxu0 %v112
  %254 = vmatpush.msra.mxu0 %v111
  %255 = vmatpush.msra.mxu0 %v110
  %256 = vmatpush.msra.mxu0 %v109
  %257 = vmatpush.msra.mxu0 %v108
  %258 = vmatpush.msra.mxu0 %v107
  %259 = vmatpush.msra.mxu0 %v106
  %260 = vmatpush.msra.mxu0 %v105
  %261 = vmatpush.msra.mxu0 %v104
  %262 = vmatpush.msra.mxu0 %v103
  %263 = vmatpush.msra.mxu0 %v102
  %264 = vmatpush.msra.mxu0 %v101
  %265 = vmatpush.msra.mxu0 %v100
  %266 = vmatmul.f32.gmra.mxu0 %v22
  %v267 = vpop.f32.mrf.mxu0
  %v268 = vadd.f32 %v203, %v267
  %269 = vmatmul.f32.gmra.mxu0 %v25
  %v270 = vpop.f32.mrf.mxu0
  %v271 = vadd.f32 %v206, %v270
  %272 = vmatmul.f32.gmra.mxu0 %v28
  %v273 = vpop.f32.mrf.mxu0
  %v274 = vadd.f32 %v209, %v273
  %275 = vmatmul.f32.gmra.mxu0 %v31
  %v276 = vpop.f32.mrf.mxu0
  %v277 = vadd.f32 %v212, %v276
  %278 = vmatmul.f32.gmra.mxu0 %v34
  %v279 = vpop.f32.mrf.mxu0
  %v280 = vadd.f32 %v215, %v279
  %281 = vmatmul.f32.gmra.mxu0 %v37
  %v282 = vpop.f32.mrf.mxu0
  %v283 = vadd.f32 %v218, %v282
  %284 = vmatmul.f32.gmra.mxu0 %v40
  %v285 = vpop.f32.mrf.mxu0
  %v286 = vadd.f32 %v221, %v285
  %287 = vmatmul.f32.gmra.mxu0 %v43
  %v288 = vpop.f32.mrf.mxu0
  %v289 = vadd.f32 %v224, %v288
  %290 = vmatmul.f32.gmra.mxu0 %v46
  %v291 = vpop.f32.mrf.mxu0
  %v292 = vadd.f32 %v227, %v291
  %293 = vmatmul.f32.gmra.mxu0 %v49
  %v294 = vpop.f32.mrf.mxu0
  %v295 = vadd.f32 %v230, %v294
  %296 = vmatmul.f32.gmra.mxu0 %v52
  %v297 = vpop.f32.mrf.mxu0
  %v298 = vadd.f32 %v233, %v297
  %299 = vmatmul.f32.gmra.mxu0 %v55
  %v300 = vpop.f32.mrf.mxu0
  %v301 = vadd.f32 %v236, %v300
  %302 = vmatmul.f32.gmra.mxu0 %v58
  %v303 = vpop.f32.mrf.mxu0
  %v304 = vadd.f32 %v239, %v303
  %305 = vmatmul.f32.gmra.mxu0 %v61
  %v306 = vpop.f32.mrf.mxu0
  %v307 = vadd.f32 %v242, %v306
  %308 = vmatmul.f32.gmra.mxu0 %v64
  %v309 = vpop.f32.mrf.mxu0
  %v310 = vadd.f32 %v245, %v309
  %311 = vmatmul.f32.gmra.mxu0 %v67
  %v312 = vpop.f32.mrf.mxu0
  %v313 = vadd.f32 %v248, %v312
  %314 = vdwg.mxu0
  %v315 = vadd.f32 %v268, %v271
  %v316 = vadd.f32 %v315, %v274
  %v317 = vadd.f32 %v316, %v277
  %v318 = vadd.f32 %v317, %v280
  %v319 = vadd.f32 %v318, %v283
  %v320 = vadd.f32 %v319, %v286
  %v321 = vadd.f32 %v320, %v289
  %v322 = vadd.f32 %v321, %v292
  %v323 = vadd.f32 %v322, %v295
  %v324 = vadd.f32 %v323, %v298
  %v325 = vadd.f32 %v324, %v301
  %v326 = vadd.f32 %v325, %v304
  %v327 = vadd.f32 %v326, %v307
  %v328 = vadd.f32 %v327, %v310
  %v329 = vadd.f32 %v328, %v313
  %v330 = vrot.slane %v329, 4
  %v331 = vadd.f32 %v329, %v330
  %v332 = vrot.slane %v331, 2
  %v333 = vadd.f32 %v331, %v332
  %v334 = vrot.slane %v333, 1
  %v335 = vadd.f32 %v333, %v334
  %v336 = vrcp.pop 128.0
  %v337 = vmul.f32 128.0, %v336
  %v338 = vsub.f32 1.0, %v337
  %v339 = vmul.f32 %v336, %v338
  %v340 = vadd.f32 %v336, %v339
  %vm341 = vweird.f32 %v336
  %v342 = vsel %vm341, %v336, %v340
  %v343 = vmul.f32 %v335, %v342
  %v344 = vsub.f32 %v268, %v343
  %v345 = vsub.f32 %v271, %v343
  %v346 = vsub.f32 %v274, %v343
  %v347 = vsub.f32 %v277, %v343
  %v348 = vsub.f32 %v280, %v343
  %v349 = vsub.f32 %v283, %v343
  %v350 = vsub.f32 %v286, %v343
  %v351 = vsub.f32 %v289, %v343
  %v352 = vsub.f32 %v292, %v343
  %v353 = vsub.f32 %v295, %v343
  %v354 = vsub.f32 %v298, %v343
  %v355 = vsub.f32 %v301, %v343
  %v356 = vsub.f32 %v304, %v343
  %v357 = vsub.f32 %v307, %v343
  %v358 = vsub.f32 %v310, %v343
  %v359 = vsub.f32 %v313, %v343
  %v360 = vmul.f32 %v344, %v344
  %v361 = vmul.f32 %v345, %v345
  %v362 = vmul.f32 %v346, %v346
  %v363 = vmul.f32 %v347, %v347
  %v364 = vmul.f32 %v348, %v348
  %v365 = vmul.f32 %v349, %v349
  %v366 = vmul.f32 %v350, %v350
  %v367 = vmul.f32 %v351, %v351
  %v368 = vmul.f32 %v352, %v352
  %v369 = vmul.f32 %v353, %v353
  %v370 = vmul.f32 %v354, %v354
  %v371 = vmul.f32 %v355, %v355
  %v372 = vmul.f32 %v356, %v356
  %v373 = vmul.f32 %v357, %v357
  %v374 = vmul.f32 %v358, %v358
  %v375 = vmul.f32 %v359, %v359
  %v376 = vadd.f32 %v360, %v361
  %v377 = vadd.f32 %v376, %v362
  %v378 = vadd.f32 %v377, %v363
  %v379 = vadd.f32 %v378, %v364
  %v380 = vadd.f32 %v379, %v365
  %v381 = vadd.f32 %v380, %v366
  %v382 = vadd.f32 %v381, %v367
  %v383 = vadd.f32 %v382, %v368
  %v384 = vadd.f32 %v383, %v369
  %v385 = vadd.f32 %v384, %v370
  %v386 = vadd.f32 %v385, %v371
  %v387 = vadd.f32 %v386, %v372
  %v388 = vadd.f32 %v387, %v373
  %v389 = vadd.f32 %v388, %v374
  %v390 = vadd.f32 %v389, %v375
  %v391 = vrot.slane %v390, 4
  %v392 = vadd.f32 %v390, %v391
  %v393 = vrot.slane %v392, 2
  %v394 = vadd.f32 %v392, %v393
  %v395 = vrot.slane %v394, 1
  %v396 = vadd.f32 %v394, %v395
  %v397 = vmul.f32 %v396, %v342
  %v398 = vadd.f32 %v397, 1e-05
  %v399 = vrsqrt.pop %v398
  %v400 = vmul.f32 %v399, %v398
  %v401 = vmul.f32 %v400, %v399
  %v402 = vmul.f32 0.5, %v401
  %v403 = vsub.f32 1.5, %v402
  %v404 = vmul.f32 %v399, %v403
  %vm405 = vweird.f32 %v398
  %vm406 = vweird.f32 %v399
  %vm407 = vmor %vm405, %vm406
  %v408 = vsel %vm407, %v399, %v404
  %v409 = vmul.f32 %v344, %v408
  %v410 = vmul.f32 %v345, %v408
  %v411 = vmul.f32 %v346, %v408
  %v412 = vmul.f32 %v347, %v408
  %v413 = vmul.f32 %v348, %v408
  %v414 = vmul.f32 %v349, %v408
  %v415 = vmul.f32 %v350, %v408
  %v416 = vmul.f32 %v351, %v408
  %v417 = vmul.f32 %v352, %v408
  %v418 = vmul.f32 %v353, %v408
  %v419 = vmul.f32 %v354, %v408
  %v420 = vmul.f32 %v355, %v408
  %v421 = vmul.f32 %v356, %v408
  %v422 = vmul.f32 %v357, %v408
  %v423 = vmul.f32 %v358, %v408
  %v424 = vmul.f32 %v359, %v408
  %v425 = vld [vmem:[%s3] sm:$0x1]
  %v427 = vperm.slane %v425, 0
  %v429 = vmul.f32 %v409, %v427
  %v430 = vmul.f32 %v410, %v427
  %v431 = vmul.f32 %v411, %v427
  %v432 = vmul.f32 %v412, %v427
  %v433 = vmul.f32 %v413, %v427
  %v434 = vmul.f32 %v414, %v427
  %v435 = vmul.f32 %v415, %v427
  %v436 = vmul.f32 %v416, %v427
  %v437 = vmul.f32 %v417, %v427
  %v438 = vmul.f32 %v418, %v427
  %v439 = vmul.f32 %v419, %v427
  %v440 = vmul.f32 %v420, %v427
  %v441 = vmul.f32 %v421, %v427
  %v442 = vmul.f32 %v422, %v427
  %v443 = vmul.f32 %v423, %v427
  %v444 = vmul.f32 %v424, %v427
  %v445 = vld [vmem:[%s4] sm:$0x1]
  %v447 = vperm.slane %v445, 0
  %v449 = vadd.f32 %v429, %v447
  %v450 = vadd.f32 %v430, %v447
  %v451 = vadd.f32 %v431, %v447
  %v452 = vadd.f32 %v432, %v447
  %v453 = vadd.f32 %v433, %v447
  %v454 = vadd.f32 %v434, %v447
  %v455 = vadd.f32 %v435, %v447
  %v456 = vadd.f32 %v436, %v447
  %v457 = vadd.f32 %v437, %v447
  %v458 = vadd.f32 %v438, %v447
  %v459 = vadd.f32 %v439, %v447
  %v460 = vadd.f32 %v440, %v447
  %v461 = vadd.f32 %v441, %v447
  %v462 = vadd.f32 %v442, %v447
  %v463 = vadd.f32 %v443, %v447
  %v464 = vadd.f32 %v444, %v447
  %v465 = vmax.f32 %v449, 0.0
  %v466 = vmax.f32 %v450, 0.0
  %v467 = vmax.f32 %v451, 0.0
  %v468 = vmax.f32 %v452, 0.0
  %v469 = vmax.f32 %v453, 0.0
  %v470 = vmax.f32 %v454, 0.0
  %v471 = vmax.f32 %v455, 0.0
  %v472 = vmax.f32 %v456, 0.0
  %v473 = vmax.f32 %v457, 0.0
  %v474 = vmax.f32 %v458, 0.0
  %v475 = vmax.f32 %v459, 0.0
  %v476 = vmax.f32 %v460, 0.0
  %v477 = vmax.f32 %v461, 0.0
  %v478 = vmax.f32 %v462, 0.0
  %v479 = vmax.f32 %v463, 0.0
  %v480 = vmax.f32 %v464, 0.0
  %481 = vst [vmem:[%s5] sm:$0xff] %v465
  %482 = vst [vmem:[%s5 + $0x8] sm:$0xff] %v466
  %483 = vst [vmem:[%s5 + $0x10] sm:$0xff] %v467
  %484 = vst [vmem:[%s5 + $0x18] sm:$0xff] %v468
  %485 = vst [vmem:[%s5 + $0x20] sm:$0xff] %v469
  %486 = vst [vmem:[%s5 + $0x28] sm:$0xff] %v470
  %487 = vst [vmem:[%s5 + $0x30] sm:$0xff] %v471
  %488 = vst [vmem:[%s5 + $0x38] sm:$0xff] %v472
  %489 = vst [vmem:[%s5 + $0x40] sm:$0xff] %v473
  %490 = vst [vmem:[%s5 + $0x48] sm:$0xff] %v474
  %491 = vst [vmem:[%s5 + $0x50] sm:$0xff] %v475
  %492 = vst [vmem:[%s5 + $0x58] sm:$0xff] %v476
  %493 = vst [vmem:[%s5 + $0x60] sm:$0xff] %v477
  %494 = vst [vmem:[%s5 + $0x68] sm:$0xff] %v478
  %495 = vst [vmem:[%s5 + $0x70] sm:$0xff] %v479
  %496 = vst [vmem:[%s5 + $0x78] sm:$0xff] %v480
  // Predicated region
  $region22: #{generator_forward.17} parent=0 // pred_check
    _
  $region23: #{generator_forward.17} parent=0 // pred_check_branch
    %498 = sbr.rel (0) target = $region25
  $region24: #{generator_forward.17} parent=0 // pred_region
    _
  $region25: #{generator_forward.17} parent=0 // pred_fallthru
    _
  // Predicated region
  $region26: #{generator_forward.17} parent=0 // pred_check
    _
  $region27: #{generator_forward.17} parent=0 // pred_check_branch
    %500 = sbr.rel (0) target = $region29
  $region28: #{generator_forward.17} parent=0 // pred_region
    _
  $region29: #{generator_forward.17} parent=0 // pred_fallthru
    _

// kernel: generator_forward.19
$region0: #{generator_forward.19}
  #allocation0 [shape = 'u32[]', space=smem, size = 0x4, offset = 0x4, fixed_abs, tag = 'smem constant byte address 0x4 - core index']
  #allocation1 [shape = 'u32[72,128]{1,0:T(1,128)}', space=vmem, size = 0x9000, scoped, tag = 'internal scratch']
  %s0 = inlined_call_operand.vmem [shape: f32[512,512], index: 0, kind: input, shape index: {}]
  %s1 = inlined_call_operand.vmem [shape: f32[512,128], index: 1, kind: input, shape index: {}]
  %s2 = inlined_call_operand.vmem [shape: f32[1,128], index: 2, kind: input, shape index: {}]
  %s3 = inlined_call_operand.vmem [shape: f32[512,128], index: 3, kind: output, shape index: {}]
  %s4 = sld [smem:[#allocation0]]
  $region22: #{generator_forward.19} parent=0
    _
  %s6 = ssub.s32 1, %s4
  %s7 = scalar_select 0, %s6, %s4
  // Predicated region
  $region2: #{generator_forward.19} parent=0 // pred_check
    _
  $region3: #{generator_forward.19} parent=0 // pred_check_branch
    %9 = sbr.rel (0) target = $region5
  $region4: #{generator_forward.19} parent=0 // pred_region
    _
  $region5: #{generator_forward.19} parent=0 // pred_fallthru
    _
  // Predicated region
  $region6: #{generator_forward.19} parent=0 // pred_check
    _
  $region7: #{generator_forward.19} parent=0 // pred_check_branch
    %11 = sbr.rel (0) target = $region9
  $region8: #{generator_forward.19} parent=0 // pred_region
    _
  $region9: #{generator_forward.19} parent=0 // pred_fallthru
    _
  // Predicated region
  $region10: #{generator_forward.19} parent=0 // pred_check
    _
  $region11: #{generator_forward.19} parent=0 // pred_check_branch
    %13 = sbr.rel (0) target = $region13
  $region12: #{generator_forward.19} parent=0 // pred_region
    _
  $region13: #{generator_forward.19} parent=0 // pred_fallthru
    _
  %v14 = vld [vmem:[%s0] sm:$0xff]
  %v15 = vld [vmem:[%s0 + $0x8] sm:$0xff]
  %v16 = vld [vmem:[%s0 + $0x10] sm:$0xff]
  %v17 = vld [vmem:[%s0 + $0x18] sm:$0xff]
  %v18 = vld [vmem:[%s0 + $0x20] sm:$0xff]
  %v19 = vld [vmem:[%s0 + $0x28] sm:$0xff]
  %v20 = vld [vmem:[%s0 + $0x30] sm:$0xff]
  %v21 = vld [vmem:[%s0 + $0x38] sm:$0xff]
  %v22 = vld [vmem:[%s0 + $0x40] sm:$0xff]
  %v23 = vld [vmem:[%s0 + $0x48] sm:$0xff]
  %v24 = vld [vmem:[%s0 + $0x50] sm:$0xff]
  %v25 = vld [vmem:[%s0 + $0x58] sm:$0xff]
  %v26 = vld [vmem:[%s0 + $0x60] sm:$0xff]
  %v27 = vld [vmem:[%s0 + $0x68] sm:$0xff]
  %v28 = vld [vmem:[%s0 + $0x70] sm:$0xff]
  %v29 = vld [vmem:[%s0 + $0x78] sm:$0xff]
  %v30 = vld [vmem:[%s0 + $0x80] sm:$0xff]
  %v31 = vld [vmem:[%s0 + $0x88] sm:$0xff]
  %v32 = vld [vmem:[%s0 + $0x90] sm:$0xff]
  %v33 = vld [vmem:[%s0 + $0x98] sm:$0xff]
  %v34 = vld [vmem:[%s0 + $0xa0] sm:$0xff]
  %v35 = vld [vmem:[%s0 + $0xa8] sm:$0xff]
  %v36 = vld [vmem:[%s0 + $0xb0] sm:$0xff]
  %v37 = vld [vmem:[%s0 + $0xb8] sm:$0xff]
  %v38 = vld [vmem:[%s0 + $0xc0] sm:$0xff]
  %v39 = vld [vmem:[%s0 + $0xc8] sm:$0xff]
  %v40 = vld [vmem:[%s0 + $0xd0] sm:$0xff]
  %v41 = vld [vmem:[%s0 + $0xd8] sm:$0xff]
  %v42 = vld [vmem:[%s0 + $0xe0] sm:$0xff]
  %v43 = vld [vmem:[%s0 + $0xe8] sm:$0xff]
  %v44 = vld [vmem:[%s0 + $0xf0] sm:$0xff]
  %v45 = vld [vmem:[%s0 + $0xf8] sm:$0xff]
  %v46 = vld [vmem:[%s0 + $0x100] sm:$0xff]
  %v47 = vld [vmem:[%s0 + $0x108] sm:$0xff]
  %v48 = vld [vmem:[%s0 + $0x110] sm:$0xff]
  %v49 = vld [vmem:[%s0 + $0x118] sm:$0xff]
  %v50 = vld [vmem:[%s0 + $0x120] sm:$0xff]
  %v51 = vld [vmem:[%s0 + $0x128] sm:$0xff]
  %v52 = vld [vmem:[%s0 + $0x130] sm:$0xff]
  %v53 = vld [vmem:[%s0 + $0x138] sm:$0xff]
  %v54 = vld [vmem:[%s0 + $0x140] sm:$0xff]
  %v55 = vld [vmem:[%s0 + $0x148] sm:$0xff]
  %v56 = vld [vmem:[%s0 + $0x150] sm:$0xff]
  %v57 = vld [vmem:[%s0 + $0x158] sm:$0xff]
  %v58 = vld [vmem:[%s0 + $0x160] sm:$0xff]
  %v59 = vld [vmem:[%s0 + $0x168] sm:$0xff]
  %v60 = vld [vmem:[%s0 + $0x170] sm:$0xff]
  %v61 = vld [vmem:[%s0 + $0x178] sm:$0xff]
  %v62 = vld [vmem:[%s0 + $0x180] sm:$0xff]
  %v63 = vld [vmem:[%s0 + $0x188] sm:$0xff]
  %v64 = vld [vmem:[%s0 + $0x190] sm:$0xff]
  %v65 = vld [vmem:[%s0 + $0x198] sm:$0xff]
  %v66 = vld [vmem:[%s0 + $0x1a0] sm:$0xff]
  %v67 = vld [vmem:[%s0 + $0x1a8] sm:$0xff]
  %v68 = vld [vmem:[%s0 + $0x1b0] sm:$0xff]
  %v69 = vld [vmem:[%s0 + $0x1b8] sm:$0xff]
  %v70 = vld [vmem:[%s0 + $0x1c0] sm:$0xff]
  %v71 = vld [vmem:[%s0 + $0x1c8] sm:$0xff]
  %v72 = vld [vmem:[%s0 + $0x1d0] sm:$0xff]
  %v73 = vld [vmem:[%s0 + $0x1d8] sm:$0xff]
  %v74 = vld [vmem:[%s0 + $0x1e0] sm:$0xff]
  %v75 = vld [vmem:[%s0 + $0x1e8] sm:$0xff]
  %v76 = vld [vmem:[%s0 + $0x1f0] sm:$0xff]
  %v77 = vld [vmem:[%s0 + $0x1f8] sm:$0xff]
  %v78 = vld [vmem:[%s0 + $0x200] sm:$0xff]
  %v79 = vld [vmem:[%s0 + $0x208] sm:$0xff]
  %v80 = vld [vmem:[%s0 + $0x210] sm:$0xff]
  %v81 = vld [vmem:[%s0 + $0x218] sm:$0xff]
  %v82 = vld [vmem:[%s0 + $0x220] sm:$0xff]
  %v83 = vld [vmem:[%s0 + $0x228] sm:$0xff]
  %v84 = vld [vmem:[%s0 + $0x230] sm:$0xff]
  %v85 = vld [vmem:[%s0 + $0x238] sm:$0xff]
  %v86 = vld [vmem:[%s0 + $0x240] sm:$0xff]
  %v87 = vld [vmem:[%s0 + $0x248] sm:$0xff]
  %v88 = vld [vmem:[%s0 + $0x250] sm:$0xff]
  %v89 = vld [vmem:[%s0 + $0x258] sm:$0xff]
  %v90 = vld [vmem:[%s0 + $0x260] sm:$0xff]
  %v91 = vld [vmem:[%s0 + $0x268] sm:$0xff]
  %v92 = vld [vmem:[%s0 + $0x270] sm:$0xff]
  %v93 = vld [vmem:[%s0 + $0x278] sm:$0xff]
  %v94 = vld [vmem:[%s0 + $0x280] sm:$0xff]
  %v95 = vld [vmem:[%s0 + $0x288] sm:$0xff]
  %v96 = vld [vmem:[%s0 + $0x290] sm:$0xff]
  %v97 = vld [vmem:[%s0 + $0x298] sm:$0xff]
  %v98 = vld [vmem:[%s0 + $0x2a0] sm:$0xff]
  %v99 = vld [vmem:[%s0 + $0x2a8] sm:$0xff]
  %v100 = vld [vmem:[%s0 + $0x2b0] sm:$0xff]
  %v101 = vld [vmem:[%s0 + $0x2b8] sm:$0xff]
  %v102 = vld [vmem:[%s0 + $0x2c0] sm:$0xff]
  %v103 = vld [vmem:[%s0 + $0x2c8] sm:$0xff]
  %v104 = vld [vmem:[%s0 + $0x2d0] sm:$0xff]
  %v105 = vld [vmem:[%s0 + $0x2d8] sm:$0xff]
  %v106 = vld [vmem:[%s0 + $0x2e0] sm:$0xff]
  %v107 = vld [vmem:[%s0 + $0x2e8] sm:$0xff]
  %v108 = vld [vmem:[%s0 + $0x2f0] sm:$0xff]
  %v109 = vld [vmem:[%s0 + $0x2f8] sm:$0xff]
  %v110 = vld [vmem:[%s0 + $0x300] sm:$0xff]
  %v111 = vld [vmem:[%s0 + $0x308] sm:$0xff]
  %v112 = vld [vmem:[%s0 + $0x310] sm:$0xff]
  %v113 = vld [vmem:[%s0 + $0x318] sm:$0xff]
  %v114 = vld [vmem:[%s0 + $0x320] sm:$0xff]
  %v115 = vld [vmem:[%s0 + $0x328] sm:$0xff]
  %v116 = vld [vmem:[%s0 + $0x330] sm:$0xff]
  %v117 = vld [vmem:[%s0 + $0x338] sm:$0xff]
  %v118 = vld [vmem:[%s0 + $0x340] sm:$0xff]
  %v119 = vld [vmem:[%s0 + $0x348] sm:$0xff]
  %v120 = vld [vmem:[%s0 + $0x350] sm:$0xff]
  %v121 = vld [vmem:[%s0 + $0x358] sm:$0xff]
  %v122 = vld [vmem:[%s0 + $0x360] sm:$0xff]
  %v123 = vld [vmem:[%s0 + $0x368] sm:$0xff]
  %v124 = vld [vmem:[%s0 + $0x370] sm:$0xff]
  %v125 = vld [vmem:[%s0 + $0x378] sm:$0xff]
  %v126 = vld [vmem:[%s0 + $0x380] sm:$0xff]
  %v127 = vld [vmem:[%s0 + $0x388] sm:$0xff]
  %v128 = vld [vmem:[%s0 + $0x390] sm:$0xff]
  %v129 = vld [vmem:[%s0 + $0x398] sm:$0xff]
  %v130 = vld [vmem:[%s0 + $0x3a0] sm:$0xff]
  %v131 = vld [vmem:[%s0 + $0x3a8] sm:$0xff]
  %v132 = vld [vmem:[%s0 + $0x3b0] sm:$0xff]
  %v133 = vld [vmem:[%s0 + $0x3b8] sm:$0xff]
  %v134 = vld [vmem:[%s0 + $0x3c0] sm:$0xff]
  %v135 = vld [vmem:[%s0 + $0x3c8] sm:$0xff]
  %v136 = vld [vmem:[%s0 + $0x3d0] sm:$0xff]
  %v137 = vld [vmem:[%s0 + $0x3d8] sm:$0xff]
  %v138 = vld [vmem:[%s0 + $0x3e0] sm:$0xff]
  %v139 = vld [vmem:[%s0 + $0x3e8] sm:$0xff]
  %v140 = vld [vmem:[%s0 + $0x3f0] sm:$0xff]
  %v141 = vld [vmem:[%s0 + $0x3f8] sm:$0xff]
  %v142 = vld [vmem:[%s0 + $0x400] sm:$0xff]
  %v143 = vld [vmem:[%s0 + $0x408] sm:$0xff]
  %v144 = vld [vmem:[%s0 + $0x410] sm:$0xff]
  %v145 = vld [vmem:[%s0 + $0x418] sm:$0xff]
  %v146 = vld [vmem:[%s0 + $0x420] sm:$0xff]
  %v147 = vld [vmem:[%s0 + $0x428] sm:$0xff]
  %v148 = vld [vmem:[%s0 + $0x430] sm:$0xff]
  %v149 = vld [vmem:[%s0 + $0x438] sm:$0xff]
  %v150 = vld [vmem:[%s0 + $0x440] sm:$0xff]
  %v151 = vld [vmem:[%s0 + $0x448] sm:$0xff]
  %v152 = vld [vmem:[%s0 + $0x450] sm:$0xff]
  %v153 = vld [vmem:[%s0 + $0x458] sm:$0xff]
  %v154 = vld [vmem:[%s0 + $0x460] sm:$0xff]
  %v155 = vld [vmem:[%s0 + $0x468] sm:$0xff]
  %v156 = vld [vmem:[%s0 + $0x470] sm:$0xff]
  %v157 = vld [vmem:[%s0 + $0x478] sm:$0xff]
  %v158 = vld [vmem:[%s0 + $0x480] sm:$0xff]
  %v159 = vld [vmem:[%s0 + $0x488] sm:$0xff]
  %v160 = vld [vmem:[%s0 + $0x490] sm:$0xff]
  %v161 = vld [vmem:[%s0 + $0x498] sm:$0xff]
  %v162 = vld [vmem:[%s0 + $0x4a0] sm:$0xff]
  %v163 = vld [vmem:[%s0 + $0x4a8] sm:$0xff]
  %v164 = vld [vmem:[%s0 + $0x4b0] sm:$0xff]
  %v165 = vld [vmem:[%s0 + $0x4b8] sm:$0xff]
  %v166 = vld [vmem:[%s0 + $0x4c0] sm:$0xff]
  %v167 = vld [vmem:[%s0 + $0x4c8] sm:$0xff]
  %v168 = vld [vmem:[%s0 + $0x4d0] sm:$0xff]
  %v169 = vld [vmem:[%s0 + $0x4d8] sm:$0xff]
  %v170 = vld [vmem:[%s0 + $0x4e0] sm:$0xff]
  %v171 = vld [vmem:[%s0 + $0x4e8] sm:$0xff]
  %v172 = vld [vmem:[%s0 + $0x4f0] sm:$0xff]
  %v173 = vld [vmem:[%s0 + $0x4f8] sm:$0xff]
  %v174 = vld [vmem:[%s0 + $0x500] sm:$0xff]
  %v175 = vld [vmem:[%s0 + $0x508] sm:$0xff]
  %v176 = vld [vmem:[%s0 + $0x510] sm:$0xff]
  %v177 = vld [vmem:[%s0 + $0x518] sm:$0xff]
  %v178 = vld [vmem:[%s0 + $0x520] sm:$0xff]
  %v179 = vld [vmem:[%s0 + $0x528] sm:$0xff]
  %v180 = vld [vmem:[%s0 + $0x530] sm:$0xff]
  %v181 = vld [vmem:[%s0 + $0x538] sm:$0xff]
  %v182 = vld [vmem:[%s0 + $0x540] sm:$0xff]
  %v183 = vld [vmem:[%s0 + $0x548] sm:$0xff]
  %v184 = vld [vmem:[%s0 + $0x550] sm:$0xff]
  %v185 = vld [vmem:[%s0 + $0x558] sm:$0xff]
  %v186 = vld [vmem:[%s0 + $0x560] sm:$0xff]
  %v187 = vld [vmem:[%s0 + $0x568] sm:$0xff]
  %v188 = vld [vmem:[%s0 + $0x570] sm:$0xff]
  %v189 = vld [vmem:[%s0 + $0x578] sm:$0xff]
  %v190 = vld [vmem:[%s0 + $0x580] sm:$0xff]
  %v191 = vld [vmem:[%s0 + $0x588] sm:$0xff]
  %v192 = vld [vmem:[%s0 + $0x590] sm:$0xff]
  %v193 = vld [vmem:[%s0 + $0x598] sm:$0xff]
  %v194 = vld [vmem:[%s0 + $0x5a0] sm:$0xff]
  %v195 = vld [vmem:[%s0 + $0x5a8] sm:$0xff]
  %v196 = vld [vmem:[%s0 + $0x5b0] sm:$0xff]
  %v197 = vld [vmem:[%s0 + $0x5b8] sm:$0xff]
  %v198 = vld [vmem:[%s0 + $0x5c0] sm:$0xff]
  %v199 = vld [vmem:[%s0 + $0x5c8] sm:$0xff]
  %v200 = vld [vmem:[%s0 + $0x5d0] sm:$0xff]
  %v201 = vld [vmem:[%s0 + $0x5d8] sm:$0xff]
  %v202 = vld [vmem:[%s0 + $0x5e0] sm:$0xff]
  %v203 = vld [vmem:[%s0 + $0x5e8] sm:$0xff]
  %v204 = vld [vmem:[%s0 + $0x5f0] sm:$0xff]
  %v205 = vld [vmem:[%s0 + $0x5f8] sm:$0xff]
  %v206 = vld [vmem:[%s0 + $0x600] sm:$0xff]
  %v207 = vld [vmem:[%s0 + $0x608] sm:$0xff]
  %v208 = vld [vmem:[%s0 + $0x610] sm:$0xff]
  %v209 = vld [vmem:[%s0 + $0x618] sm:$0xff]
  %v210 = vld [vmem:[%s0 + $0x620] sm:$0xff]
  %v211 = vld [vmem:[%s0 + $0x628] sm:$0xff]
  %v212 = vld [vmem:[%s0 + $0x630] sm:$0xff]
  %v213 = vld [vmem:[%s0 + $0x638] sm:$0xff]
  %v214 = vld [vmem:[%s0 + $0x640] sm:$0xff]
  %v215 = vld [vmem:[%s0 + $0x648] sm:$0xff]
  %v216 = vld [vmem:[%s0 + $0x650] sm:$0xff]
  %v217 = vld [vmem:[%s0 + $0x658] sm:$0xff]
  %v218 = vld [vmem:[%s0 + $0x660] sm:$0xff]
  %v219 = vld [vmem:[%s0 + $0x668] sm:$0xff]
  %v220 = vld [vmem:[%s0 + $0x670] sm:$0xff]
  %v221 = vld [vmem:[%s0 + $0x678] sm:$0xff]
  %v222 = vld [vmem:[%s0 + $0x680] sm:$0xff]
  %v223 = vld [vmem:[%s0 + $0x688] sm:$0xff]
  %v224 = vld [vmem:[%s0 + $0x690] sm:$0xff]
  %v225 = vld [vmem:[%s0 + $0x698] sm:$0xff]
  %v226 = vld [vmem:[%s0 + $0x6a0] sm:$0xff]
  %v227 = vld [vmem:[%s0 + $0x6a8] sm:$0xff]
  %v228 = vld [vmem:[%s0 + $0x6b0] sm:$0xff]
  %v229 = vld [vmem:[%s0 + $0x6b8] sm:$0xff]
  %v230 = vld [vmem:[%s0 + $0x6c0] sm:$0xff]
  %v231 = vld [vmem:[%s0 + $0x6c8] sm:$0xff]
  %v232 = vld [vmem:[%s0 + $0x6d0] sm:$0xff]
  %v233 = vld [vmem:[%s0 + $0x6d8] sm:$0xff]
  %v234 = vld [vmem:[%s0 + $0x6e0] sm:$0xff]
  %v235 = vld [vmem:[%s0 + $0x6e8] sm:$0xff]
  %v236 = vld [vmem:[%s0 + $0x6f0] sm:$0xff]
  %v237 = vld [vmem:[%s0 + $0x6f8] sm:$0xff]
  %v238 = vld [vmem:[%s0 + $0x700] sm:$0xff]
  %v239 = vld [vmem:[%s0 + $0x708] sm:$0xff]
  %v240 = vld [vmem:[%s0 + $0x710] sm:$0xff]
  %v241 = vld [vmem:[%s0 + $0x718] sm:$0xff]
  %v242 = vld [vmem:[%s0 + $0x720] sm:$0xff]
  %v243 = vld [vmem:[%s0 + $0x728] sm:$0xff]
  %v244 = vld [vmem:[%s0 + $0x730] sm:$0xff]
  %v245 = vld [vmem:[%s0 + $0x738] sm:$0xff]
  %v246 = vld [vmem:[%s0 + $0x740] sm:$0xff]
  %v247 = vld [vmem:[%s0 + $0x748] sm:$0xff]
  %v248 = vld [vmem:[%s0 + $0x750] sm:$0xff]
  %v249 = vld [vmem:[%s0 + $0x758] sm:$0xff]
  %v250 = vld [vmem:[%s0 + $0x760] sm:$0xff]
  %v251 = vld [vmem:[%s0 + $0x768] sm:$0xff]
  %v252 = vld [vmem:[%s0 + $0x770] sm:$0xff]
  %v253 = vld [vmem:[%s0 + $0x778] sm:$0xff]
  %v254 = vld [vmem:[%s0 + $0x780] sm:$0xff]
  %v255 = vld [vmem:[%s0 + $0x788] sm:$0xff]
  %v256 = vld [vmem:[%s0 + $0x790] sm:$0xff]
  %v257 = vld [vmem:[%s0 + $0x798] sm:$0xff]
  %v258 = vld [vmem:[%s0 + $0x7a0] sm:$0xff]
  %v259 = vld [vmem:[%s0 + $0x7a8] sm:$0xff]
  %v260 = vld [vmem:[%s0 + $0x7b0] sm:$0xff]
  %v261 = vld [vmem:[%s0 + $0x7b8] sm:$0xff]
  %v262 = vld [vmem:[%s0 + $0x7c0] sm:$0xff]
  %v263 = vld [vmem:[%s0 + $0x7c8] sm:$0xff]
  %v264 = vld [vmem:[%s0 + $0x7d0] sm:$0xff]
  %v265 = vld [vmem:[%s0 + $0x7d8] sm:$0xff]
  %v266 = vld [vmem:[%s0 + $0x7e0] sm:$0xff]
  %v267 = vld [vmem:[%s0 + $0x7e8] sm:$0xff]
  %v268 = vld [vmem:[%s0 + $0x7f0] sm:$0xff]
  %v269 = vld [vmem:[%s0 + $0x7f8] sm:$0xff]
  %v270 = vld [vmem:[%s1] sm:$0xff]
  %v271 = vld [vmem:[%s1 + $0x8] sm:$0xff]
  %v272 = vld [vmem:[%s1 + $0x10] sm:$0xff]
  %v273 = vld [vmem:[%s1 + $0x18] sm:$0xff]
  %v274 = vld [vmem:[%s1 + $0x20] sm:$0xff]
  %v275 = vld [vmem:[%s1 + $0x28] sm:$0xff]
  %v276 = vld [vmem:[%s1 + $0x30] sm:$0xff]
  %v277 = vld [vmem:[%s1 + $0x38] sm:$0xff]
  %v278 = vld [vmem:[%s1 + $0x40] sm:$0xff]
  %v279 = vld [vmem:[%s1 + $0x48] sm:$0xff]
  %v280 = vld [vmem:[%s1 + $0x50] sm:$0xff]
  %v281 = vld [vmem:[%s1 + $0x58] sm:$0xff]
  %v282 = vld [vmem:[%s1 + $0x60] sm:$0xff]
  %v283 = vld [vmem:[%s1 + $0x68] sm:$0xff]
  %v284 = vld [vmem:[%s1 + $0x70] sm:$0xff]
  %v285 = vld [vmem:[%s1 + $0x78] sm:$0xff]
  %v286 = vld [vmem:[%s1 + $0x80] sm:$0xff]
  %v287 = vld [vmem:[%s1 + $0x88] sm:$0xff]
  %v288 = vld [vmem:[%s1 + $0x90] sm:$0xff]
  %v289 = vld [vmem:[%s1 + $0x98] sm:$0xff]
  %v290 = vld [vmem:[%s1 + $0xa0] sm:$0xff]
  %v291 = vld [vmem:[%s1 + $0xa8] sm:$0xff]
  %v292 = vld [vmem:[%s1 + $0xb0] sm:$0xff]
  %v293 = vld [vmem:[%s1 + $0xb8] sm:$0xff]
  %v294 = vld [vmem:[%s1 + $0xc0] sm:$0xff]
  %v295 = vld [vmem:[%s1 + $0xc8] sm:$0xff]
  %v296 = vld [vmem:[%s1 + $0xd0] sm:$0xff]
  %v297 = vld [vmem:[%s1 + $0xd8] sm:$0xff]
  %v298 = vld [vmem:[%s1 + $0xe0] sm:$0xff]
  %v299 = vld [vmem:[%s1 + $0xe8] sm:$0xff]
  %v300 = vld [vmem:[%s1 + $0xf0] sm:$0xff]
  %v301 = vld [vmem:[%s1 + $0xf8] sm:$0xff]
  %v302 = vld [vmem:[%s1 + $0x100] sm:$0xff]
  %v303 = vld [vmem:[%s1 + $0x108] sm:$0xff]
  %v304 = vld [vmem:[%s1 + $0x110] sm:$0xff]
  %v305 = vld [vmem:[%s1 + $0x118] sm:$0xff]
  %v306 = vld [vmem:[%s1 + $0x120] sm:$0xff]
  %v307 = vld [vmem:[%s1 + $0x128] sm:$0xff]
  %v308 = vld [vmem:[%s1 + $0x130] sm:$0xff]
  %v309 = vld [vmem:[%s1 + $0x138] sm:$0xff]
  %v310 = vld [vmem:[%s1 + $0x140] sm:$0xff]
  %v311 = vld [vmem:[%s1 + $0x148] sm:$0xff]
  %v312 = vld [vmem:[%s1 + $0x150] sm:$0xff]
  %v313 = vld [vmem:[%s1 + $0x158] sm:$0xff]
  %v314 = vld [vmem:[%s1 + $0x160] sm:$0xff]
  %v315 = vld [vmem:[%s1 + $0x168] sm:$0xff]
  %v316 = vld [vmem:[%s1 + $0x170] sm:$0xff]
  %v317 = vld [vmem:[%s1 + $0x178] sm:$0xff]
  %v318 = vld [vmem:[%s1 + $0x180] sm:$0xff]
  %v319 = vld [vmem:[%s1 + $0x188] sm:$0xff]
  %v320 = vld [vmem:[%s1 + $0x190] sm:$0xff]
  %v321 = vld [vmem:[%s1 + $0x198] sm:$0xff]
  %v322 = vld [vmem:[%s1 + $0x1a0] sm:$0xff]
  %v323 = vld [vmem:[%s1 + $0x1a8] sm:$0xff]
  %v324 = vld [vmem:[%s1 + $0x1b0] sm:$0xff]
  %v325 = vld [vmem:[%s1 + $0x1b8] sm:$0xff]
  %v326 = vld [vmem:[%s1 + $0x1c0] sm:$0xff]
  %v327 = vld [vmem:[%s1 + $0x1c8] sm:$0xff]
  %v328 = vld [vmem:[%s1 + $0x1d0] sm:$0xff]
  %v329 = vld [vmem:[%s1 + $0x1d8] sm:$0xff]
  %v330 = vld [vmem:[%s1 + $0x1e0] sm:$0xff]
  %v331 = vld [vmem:[%s1 + $0x1e8] sm:$0xff]
  %v332 = vld [vmem:[%s1 + $0x1f0] sm:$0xff]
  %v333 = vld [vmem:[%s1 + $0x1f8] sm:$0xff]
  %v334 = vld [vmem:[%s2] sm:$0x1]
  %v336 = vperm.slane %v334, 0
  %338 = vmatpush.msra.mxu0 %v285
  %339 = vmatpush.msra.mxu0 %v284
  %340 = vmatpush.msra.mxu0 %v283
  %341 = vmatpush.msra.mxu0 %v282
  %342 = vmatpush.msra.mxu0 %v281
  %343 = vmatpush.msra.mxu0 %v280
  %344 = vmatpush.msra.mxu0 %v279
  %345 = vmatpush.msra.mxu0 %v278
  %346 = vmatpush.msra.mxu0 %v277
  %347 = vmatpush.msra.mxu0 %v276
  %348 = vmatpush.msra.mxu0 %v275
  %349 = vmatpush.msra.mxu0 %v274
  %350 = vmatpush.msra.mxu0 %v273
  %351 = vmatpush.msra.mxu0 %v272
  %352 = vmatpush.msra.mxu0 %v271
  %353 = vmatpush.msra.mxu0 %v270
  %354 = vmatmul.f32.gmra.mxu0 %v14
  %v355 = vpop.f32.mrf.mxu0
  %v356 = vadd.f32 %v336, %v355
  %357 = vmatmul.f32.gmra.mxu0 %v18
  %v358 = vpop.f32.mrf.mxu0
  %v359 = vadd.f32 %v336, %v358
  %360 = vmatmul.f32.gmra.mxu0 %v22
  %v361 = vpop.f32.mrf.mxu0
  %v362 = vadd.f32 %v336, %v361
  %363 = vmatmul.f32.gmra.mxu0 %v26
  %v364 = vpop.f32.mrf.mxu0
  %v365 = vadd.f32 %v336, %v364
  %366 = vmatmul.f32.gmra.mxu0 %v30
  %v367 = vpop.f32.mrf.mxu0
  %v368 = vadd.f32 %v336, %v367
  %369 = vmatmul.f32.gmra.mxu0 %v34
  %v370 = vpop.f32.mrf.mxu0
  %v371 = vadd.f32 %v336, %v370
  %372 = vmatmul.f32.gmra.mxu0 %v38
  %v373 = vpop.f32.mrf.mxu0
  %v374 = vadd.f32 %v336, %v373
  %375 = vmatmul.f32.gmra.mxu0 %v42
  %v376 = vpop.f32.mrf.mxu0
  %v377 = vadd.f32 %v336, %v376
  %378 = vmatmul.f32.gmra.mxu0 %v46
  %v379 = vpop.f32.mrf.mxu0
  %v380 = vadd.f32 %v336, %v379
  %381 = vmatmul.f32.gmra.mxu0 %v50
  %v382 = vpop.f32.mrf.mxu0
  %v383 = vadd.f32 %v336, %v382
  %384 = vmatmul.f32.gmra.mxu0 %v54
  %v385 = vpop.f32.mrf.mxu0
  %v386 = vadd.f32 %v336, %v385
  %387 = vmatmul.f32.gmra.mxu0 %v58
  %v388 = vpop.f32.mrf.mxu0
  %v389 = vadd.f32 %v336, %v388
  %390 = vmatmul.f32.gmra.mxu0 %v62
  %v391 = vpop.f32.mrf.mxu0
  %v392 = vadd.f32 %v336, %v391
  %393 = vmatmul.f32.gmra.mxu0 %v66
  %v394 = vpop.f32.mrf.mxu0
  %v395 = vadd.f32 %v336, %v394
  %396 = vmatmul.f32.gmra.mxu0 %v70
  %v397 = vpop.f32.mrf.mxu0
  %v398 = vadd.f32 %v336, %v397
  %399 = vmatmul.f32.gmra.mxu0 %v74
  %v400 = vpop.f32.mrf.mxu0
  %v401 = vadd.f32 %v336, %v400
  %402 = vmatmul.f32.gmra.mxu0 %v78
  %v403 = vpop.f32.mrf.mxu0
  %v404 = vadd.f32 %v336, %v403
  %405 = vmatmul.f32.gmra.mxu0 %v82
  %v406 = vpop.f32.mrf.mxu0
  %v407 = vadd.f32 %v336, %v406
  %408 = vmatmul.f32.gmra.mxu0 %v86
  %v409 = vpop.f32.mrf.mxu0
  %v410 = vadd.f32 %v336, %v409
  %411 = vmatmul.f32.gmra.mxu0 %v90
  %v412 = vpop.f32.mrf.mxu0
  %v413 = vadd.f32 %v336, %v412
  %414 = vmatmul.f32.gmra.mxu0 %v94
  %v415 = vpop.f32.mrf.mxu0
  %v416 = vadd.f32 %v336, %v415
  %417 = vmatmul.f32.gmra.mxu0 %v98
  %v418 = vpop.f32.mrf.mxu0
  %v419 = vadd.f32 %v336, %v418
  %420 = vmatmul.f32.gmra.mxu0 %v102
  %v421 = vpop.f32.mrf.mxu0
  %v422 = vadd.f32 %v336, %v421
  %423 = vmatmul.f32.gmra.mxu0 %v106
  %v424 = vpop.f32.mrf.mxu0
  %v425 = vadd.f32 %v336, %v424
  %426 = vmatmul.f32.gmra.mxu0 %v110
  %v427 = vpop.f32.mrf.mxu0
  %v428 = vadd.f32 %v336, %v427
  %429 = vmatmul.f32.gmra.mxu0 %v114
  %v430 = vpop.f32.mrf.mxu0
  %v431 = vadd.f32 %v336, %v430
  %432 = vmatmul.f32.gmra.mxu0 %v118
  %v433 = vpop.f32.mrf.mxu0
  %v434 = vadd.f32 %v336, %v433
  %435 = vmatmul.f32.gmra.mxu0 %v122
  %v436 = vpop.f32.mrf.mxu0
  %v437 = vadd.f32 %v336, %v436
  %438 = vmatmul.f32.gmra.mxu0 %v126
  %v439 = vpop.f32.mrf.mxu0
  %v440 = vadd.f32 %v336, %v439
  %441 = vmatmul.f32.gmra.mxu0 %v130
  %v442 = vpop.f32.mrf.mxu0
  %v443 = vadd.f32 %v336, %v442
  %444 = vmatmul.f32.gmra.mxu0 %v134
  %v445 = vpop.f32.mrf.mxu0
  %v446 = vadd.f32 %v336, %v445
  %447 = vmatmul.f32.gmra.mxu0 %v138
  %v448 = vpop.f32.mrf.mxu0
  %v449 = vadd.f32 %v336, %v448
  %450 = vmatmul.f32.gmra.mxu0 %v142
  %v451 = vpop.f32.mrf.mxu0
  %v452 = vadd.f32 %v336, %v451
  %453 = vmatmul.f32.gmra.mxu0 %v146
  %v454 = vpop.f32.mrf.mxu0
  %v455 = vadd.f32 %v336, %v454
  %456 = vmatmul.f32.gmra.mxu0 %v150
  %v457 = vpop.f32.mrf.mxu0
  %v458 = vadd.f32 %v336, %v457
  %459 = vmatmul.f32.gmra.mxu0 %v154
  %v460 = vpop.f32.mrf.mxu0
  %v461 = vadd.f32 %v336, %v460
  %462 = vmatmul.f32.gmra.mxu0 %v158
  %v463 = vpop.f32.mrf.mxu0
  %v464 = vadd.f32 %v336, %v463
  %465 = vmatmul.f32.gmra.mxu0 %v162
  %v466 = vpop.f32.mrf.mxu0
  %v467 = vadd.f32 %v336, %v466
  %468 = vmatmul.f32.gmra.mxu0 %v166
  %v469 = vpop.f32.mrf.mxu0
  %v470 = vadd.f32 %v336, %v469
  %471 = vmatmul.f32.gmra.mxu0 %v170
  %v472 = vpop.f32.mrf.mxu0
  %v473 = vadd.f32 %v336, %v472
  %474 = vmatmul.f32.gmra.mxu0 %v174
  %v475 = vpop.f32.mrf.mxu0
  %v476 = vadd.f32 %v336, %v475
  %477 = vmatmul.f32.gmra.mxu0 %v178
  %v478 = vpop.f32.mrf.mxu0
  %v479 = vadd.f32 %v336, %v478
  %480 = vmatmul.f32.gmra.mxu0 %v182
  %v481 = vpop.f32.mrf.mxu0
  %v482 = vadd.f32 %v336, %v481
  %483 = vmatmul.f32.gmra.mxu0 %v186
  %v484 = vpop.f32.mrf.mxu0
  %v485 = vadd.f32 %v336, %v484
  %486 = vmatmul.f32.gmra.mxu0 %v190
  %v487 = vpop.f32.mrf.mxu0
  %v488 = vadd.f32 %v336, %v487
  %489 = vmatmul.f32.gmra.mxu0 %v194
  %v490 = vpop.f32.mrf.mxu0
  %v491 = vadd.f32 %v336, %v490
  %492 = vmatmul.f32.gmra.mxu0 %v198
  %v493 = vpop.f32.mrf.mxu0
  %v494 = vadd.f32 %v336, %v493
  %495 = vmatmul.f32.gmra.mxu0 %v202
  %v496 = vpop.f32.mrf.mxu0
  %v497 = vadd.f32 %v336, %v496
  %498 = vmatmul.f32.gmra.mxu0 %v206
  %v499 = vpop.f32.mrf.mxu0
  %v500 = vadd.f32 %v336, %v499
  %501 = vmatmul.f32.gmra.mxu0 %v210
  %v502 = vpop.f32.mrf.mxu0
  %v503 = vadd.f32 %v336, %v502
  %504 = vmatmul.f32.gmra.mxu0 %v214
  %v505 = vpop.f32.mrf.mxu0
  %v506 = vadd.f32 %v336, %v505
  %507 = vmatmul.f32.gmra.mxu0 %v218
  %v508 = vpop.f32.mrf.mxu0
  %v509 = vadd.f32 %v336, %v508
  %510 = vmatmul.f32.gmra.mxu0 %v222
  %v511 = vpop.f32.mrf.mxu0
  %v512 = vadd.f32 %v336, %v511
  %513 = vmatmul.f32.gmra.mxu0 %v226
  %v514 = vpop.f32.mrf.mxu0
  %v515 = vadd.f32 %v336, %v514
  %516 = vmatmul.f32.gmra.mxu0 %v230
  %v517 = vpop.f32.mrf.mxu0
  %v518 = vadd.f32 %v336, %v517
  %519 = vmatmul.f32.gmra.mxu0 %v234
  %v520 = vpop.f32.mrf.mxu0
  %v521 = vadd.f32 %v336, %v520
  %522 = vmatmul.f32.gmra.mxu0 %v238
  %v523 = vpop.f32.mrf.mxu0
  %v524 = vadd.f32 %v336, %v523
  %525 = vmatmul.f32.gmra.mxu0 %v242
  %v526 = vpop.f32.mrf.mxu0
  %v527 = vadd.f32 %v336, %v526
  %528 = vmatmul.f32.gmra.mxu0 %v246
  %v529 = vpop.f32.mrf.mxu0
  %v530 = vadd.f32 %v336, %v529
  %531 = vmatmul.f32.gmra.mxu0 %v250
  %v532 = vpop.f32.mrf.mxu0
  %v533 = vadd.f32 %v336, %v532
  %534 = vmatmul.f32.gmra.mxu0 %v254
  %v535 = vpop.f32.mrf.mxu0
  %v536 = vadd.f32 %v336, %v535
  %537 = vmatmul.f32.gmra.mxu0 %v258
  %v538 = vpop.f32.mrf.mxu0
  %v539 = vadd.f32 %v336, %v538
  %540 = vmatmul.f32.gmra.mxu0 %v262
  %v541 = vpop.f32.mrf.mxu0
  %v542 = vadd.f32 %v336, %v541
  %543 = vmatmul.f32.gmra.mxu0 %v266
  %v544 = vpop.f32.mrf.mxu0
  %v545 = vadd.f32 %v336, %v544
  %546 = vdwg.mxu0
  %547 = vmatpush.msra.mxu0 %v301
  %548 = vmatpush.msra.mxu0 %v300
  %549 = vmatpush.msra.mxu0 %v299
  %550 = vmatpush.msra.mxu0 %v298
  %551 = vmatpush.msra.mxu0 %v297
  %552 = vmatpush.msra.mxu0 %v296
  %553 = vmatpush.msra.mxu0 %v295
  %554 = vmatpush.msra.mxu0 %v294
  %555 = vmatpush.msra.mxu0 %v293
  %556 = vmatpush.msra.mxu0 %v292
  %557 = vmatpush.msra.mxu0 %v291
  %558 = vmatpush.msra.mxu0 %v290
  %559 = vmatpush.msra.mxu0 %v289
  %560 = vmatpush.msra.mxu0 %v288
  %561 = vmatpush.msra.mxu0 %v287
  %562 = vmatpush.msra.mxu0 %v286
  %563 = vmatmul.f32.gmra.mxu0 %v15
  %v564 = vpop.f32.mrf.mxu0
  %v565 = vadd.f32 %v356, %v564
  %566 = vmatmul.f32.gmra.mxu0 %v19
  %v567 = vpop.f32.mrf.mxu0
  %v568 = vadd.f32 %v359, %v567
  %569 = vmatmul.f32.gmra.mxu0 %v23
  %v570 = vpop.f32.mrf.mxu0
  %v571 = vadd.f32 %v362, %v570
  %572 = vmatmul.f32.gmra.mxu0 %v27
  %v573 = vpop.f32.mrf.mxu0
  %v574 = vadd.f32 %v365, %v573
  %575 = vmatmul.f32.gmra.mxu0 %v31
  %v576 = vpop.f32.mrf.mxu0
  %v577 = vadd.f32 %v368, %v576
  %578 = vmatmul.f32.gmra.mxu0 %v35
  %v579 = vpop.f32.mrf.mxu0
  %v580 = vadd.f32 %v371, %v579
  %581 = vmatmul.f32.gmra.mxu0 %v39
  %v582 = vpop.f32.mrf.mxu0
  %v583 = vadd.f32 %v374, %v582
  %584 = vmatmul.f32.gmra.mxu0 %v43
  %v585 = vpop.f32.mrf.mxu0
  %v586 = vadd.f32 %v377, %v585
  %587 = vmatmul.f32.gmra.mxu0 %v47
  %v588 = vpop.f32.mrf.mxu0
  %v589 = vadd.f32 %v380, %v588
  %590 = vmatmul.f32.gmra.mxu0 %v51
  %v591 = vpop.f32.mrf.mxu0
  %v592 = vadd.f32 %v383, %v591
  %593 = vmatmul.f32.gmra.mxu0 %v55
  %v594 = vpop.f32.mrf.mxu0
  %v595 = vadd.f32 %v386, %v594
  %596 = vmatmul.f32.gmra.mxu0 %v59
  %v597 = vpop.f32.mrf.mxu0
  %v598 = vadd.f32 %v389, %v597
  %599 = vmatmul.f32.gmra.mxu0 %v63
  %v600 = vpop.f32.mrf.mxu0
  %v601 = vadd.f32 %v392, %v600
  %602 = vmatmul.f32.gmra.mxu0 %v67
  %v603 = vpop.f32.mrf.mxu0
  %v604 = vadd.f32 %v395, %v603
  %605 = vmatmul.f32.gmra.mxu0 %v71
  %v606 = vpop.f32.mrf.mxu0
  %v607 = vadd.f32 %v398, %v606
  %608 = vmatmul.f32.gmra.mxu0 %v75
  %v609 = vpop.f32.mrf.mxu0
  %v610 = vadd.f32 %v401, %v609
  %611 = vmatmul.f32.gmra.mxu0 %v79
  %v612 = vpop.f32.mrf.mxu0
  %v613 = vadd.f32 %v404, %v612
  %614 = vmatmul.f32.gmra.mxu0 %v83
  %v615 = vpop.f32.mrf.mxu0
  %v616 = vadd.f32 %v407, %v615
  %617 = vmatmul.f32.gmra.mxu0 %v87
  %v618 = vpop.f32.mrf.mxu0
  %v619 = vadd.f32 %v410, %v618
  %620 = vmatmul.f32.gmra.mxu0 %v91
  %v621 = vpop.f32.mrf.mxu0
  %v622 = vadd.f32 %v413, %v621
  %623 = vmatmul.f32.gmra.mxu0 %v95
  %v624 = vpop.f32.mrf.mxu0
  %v625 = vadd.f32 %v416, %v624
  %626 = vmatmul.f32.gmra.mxu0 %v99
  %v627 = vpop.f32.mrf.mxu0
  %v628 = vadd.f32 %v419, %v627
  %629 = vmatmul.f32.gmra.mxu0 %v103
  %v630 = vpop.f32.mrf.mxu0
  %v631 = vadd.f32 %v422, %v630
  %632 = vmatmul.f32.gmra.mxu0 %v107
  %v633 = vpop.f32.mrf.mxu0
  %v634 = vadd.f32 %v425, %v633
  %635 = vmatmul.f32.gmra.mxu0 %v111
  %v636 = vpop.f32.mrf.mxu0
  %v637 = vadd.f32 %v428, %v636
  %638 = vmatmul.f32.gmra.mxu0 %v115
  %v639 = vpop.f32.mrf.mxu0
  %v640 = vadd.f32 %v431, %v639
  %641 = vmatmul.f32.gmra.mxu0 %v119
  %v642 = vpop.f32.mrf.mxu0
  %v643 = vadd.f32 %v434, %v642
  %644 = vmatmul.f32.gmra.mxu0 %v123
  %v645 = vpop.f32.mrf.mxu0
  %v646 = vadd.f32 %v437, %v645
  %647 = vmatmul.f32.gmra.mxu0 %v127
  %v648 = vpop.f32.mrf.mxu0
  %v649 = vadd.f32 %v440, %v648
  %650 = vmatmul.f32.gmra.mxu0 %v131
  %v651 = vpop.f32.mrf.mxu0
  %v652 = vadd.f32 %v443, %v651
  %653 = vmatmul.f32.gmra.mxu0 %v135
  %v654 = vpop.f32.mrf.mxu0
  %v655 = vadd.f32 %v446, %v654
  %656 = vmatmul.f32.gmra.mxu0 %v139
  %v657 = vpop.f32.mrf.mxu0
  %v658 = vadd.f32 %v449, %v657
  %659 = vmatmul.f32.gmra.mxu0 %v143
  %v660 = vpop.f32.mrf.mxu0
  %v661 = vadd.f32 %v452, %v660
  %662 = vmatmul.f32.gmra.mxu0 %v147
  %v663 = vpop.f32.mrf.mxu0
  %v664 = vadd.f32 %v455, %v663
  %665 = vmatmul.f32.gmra.mxu0 %v151
  %v666 = vpop.f32.mrf.mxu0
  %v667 = vadd.f32 %v458, %v666
  %668 = vmatmul.f32.gmra.mxu0 %v155
  %v669 = vpop.f32.mrf.mxu0
  %v670 = vadd.f32 %v461, %v669
  %671 = vmatmul.f32.gmra.mxu0 %v159
  %v672 = vpop.f32.mrf.mxu0
  %v673 = vadd.f32 %v464, %v672
  %674 = vmatmul.f32.gmra.mxu0 %v163
  %v675 = vpop.f32.mrf.mxu0
  %v676 = vadd.f32 %v467, %v675
  %677 = vmatmul.f32.gmra.mxu0 %v167
  %v678 = vpop.f32.mrf.mxu0
  %v679 = vadd.f32 %v470, %v678
  %680 = vmatmul.f32.gmra.mxu0 %v171
  %v681 = vpop.f32.mrf.mxu0
  %v682 = vadd.f32 %v473, %v681
  %683 = vmatmul.f32.gmra.mxu0 %v175
  %v684 = vpop.f32.mrf.mxu0
  %v685 = vadd.f32 %v476, %v684
  %686 = vmatmul.f32.gmra.mxu0 %v179
  %v687 = vpop.f32.mrf.mxu0
  %v688 = vadd.f32 %v479, %v687
  %689 = vmatmul.f32.gmra.mxu0 %v183
  %v690 = vpop.f32.mrf.mxu0
  %v691 = vadd.f32 %v482, %v690
  %692 = vmatmul.f32.gmra.mxu0 %v187
  %v693 = vpop.f32.mrf.mxu0
  %v694 = vadd.f32 %v485, %v693
  %695 = vmatmul.f32.gmra.mxu0 %v191
  %v696 = vpop.f32.mrf.mxu0
  %v697 = vadd.f32 %v488, %v696
  %698 = vmatmul.f32.gmra.mxu0 %v195
  %v699 = vpop.f32.mrf.mxu0
  %v700 = vadd.f32 %v491, %v699
  %701 = vmatmul.f32.gmra.mxu0 %v199
  %v702 = vpop.f32.mrf.mxu0
  %v703 = vadd.f32 %v494, %v702
  %704 = vmatmul.f32.gmra.mxu0 %v203
  %v705 = vpop.f32.mrf.mxu0
  %v706 = vadd.f32 %v497, %v705
  %707 = vmatmul.f32.gmra.mxu0 %v207
  %v708 = vpop.f32.mrf.mxu0
  %v709 = vadd.f32 %v500, %v708
  %710 = vmatmul.f32.gmra.mxu0 %v211
  %v711 = vpop.f32.mrf.mxu0
  %v712 = vadd.f32 %v503, %v711
  %713 = vmatmul.f32.gmra.mxu0 %v215
  %v714 = vpop.f32.mrf.mxu0
  %v715 = vadd.f32 %v506, %v714
  %716 = vmatmul.f32.gmra.mxu0 %v219
  %v717 = vpop.f32.mrf.mxu0
  %v718 = vadd.f32 %v509, %v717
  %719 = vmatmul.f32.gmra.mxu0 %v223
  %v720 = vpop.f32.mrf.mxu0
  %v721 = vadd.f32 %v512, %v720
  %722 = vmatmul.f32.gmra.mxu0 %v227
  %v723 = vpop.f32.mrf.mxu0
  %v724 = vadd.f32 %v515, %v723
  %725 = vmatmul.f32.gmra.mxu0 %v231
  %v726 = vpop.f32.mrf.mxu0
  %v727 = vadd.f32 %v518, %v726
  %728 = vmatmul.f32.gmra.mxu0 %v235
  %v729 = vpop.f32.mrf.mxu0
  %v730 = vadd.f32 %v521, %v729
  %731 = vmatmul.f32.gmra.mxu0 %v239
  %v732 = vpop.f32.mrf.mxu0
  %v733 = vadd.f32 %v524, %v732
  %734 = vmatmul.f32.gmra.mxu0 %v243
  %v735 = vpop.f32.mrf.mxu0
  %v736 = vadd.f32 %v527, %v735
  %737 = vmatmul.f32.gmra.mxu0 %v247
  %v738 = vpop.f32.mrf.mxu0
  %v739 = vadd.f32 %v530, %v738
  %740 = vmatmul.f32.gmra.mxu0 %v251
  %v741 = vpop.f32.mrf.mxu0
  %v742 = vadd.f32 %v533, %v741
  %743 = vmatmul.f32.gmra.mxu0 %v255
  %v744 = vpop.f32.mrf.mxu0
  %v745 = vadd.f32 %v536, %v744
  %746 = vmatmul.f32.gmra.mxu0 %v259
  %v747 = vpop.f32.mrf.mxu0
  %v748 = vadd.f32 %v539, %v747
  %749 = vmatmul.f32.gmra.mxu0 %v263
  %v750 = vpop.f32.mrf.mxu0
  %v751 = vadd.f32 %v542, %v750
  %752 = vmatmul.f32.gmra.mxu0 %v267
  %v753 = vpop.f32.mrf.mxu0
  %v754 = vadd.f32 %v545, %v753
  %755 = vdwg.mxu0
  %756 = vmatpush.msra.mxu0 %v317
  %757 = vmatpush.msra.mxu0 %v316
  %758 = vmatpush.msra.mxu0 %v315
  %759 = vmatpush.msra.mxu0 %v314
  %760 = vmatpush.msra.mxu0 %v313
  %761 = vmatpush.msra.mxu0 %v312
  %762 = vmatpush.msra.mxu0 %v311
  %763 = vmatpush.msra.mxu0 %v310
  %764 = vmatpush.msra.mxu0 %v309
  %765 = vmatpush.msra.mxu0 %v308
  %766 = vmatpush.msra.mxu0 %v307
  %767 = vmatpush.msra.mxu0 %v306
  %768 = vmatpush.msra.mxu0 %v305
  %769 = vmatpush.msra.mxu0 %v304
  %770 = vmatpush.msra.mxu0 %v303
  %771 = vmatpush.msra.mxu0 %v302
  %772 = vmatmul.f32.gmra.mxu0 %v16
  %v773 = vpop.f32.mrf.mxu0
  %v774 = vadd.f32 %v565, %v773
  %775 = vmatmul.f32.gmra.mxu0 %v20
  %v776 = vpop.f32.mrf.mxu0
  %v777 = vadd.f32 %v568, %v776
  %778 = vmatmul.f32.gmra.mxu0 %v24
  %v779 = vpop.f32.mrf.mxu0
  %v780 = vadd.f32 %v571, %v779
  %781 = vmatmul.f32.gmra.mxu0 %v28
  %v782 = vpop.f32.mrf.mxu0
  %v783 = vadd.f32 %v574, %v782
  %784 = vmatmul.f32.gmra.mxu0 %v32
  %v785 = vpop.f32.mrf.mxu0
  %v786 = vadd.f32 %v577, %v785
  %787 = vmatmul.f32.gmra.mxu0 %v36
  %v788 = vpop.f32.mrf.mxu0
  %v789 = vadd.f32 %v580, %v788
  %790 = vmatmul.f32.gmra.mxu0 %v40
  %v791 = vpop.f32.mrf.mxu0
  %v792 = vadd.f32 %v583, %v791
  %793 = vmatmul.f32.gmra.mxu0 %v44
  %v794 = vpop.f32.mrf.mxu0
  %v795 = vadd.f32 %v586, %v794
  %796 = vmatmul.f32.gmra.mxu0 %v48
  %v797 = vpop.f32.mrf.mxu0
  %v798 = vadd.f32 %v589, %v797
  %799 = vmatmul.f32.gmra.mxu0 %v52
  %v800 = vpop.f32.mrf.mxu0
  %v801 = vadd.f32 %v592, %v800
  %802 = vmatmul.f32.gmra.mxu0 %v56
  %v803 = vpop.f32.mrf.mxu0
  %v804 = vadd.f32 %v595, %v803
  %805 = vmatmul.f32.gmra.mxu0 %v60
  %v806 = vpop.f32.mrf.mxu0
  %v807 = vadd.f32 %v598, %v806
  %808 = vmatmul.f32.gmra.mxu0 %v64
  %v809 = vpop.f32.mrf.mxu0
  %v810 = vadd.f32 %v601, %v809
  %811 = vmatmul.f32.gmra.mxu0 %v68
  %v812 = vpop.f32.mrf.mxu0
  %v813 = vadd.f32 %v604, %v812
  %814 = vmatmul.f32.gmra.mxu0 %v72
  %v815 = vpop.f32.mrf.mxu0
  %v816 = vadd.f32 %v607, %v815
  %817 = vmatmul.f32.gmra.mxu0 %v76
  %v818 = vpop.f32.mrf.mxu0
  %v819 = vadd.f32 %v610, %v818
  %820 = vmatmul.f32.gmra.mxu0 %v80
  %v821 = vpop.f32.mrf.mxu0
  %v822 = vadd.f32 %v613, %v821
  %823 = vmatmul.f32.gmra.mxu0 %v84
  %v824 = vpop.f32.mrf.mxu0
  %v825 = vadd.f32 %v616, %v824
  %826 = vmatmul.f32.gmra.mxu0 %v88
  %v827 = vpop.f32.mrf.mxu0
  %v828 = vadd.f32 %v619, %v827
  %829 = vmatmul.f32.gmra.mxu0 %v92
  %v830 = vpop.f32.mrf.mxu0
  %v831 = vadd.f32 %v622, %v830
  %832 = vmatmul.f32.gmra.mxu0 %v96
  %v833 = vpop.f32.mrf.mxu0
  %v834 = vadd.f32 %v625, %v833
  %835 = vmatmul.f32.gmra.mxu0 %v100
  %v836 = vpop.f32.mrf.mxu0
  %v837 = vadd.f32 %v628, %v836
  %838 = vmatmul.f32.gmra.mxu0 %v104
  %v839 = vpop.f32.mrf.mxu0
  %v840 = vadd.f32 %v631, %v839
  %841 = vmatmul.f32.gmra.mxu0 %v108
  %v842 = vpop.f32.mrf.mxu0
  %v843 = vadd.f32 %v634, %v842
  %844 = vmatmul.f32.gmra.mxu0 %v112
  %v845 = vpop.f32.mrf.mxu0
  %v846 = vadd.f32 %v637, %v845
  %847 = vmatmul.f32.gmra.mxu0 %v116
  %v848 = vpop.f32.mrf.mxu0
  %v849 = vadd.f32 %v640, %v848
  %850 = vmatmul.f32.gmra.mxu0 %v120
  %v851 = vpop.f32.mrf.mxu0
  %v852 = vadd.f32 %v643, %v851
  %853 = vmatmul.f32.gmra.mxu0 %v124
  %v854 = vpop.f32.mrf.mxu0
  %v855 = vadd.f32 %v646, %v854
  %856 = vmatmul.f32.gmra.mxu0 %v128
  %v857 = vpop.f32.mrf.mxu0
  %v858 = vadd.f32 %v649, %v857
  %859 = vmatmul.f32.gmra.mxu0 %v132
  %v860 = vpop.f32.mrf.mxu0
  %v861 = vadd.f32 %v652, %v860
  %862 = vmatmul.f32.gmra.mxu0 %v136
  %v863 = vpop.f32.mrf.mxu0
  %v864 = vadd.f32 %v655, %v863
  %865 = vmatmul.f32.gmra.mxu0 %v140
  %v866 = vpop.f32.mrf.mxu0
  %v867 = vadd.f32 %v658, %v866
  %868 = vmatmul.f32.gmra.mxu0 %v144
  %v869 = vpop.f32.mrf.mxu0
  %v870 = vadd.f32 %v661, %v869
  %871 = vmatmul.f32.gmra.mxu0 %v148
  %v872 = vpop.f32.mrf.mxu0
  %v873 = vadd.f32 %v664, %v872
  %874 = vmatmul.f32.gmra.mxu0 %v152
  %v875 = vpop.f32.mrf.mxu0
  %v876 = vadd.f32 %v667, %v875
  %877 = vmatmul.f32.gmra.mxu0 %v156
  %v878 = vpop.f32.mrf.mxu0
  %v879 = vadd.f32 %v670, %v878
  %880 = vmatmul.f32.gmra.mxu0 %v160
  %v881 = vpop.f32.mrf.mxu0
  %v882 = vadd.f32 %v673, %v881
  %883 = vmatmul.f32.gmra.mxu0 %v164
  %v884 = vpop.f32.mrf.mxu0
  %v885 = vadd.f32 %v676, %v884
  %886 = vmatmul.f32.gmra.mxu0 %v168
  %v887 = vpop.f32.mrf.mxu0
  %v888 = vadd.f32 %v679, %v887
  %889 = vmatmul.f32.gmra.mxu0 %v172
  %v890 = vpop.f32.mrf.mxu0
  %v891 = vadd.f32 %v682, %v890
  %892 = vmatmul.f32.gmra.mxu0 %v176
  %v893 = vpop.f32.mrf.mxu0
  %v894 = vadd.f32 %v685, %v893
  %895 = vmatmul.f32.gmra.mxu0 %v180
  %v896 = vpop.f32.mrf.mxu0
  %v897 = vadd.f32 %v688, %v896
  %898 = vmatmul.f32.gmra.mxu0 %v184
  %v899 = vpop.f32.mrf.mxu0
  %v900 = vadd.f32 %v691, %v899
  %901 = vmatmul.f32.gmra.mxu0 %v188
  %v902 = vpop.f32.mrf.mxu0
  %v903 = vadd.f32 %v694, %v902
  %904 = vmatmul.f32.gmra.mxu0 %v192
  %v905 = vpop.f32.mrf.mxu0
  %v906 = vadd.f32 %v697, %v905
  %907 = vmatmul.f32.gmra.mxu0 %v196
  %v908 = vpop.f32.mrf.mxu0
  %v909 = vadd.f32 %v700, %v908
  %910 = vmatmul.f32.gmra.mxu0 %v200
  %v911 = vpop.f32.mrf.mxu0
  %v912 = vadd.f32 %v703, %v911
  %913 = vmatmul.f32.gmra.mxu0 %v204
  %v914 = vpop.f32.mrf.mxu0
  %v915 = vadd.f32 %v706, %v914
  %916 = vmatmul.f32.gmra.mxu0 %v208
  %v917 = vpop.f32.mrf.mxu0
  %v918 = vadd.f32 %v709, %v917
  %919 = vmatmul.f32.gmra.mxu0 %v212
  %v920 = vpop.f32.mrf.mxu0
  %v921 = vadd.f32 %v712, %v920
  %922 = vmatmul.f32.gmra.mxu0 %v216
  %v923 = vpop.f32.mrf.mxu0
  %v924 = vadd.f32 %v715, %v923
  %925 = vmatmul.f32.gmra.mxu0 %v220
  %v926 = vpop.f32.mrf.mxu0
  %v927 = vadd.f32 %v718, %v926
  %928 = vmatmul.f32.gmra.mxu0 %v224
  %v929 = vpop.f32.mrf.mxu0
  %v930 = vadd.f32 %v721, %v929
  %931 = vmatmul.f32.gmra.mxu0 %v228
  %v932 = vpop.f32.mrf.mxu0
  %v933 = vadd.f32 %v724, %v932
  %934 = vmatmul.f32.gmra.mxu0 %v232
  %v935 = vpop.f32.mrf.mxu0
  %v936 = vadd.f32 %v727, %v935
  %937 = vmatmul.f32.gmra.mxu0 %v236
  %v938 = vpop.f32.mrf.mxu0
  %v939 = vadd.f32 %v730, %v938
  %940 = vmatmul.f32.gmra.mxu0 %v240
  %v941 = vpop.f32.mrf.mxu0
  %v942 = vadd.f32 %v733, %v941
  %943 = vmatmul.f32.gmra.mxu0 %v244
  %v944 = vpop.f32.mrf.mxu0
  %v945 = vadd.f32 %v736, %v944
  %946 = vmatmul.f32.gmra.mxu0 %v248
  %v947 = vpop.f32.mrf.mxu0
  %v948 = vadd.f32 %v739, %v947
  %949 = vmatmul.f32.gmra.mxu0 %v252
  %v950 = vpop.f32.mrf.mxu0
  %v951 = vadd.f32 %v742, %v950
  %952 = vmatmul.f32.gmra.mxu0 %v256
  %v953 = vpop.f32.mrf.mxu0
  %v954 = vadd.f32 %v745, %v953
  %955 = vmatmul.f32.gmra.mxu0 %v260
  %v956 = vpop.f32.mrf.mxu0
  %v957 = vadd.f32 %v748, %v956
  %958 = vmatmul.f32.gmra.mxu0 %v264
  %v959 = vpop.f32.mrf.mxu0
  %v960 = vadd.f32 %v751, %v959
  %961 = vmatmul.f32.gmra.mxu0 %v268
  %v962 = vpop.f32.mrf.mxu0
  %v963 = vadd.f32 %v754, %v962
  %964 = vdwg.mxu0
  %965 = vmatpush.msra.mxu0 %v333
  %966 = vmatpush.msra.mxu0 %v332
  %967 = vmatpush.msra.mxu0 %v331
  %968 = vmatpush.msra.mxu0 %v330
  %969 = vmatpush.msra.mxu0 %v329
  %970 = vmatpush.msra.mxu0 %v328
  %971 = vmatpush.msra.mxu0 %v327
  %972 = vmatpush.msra.mxu0 %v326
  %973 = vmatpush.msra.mxu0 %v325
  %974 = vmatpush.msra.mxu0 %v324
  %975 = vmatpush.msra.mxu0 %v323
  %976 = vmatpush.msra.mxu0 %v322
  %977 = vmatpush.msra.mxu0 %v321
  %978 = vmatpush.msra.mxu0 %v320
  %979 = vmatpush.msra.mxu0 %v319
  %980 = vmatpush.msra.mxu0 %v318
  %981 = vmatmul.f32.gmra.mxu0 %v17
  %v982 = vpop.f32.mrf.mxu0
  %v983 = vadd.f32 %v774, %v982
  %984 = vmatmul.f32.gmra.mxu0 %v21
  %v985 = vpop.f32.mrf.mxu0
  %v986 = vadd.f32 %v777, %v985
  %987 = vmatmul.f32.gmra.mxu0 %v25
  %v988 = vpop.f32.mrf.mxu0
  %v989 = vadd.f32 %v780, %v988
  %990 = vmatmul.f32.gmra.mxu0 %v29
  %v991 = vpop.f32.mrf.mxu0
  %v992 = vadd.f32 %v783, %v991
  %993 = vmatmul.f32.gmra.mxu0 %v33
  %v994 = vpop.f32.mrf.mxu0
  %v995 = vadd.f32 %v786, %v994
  %996 = vmatmul.f32.gmra.mxu0 %v37
  %v997 = vpop.f32.mrf.mxu0
  %v998 = vadd.f32 %v789, %v997
  %999 = vmatmul.f32.gmra.mxu0 %v41
  %v1000 = vpop.f32.mrf.mxu0
  %v1001 = vadd.f32 %v792, %v1000
  %1002 = vmatmul.f32.gmra.mxu0 %v45
  %v1003 = vpop.f32.mrf.mxu0
  %v1004 = vadd.f32 %v795, %v1003
  %1005 = vmatmul.f32.gmra.mxu0 %v49
  %v1006 = vpop.f32.mrf.mxu0
  %v1007 = vadd.f32 %v798, %v1006
  %1008 = vmatmul.f32.gmra.mxu0 %v53
  %v1009 = vpop.f32.mrf.mxu0
  %v1010 = vadd.f32 %v801, %v1009
  %1011 = vmatmul.f32.gmra.mxu0 %v57
  %v1012 = vpop.f32.mrf.mxu0
  %v1013 = vadd.f32 %v804, %v1012
  %1014 = vmatmul.f32.gmra.mxu0 %v61
  %v1015 = vpop.f32.mrf.mxu0
  %v1016 = vadd.f32 %v807, %v1015
  %1017 = vmatmul.f32.gmra.mxu0 %v65
  %v1018 = vpop.f32.mrf.mxu0
  %v1019 = vadd.f32 %v810, %v1018
  %1020 = vmatmul.f32.gmra.mxu0 %v69
  %v1021 = vpop.f32.mrf.mxu0
  %v1022 = vadd.f32 %v813, %v1021
  %1023 = vmatmul.f32.gmra.mxu0 %v73
  %v1024 = vpop.f32.mrf.mxu0
  %v1025 = vadd.f32 %v816, %v1024
  %1026 = vmatmul.f32.gmra.mxu0 %v77
  %v1027 = vpop.f32.mrf.mxu0
  %v1028 = vadd.f32 %v819, %v1027
  %1029 = vmatmul.f32.gmra.mxu0 %v81
  %v1030 = vpop.f32.mrf.mxu0
  %v1031 = vadd.f32 %v822, %v1030
  %1032 = vmatmul.f32.gmra.mxu0 %v85
  %v1033 = vpop.f32.mrf.mxu0
  %v1034 = vadd.f32 %v825, %v1033
  %1035 = vmatmul.f32.gmra.mxu0 %v89
  %v1036 = vpop.f32.mrf.mxu0
  %v1037 = vadd.f32 %v828, %v1036
  %1038 = vmatmul.f32.gmra.mxu0 %v93
  %v1039 = vpop.f32.mrf.mxu0
  %v1040 = vadd.f32 %v831, %v1039
  %1041 = vmatmul.f32.gmra.mxu0 %v97
  %v1042 = vpop.f32.mrf.mxu0
  %v1043 = vadd.f32 %v834, %v1042
  %1044 = vmatmul.f32.gmra.mxu0 %v101
  %v1045 = vpop.f32.mrf.mxu0
  %v1046 = vadd.f32 %v837, %v1045
  %1047 = vmatmul.f32.gmra.mxu0 %v105
  %v1048 = vpop.f32.mrf.mxu0
  %v1049 = vadd.f32 %v840, %v1048
  %1050 = vmatmul.f32.gmra.mxu0 %v109
  %v1051 = vpop.f32.mrf.mxu0
  %v1052 = vadd.f32 %v843, %v1051
  %1053 = vmatmul.f32.gmra.mxu0 %v113
  %v1054 = vpop.f32.mrf.mxu0
  %v1055 = vadd.f32 %v846, %v1054
  %1056 = vmatmul.f32.gmra.mxu0 %v117
  %v1057 = vpop.f32.mrf.mxu0
  %v1058 = vadd.f32 %v849, %v1057
  %1059 = vmatmul.f32.gmra.mxu0 %v121
  %v1060 = vpop.f32.mrf.mxu0
  %v1061 = vadd.f32 %v852, %v1060
  %1062 = vmatmul.f32.gmra.mxu0 %v125
  %v1063 = vpop.f32.mrf.mxu0
  %v1064 = vadd.f32 %v855, %v1063
  %1065 = vmatmul.f32.gmra.mxu0 %v129
  %v1066 = vpop.f32.mrf.mxu0
  %v1067 = vadd.f32 %v858, %v1066
  %1068 = vmatmul.f32.gmra.mxu0 %v133
  %v1069 = vpop.f32.mrf.mxu0
  %v1070 = vadd.f32 %v861, %v1069
  %1071 = vmatmul.f32.gmra.mxu0 %v137
  %v1072 = vpop.f32.mrf.mxu0
  %v1073 = vadd.f32 %v864, %v1072
  %1074 = vmatmul.f32.gmra.mxu0 %v141
  %v1075 = vpop.f32.mrf.mxu0
  %v1076 = vadd.f32 %v867, %v1075
  %1077 = vmatmul.f32.gmra.mxu0 %v145
  %v1078 = vpop.f32.mrf.mxu0
  %v1079 = vadd.f32 %v870, %v1078
  %1080 = vmatmul.f32.gmra.mxu0 %v149
  %v1081 = vpop.f32.mrf.mxu0
  %v1082 = vadd.f32 %v873, %v1081
  %1083 = vmatmul.f32.gmra.mxu0 %v153
  %v1084 = vpop.f32.mrf.mxu0
  %v1085 = vadd.f32 %v876, %v1084
  %1086 = vmatmul.f32.gmra.mxu0 %v157
  %v1087 = vpop.f32.mrf.mxu0
  %v1088 = vadd.f32 %v879, %v1087
  %1089 = vmatmul.f32.gmra.mxu0 %v161
  %v1090 = vpop.f32.mrf.mxu0
  %v1091 = vadd.f32 %v882, %v1090
  %1092 = vmatmul.f32.gmra.mxu0 %v165
  %v1093 = vpop.f32.mrf.mxu0
  %v1094 = vadd.f32 %v885, %v1093
  %1095 = vmatmul.f32.gmra.mxu0 %v169
  %v1096 = vpop.f32.mrf.mxu0
  %v1097 = vadd.f32 %v888, %v1096
  %1098 = vmatmul.f32.gmra.mxu0 %v173
  %v1099 = vpop.f32.mrf.mxu0
  %v1100 = vadd.f32 %v891, %v1099
  %1101 = vmatmul.f32.gmra.mxu0 %v177
  %v1102 = vpop.f32.mrf.mxu0
  %v1103 = vadd.f32 %v894, %v1102
  %1104 = vmatmul.f32.gmra.mxu0 %v181
  %v1105 = vpop.f32.mrf.mxu0
  %v1106 = vadd.f32 %v897, %v1105
  %1107 = vmatmul.f32.gmra.mxu0 %v185
  %v1108 = vpop.f32.mrf.mxu0
  %v1109 = vadd.f32 %v900, %v1108
  %1110 = vmatmul.f32.gmra.mxu0 %v189
  %v1111 = vpop.f32.mrf.mxu0
  %v1112 = vadd.f32 %v903, %v1111
  %1113 = vmatmul.f32.gmra.mxu0 %v193
  %v1114 = vpop.f32.mrf.mxu0
  %v1115 = vadd.f32 %v906, %v1114
  %1116 = vmatmul.f32.gmra.mxu0 %v197
  %v1117 = vpop.f32.mrf.mxu0
  %v1118 = vadd.f32 %v909, %v1117
  %1119 = vmatmul.f32.gmra.mxu0 %v201
  %v1120 = vpop.f32.mrf.mxu0
  %v1121 = vadd.f32 %v912, %v1120
  %1122 = vmatmul.f32.gmra.mxu0 %v205
  %v1123 = vpop.f32.mrf.mxu0
  %v1124 = vadd.f32 %v915, %v1123
  %1125 = vmatmul.f32.gmra.mxu0 %v209
  %v1126 = vpop.f32.mrf.mxu0
  %v1127 = vadd.f32 %v918, %v1126
  %1128 = vmatmul.f32.gmra.mxu0 %v213
  %v1129 = vpop.f32.mrf.mxu0
  %v1130 = vadd.f32 %v921, %v1129
  %1131 = vmatmul.f32.gmra.mxu0 %v217
  %v1132 = vpop.f32.mrf.mxu0
  %v1133 = vadd.f32 %v924, %v1132
  %1134 = vmatmul.f32.gmra.mxu0 %v221
  %v1135 = vpop.f32.mrf.mxu0
  %v1136 = vadd.f32 %v927, %v1135
  %1137 = vmatmul.f32.gmra.mxu0 %v225
  %v1138 = vpop.f32.mrf.mxu0
  %v1139 = vadd.f32 %v930, %v1138
  %1140 = vmatmul.f32.gmra.mxu0 %v229
  %v1141 = vpop.f32.mrf.mxu0
  %v1142 = vadd.f32 %v933, %v1141
  %1143 = vmatmul.f32.gmra.mxu0 %v233
  %v1144 = vpop.f32.mrf.mxu0
  %v1145 = vadd.f32 %v936, %v1144
  %1146 = vmatmul.f32.gmra.mxu0 %v237
  %v1147 = vpop.f32.mrf.mxu0
  %v1148 = vadd.f32 %v939, %v1147
  %1149 = vmatmul.f32.gmra.mxu0 %v241
  %v1150 = vpop.f32.mrf.mxu0
  %v1151 = vadd.f32 %v942, %v1150
  %1152 = vmatmul.f32.gmra.mxu0 %v245
  %v1153 = vpop.f32.mrf.mxu0
  %v1154 = vadd.f32 %v945, %v1153
  %1155 = vmatmul.f32.gmra.mxu0 %v249
  %v1156 = vpop.f32.mrf.mxu0
  %v1157 = vadd.f32 %v948, %v1156
  %1158 = vmatmul.f32.gmra.mxu0 %v253
  %v1159 = vpop.f32.mrf.mxu0
  %v1160 = vadd.f32 %v951, %v1159
  %1161 = vmatmul.f32.gmra.mxu0 %v257
  %v1162 = vpop.f32.mrf.mxu0
  %v1163 = vadd.f32 %v954, %v1162
  %1164 = vmatmul.f32.gmra.mxu0 %v261
  %v1165 = vpop.f32.mrf.mxu0
  %v1166 = vadd.f32 %v957, %v1165
  %1167 = vmatmul.f32.gmra.mxu0 %v265
  %v1168 = vpop.f32.mrf.mxu0
  %v1169 = vadd.f32 %v960, %v1168
  %1170 = vmatmul.f32.gmra.mxu0 %v269
  %v1171 = vpop.f32.mrf.mxu0
  %v1172 = vadd.f32 %v963, %v1171
  %1173 = vdwg.mxu0
  %v1174 = vtanh.pop %v983
  %v1175 = vtanh.pop %v986
  %v1176 = vtanh.pop %v989
  %v1177 = vtanh.pop %v992
  %v1178 = vtanh.pop %v995
  %v1179 = vtanh.pop %v998
  %v1180 = vtanh.pop %v1001
  %v1181 = vtanh.pop %v1004
  %v1182 = vtanh.pop %v1007
  %v1183 = vtanh.pop %v1010
  %v1184 = vtanh.pop %v1013
  %v1185 = vtanh.pop %v1016
  %v1186 = vtanh.pop %v1019
  %v1187 = vtanh.pop %v1022
  %v1188 = vtanh.pop %v1025
  %v1189 = vtanh.pop %v1028
  %v1190 = vtanh.pop %v1031
  %v1191 = vtanh.pop %v1034
  %v1192 = vtanh.pop %v1037
  %v1193 = vtanh.pop %v1040
  %v1194 = vtanh.pop %v1043
  %v1195 = vtanh.pop %v1046
  %v1196 = vtanh.pop %v1049
  %v1197 = vtanh.pop %v1052
  %v1198 = vtanh.pop %v1055
  %v1199 = vtanh.pop %v1058
  %v1200 = vtanh.pop %v1061
  %v1201 = vtanh.pop %v1064
  %v1202 = vtanh.pop %v1067
  %v1203 = vtanh.pop %v1070
  %v1204 = vtanh.pop %v1073
  %v1205 = vtanh.pop %v1076
  %v1206 = vtanh.pop %v1079
  %v1207 = vtanh.pop %v1082
  %v1208 = vtanh.pop %v1085
  %v1209 = vtanh.pop %v1088
  %v1210 = vtanh.pop %v1091
  %v1211 = vtanh.pop %v1094
  %v1212 = vtanh.pop %v1097
  %v1213 = vtanh.pop %v1100
  %v1214 = vtanh.pop %v1103
  %v1215 = vtanh.pop %v1106
  %v1216 = vtanh.pop %v1109
  %v1217 = vtanh.pop %v1112
  %v1218 = vtanh.pop %v1115
  %v1219 = vtanh.pop %v1118
  %v1220 = vtanh.pop %v1121
  %v1221 = vtanh.pop %v1124
  %v1222 = vtanh.pop %v1127
  %v1223 = vtanh.pop %v1130
  %v1224 = vtanh.pop %v1133
  %v1225 = vtanh.pop %v1136
  %v1226 = vtanh.pop %v1139
  %v1227 = vtanh.pop %v1142
  %v1228 = vtanh.pop %v1145
  %v1229 = vtanh.pop %v1148
  %v1230 = vtanh.pop %v1151
  %v1231 = vtanh.pop %v1154
  %v1232 = vtanh.pop %v1157
  %v1233 = vtanh.pop %v1160
  %v1234 = vtanh.pop %v1163
  %v1235 = vtanh.pop %v1166
  %v1236 = vtanh.pop %v1169
  %v1237 = vtanh.pop %v1172
  %1238 = vst [vmem:[%s3] sm:$0xff] %v1174
  %1239 = vst [vmem:[%s3 + $0x8] sm:$0xff] %v1175
  %1240 = vst [vmem:[%s3 + $0x10] sm:$0xff] %v1176
  %1241 = vst [vmem:[%s3 + $0x18] sm:$0xff] %v1177
  %1242 = vst [vmem:[%s3 + $0x20] sm:$0xff] %v1178
  %1243 = vst [vmem:[%s3 + $0x28] sm:$0xff] %v1179
  %1244 = vst [vmem:[%s3 + $0x30] sm:$0xff] %v1180
  %1245 = vst [vmem:[%s3 + $0x38] sm:$0xff] %v1181
  %1246 = vst [vmem:[%s3 + $0x40] sm:$0xff] %v1182
  %1247 = vst [vmem:[%s3 + $0x48] sm:$0xff] %v1183
  %1248 = vst [vmem:[%s3 + $0x50] sm:$0xff] %v1184
  %1249 = vst [vmem:[%s3 + $0x58] sm:$0xff] %v1185
  %1250 = vst [vmem:[%s3 + $0x60] sm:$0xff] %v1186
  %1251 = vst [vmem:[%s3 + $0x68] sm:$0xff] %v1187
  %1252 = vst [vmem:[%s3 + $0x70] sm:$0xff] %v1188
  %1253 = vst [vmem:[%s3 + $0x78] sm:$0xff] %v1189
  %1254 = vst [vmem:[%s3 + $0x80] sm:$0xff] %v1190
  %1255 = vst [vmem:[%s3 + $0x88] sm:$0xff] %v1191
  %1256 = vst [vmem:[%s3 + $0x90] sm:$0xff] %v1192
  %1257 = vst [vmem:[%s3 + $0x98] sm:$0xff] %v1193
  %1258 = vst [vmem:[%s3 + $0xa0] sm:$0xff] %v1194
  %1259 = vst [vmem:[%s3 + $0xa8] sm:$0xff] %v1195
  %1260 = vst [vmem:[%s3 + $0xb0] sm:$0xff] %v1196
  %1261 = vst [vmem:[%s3 + $0xb8] sm:$0xff] %v1197
  %1262 = vst [vmem:[%s3 + $0xc0] sm:$0xff] %v1198
  %1263 = vst [vmem:[%s3 + $0xc8] sm:$0xff] %v1199
  %1264 = vst [vmem:[%s3 + $0xd0] sm:$0xff] %v1200
  %1265 = vst [vmem:[%s3 + $0xd8] sm:$0xff] %v1201
  %1266 = vst [vmem:[%s3 + $0xe0] sm:$0xff] %v1202
  %1267 = vst [vmem:[%s3 + $0xe8] sm:$0xff] %v1203
  %1268 = vst [vmem:[%s3 + $0xf0] sm:$0xff] %v1204
  %1269 = vst [vmem:[%s3 + $0xf8] sm:$0xff] %v1205
  %1270 = vst [vmem:[%s3 + $0x100] sm:$0xff] %v1206
  %1271 = vst [vmem:[%s3 + $0x108] sm:$0xff] %v1207
  %1272 = vst [vmem:[%s3 + $0x110] sm:$0xff] %v1208
  %1273 = vst [vmem:[%s3 + $0x118] sm:$0xff] %v1209
  %1274 = vst [vmem:[%s3 + $0x120] sm:$0xff] %v1210
  %1275 = vst [vmem:[%s3 + $0x128] sm:$0xff] %v1211
  %1276 = vst [vmem:[%s3 + $0x130] sm:$0xff] %v1212
  %1277 = vst [vmem:[%s3 + $0x138] sm:$0xff] %v1213
  %1278 = vst [vmem:[%s3 + $0x140] sm:$0xff] %v1214
  %1279 = vst [vmem:[%s3 + $0x148] sm:$0xff] %v1215
  %1280 = vst [vmem:[%s3 + $0x150] sm:$0xff] %v1216
  %1281 = vst [vmem:[%s3 + $0x158] sm:$0xff] %v1217
  %1282 = vst [vmem:[%s3 + $0x160] sm:$0xff] %v1218
  %1283 = vst [vmem:[%s3 + $0x168] sm:$0xff] %v1219
  %1284 = vst [vmem:[%s3 + $0x170] sm:$0xff] %v1220
  %1285 = vst [vmem:[%s3 + $0x178] sm:$0xff] %v1221
  %1286 = vst [vmem:[%s3 + $0x180] sm:$0xff] %v1222
  %1287 = vst [vmem:[%s3 + $0x188] sm:$0xff] %v1223
  %1288 = vst [vmem:[%s3 + $0x190] sm:$0xff] %v1224
  %1289 = vst [vmem:[%s3 + $0x198] sm:$0xff] %v1225
  %1290 = vst [vmem:[%s3 + $0x1a0] sm:$0xff] %v1226
  %1291 = vst [vmem:[%s3 + $0x1a8] sm:$0xff] %v1227
  %1292 = vst [vmem:[%s3 + $0x1b0] sm:$0xff] %v1228
  %1293 = vst [vmem:[%s3 + $0x1b8] sm:$0xff] %v1229
  %1294 = vst [vmem:[%s3 + $0x1c0] sm:$0xff] %v1230
  %1295 = vst [vmem:[%s3 + $0x1c8] sm:$0xff] %v1231
  %1296 = vst [vmem:[%s3 + $0x1d0] sm:$0xff] %v1232
  %1297 = vst [vmem:[%s3 + $0x1d8] sm:$0xff] %v1233
  %1298 = vst [vmem:[%s3 + $0x1e0] sm:$0xff] %v1234
  %1299 = vst [vmem:[%s3 + $0x1e8] sm:$0xff] %v1235
  %1300 = vst [vmem:[%s3 + $0x1f0] sm:$0xff] %v1236
  %1301 = vst [vmem:[%s3 + $0x1f8] sm:$0xff] %v1237
  // Predicated region
  $region14: #{generator_forward.19} parent=0 // pred_check
    _
  $region15: #{generator_forward.19} parent=0 // pred_check_branch
    %1303 = sbr.rel (0) target = $region17
  $region16: #{generator_forward.19} parent=0 // pred_region
    _
  $region17: #{generator_forward.19} parent=0 // pred_fallthru
    _
  // Predicated region
  $region18: #{generator_forward.19} parent=0 // pred_check
    _
  $region19: #{generator_forward.19} parent=0 // pred_check_branch
    %1305 = sbr.rel (0) target = $region21
  $region20: #{generator_forward.19} parent=0 // pred_region
    _
  $region21: #{generator_forward.19} parent=0 // pred_fallthru
    _

</llo_original>
